<compile_context>
chip_gen: v7x
topology: tpu7x:2x2x1
jax: 0.10.0
libtpu: 0.0.40
codegen_flags: <defaults>
</compile_context>

<pallas_src>
import jax
import jax.numpy as jnp
from jax.experimental import pallas as pl
from jax.experimental.pallas import tpu as pltpu


# ---------------------------------------------------------------------------
# Fused WN kernel (constant-width window, persistent xy buffer)
# ---------------------------------------------------------------------------
def _make_wn_kernel(dilations, pads, radix, dil_ch, res_ch, aux_ch,
                    t_tile, T, H, P, W0):
    n_layers = len(dilations)
    ca = res_ch + aux_ch

    def kernel(a0_ref, a1_ref, s0_ref, s1_ref, sw_ref, wv_ref, wor_ref,
               wos_ref, ew_ref, out_ref, xy_ref, x_ref, cum_ref):
        k = pl.program_id(1)

        # ---- stage this tile's halo window, once per tile --------------------
        # window = global positions [k*t_tile - H, k*t_tile + t_tile + H)
        #        = columns [k*t_tile, k*t_tile + W0) of the host-padded arrays,
        # i.e. all of block k plus the first 2H columns of block k+1.
        # start 1x1 conv -> residual stream scratch (f32, width W0).
        x_ref[:, :t_tile] = jnp.dot(sw_ref[...], a0_ref[0],
                                    preferred_element_type=jnp.float32)
        if H > 0:
            x_ref[:, t_tile:] = jnp.dot(sw_ref[...], a1_ref[0, :, :2 * H],
                                        preferred_element_type=jnp.float32)

        # spect rows of the persistent xy buffer (bf16, written once per tile).
        xy_ref[res_ch:, P:P + t_tile] = s0_ref[0]
        if H > 0:
            xy_ref[res_ch:, P + t_tile:P + W0] = s1_ref[0, :, :2 * H]
        if P > 0:
            # Edge columns are only read by throw-away boundary outputs, but
            # keep them zero so no stale/NaN garbage can ever appear.
            xy_ref[:, :P] = jnp.zeros((ca, P), jnp.bfloat16)
            xy_ref[:, P + W0:] = jnp.zeros((ca, P), jnp.bfloat16)

        # Hoisted validity mask: reproduces PyTorch's per-layer zero padding of
        # the residual stream outside the global range [0, T).
        pos = (k * t_tile - H) + jax.lax.broadcasted_iota(jnp.int32, (1, W0), 1)
        valid = jnp.logical_and(pos >= 0, pos < T)

        for i, d in enumerate(dilations):
            p = pads[i]

            # Refresh (masked) residual rows of xy; spect rows stay untouched.
            xy_ref[:res_ch, P:P + W0] = jnp.where(
                valid, x_ref[...], 0.0).astype(jnp.bfloat16)

            # Dilated conv: `radix` accumulated K=ca matmuls on static,
            # constant-width slices of the persistent buffer.
            acc = jnp.zeros((2 * dil_ch, W0), jnp.float32)
            for r in range(radix):
                off = P + r * d - p                       # static, 0 <= off <= 2P
                acc = acc + jnp.dot(wv_ref[i, r], xy_ref[:, off:off + W0],
                                    preferred_element_type=jnp.float32)

            # Gated activation (f32 on VPU/EUP for v5e portability).
            z = (jnp.tanh(acc[:dil_ch]) * jax.nn.sigmoid(acc[dil_ch:])
                 ).astype(jnp.bfloat16)

            if i + 1 < n_layers:                          # residual 1x1 conv
                x_ref[...] = x_ref[...] + jnp.dot(
                    wor_ref[i], z, preferred_element_type=jnp.float32)
            skip = jnp.dot(wos_ref[i], z,                 # skip 1x1 conv
                           preferred_element_type=jnp.float32)
            if i == 0:
                cum_ref[...] = skip
            else:
                cum_ref[...] = cum_ref[...] + skip

        # end 1x1 conv on the centre columns only (lane-dense output store).
        out_ref[0] = jnp.dot(ew_ref[...],
                             cum_ref[:, H:H + t_tile].astype(jnp.bfloat16),
                             preferred_element_type=jnp.float32)

    return kernel


# ---------------------------------------------------------------------------
# WN.forward wrapper
# ---------------------------------------------------------------------------
def wn_forward(audio, spect, start_w, layer_params, end_w,
               dilations, radix, dil_ch, res_ch, skip_ch, *, t_tile=512):
    B, in_ch, T = audio.shape
    aux_ch = spect.shape[1]
    n_layers = len(dilations)
    ca = res_ch + aux_ch

    assert res_ch % 8 == 0 and dil_ch % 8 == 0 and skip_ch % 8 == 0 \
        and aux_ch % 8 == 0, "channel counts must be multiples of 8 (sublanes)"
    for d in dilations:
        assert (d * (radix - 1)) % 2 == 0, \
            "even-radix 'same' padding is asymmetric in PyTorch; unsupported"
    assert t_tile % 128 == 0, "t_tile must be a multiple of 128"

    pads = [d * (radix - 1) // 2 for d in dilations]
    H = sum(pads)                     # total receptive-field halo per side
    P = max(pads) if pads else 0      # largest single-layer padding

    # Halo must fit in one extra block of the padded input.
    t_tile = max(t_tile, ((2 * H + 127) // 128) * 128)
    nt = pl.cdiv(T, t_tile)
    Tp = nt * t_tile
    W0 = t_tile + 2 * H

    # ---- host-side prep: a single zero pad (no overlapping copies) ----------
    pad_r = Tp + t_tile - H - T
    a_pad = jnp.pad(audio, ((0, 0), (0, 0), (H, pad_r))).astype(jnp.bfloat16)
    s_pad = jnp.pad(spect, ((0, 0), (0, 0), (H, pad_r))).astype(jnp.bfloat16)

    # Weights: keep the radix taps separate; split the 1x1 output conv into
    # residual / skip parts (last layer has no residual rows -> zero, unused).
    wv_all = jnp.stack([wv for wv, _ in layer_params]).astype(jnp.bfloat16)
    wor, wos = [], []
    for i, (_, wo) in enumerate(layer_params):
        if i + 1 < n_layers:
            wor.append(wo[:res_ch])
            wos.append(wo[res_ch:])
        else:
            wor.append(jnp.zeros((res_ch, dil_ch), wo.dtype))   # never read
            wos.append(wo)
    wor_all = jnp.stack(wor).astype(jnp.bfloat16)               # (L, res, dil)
    wos_all = jnp.stack(wos).astype(jnp.bfloat16)               # (L, skip, dil)
    sw = start_w.astype(jnp.bfloat16)                           # (res, in)
    ew = end_w.astype(jnp.bfloat16)                             # (2*in, skip)

    kernel = _make_wn_kernel(list(dilations), pads, radix, dil_ch, res_ch,
                             aux_ch, t_tile, T, H, P, W0)

    out = pl.pallas_call(
        kernel,
        out_shape=jax.ShapeDtypeStruct((B, 2 * in_ch, Tp), jnp.float32),
        grid=(B, nt),
        in_specs=[
            pl.BlockSpec((1, in_ch, t_tile), lambda b, k: (b, 0, k)),
            pl.BlockSpec((1, in_ch, t_tile), lambda b, k: (b, 0, k + 1)),
            pl.BlockSpec((1, aux_ch, t_tile), lambda b, k: (b, 0, k)),
            pl.BlockSpec((1, aux_ch, t_tile), lambda b, k: (b, 0, k + 1)),
            pl.BlockSpec((res_ch, in_ch), lambda b, k: (0, 0)),
            pl.BlockSpec((n_layers, radix, 2 * dil_ch, ca),
                         lambda b, k: (0, 0, 0, 0)),
            pl.BlockSpec((n_layers, res_ch, dil_ch), lambda b, k: (0, 0, 0)),
            pl.BlockSpec((n_layers, skip_ch, dil_ch), lambda b, k: (0, 0, 0)),
            pl.BlockSpec((2 * in_ch, skip_ch), lambda b, k: (0, 0)),
        ],
        out_specs=pl.BlockSpec((1, 2 * in_ch, t_tile), lambda b, k: (b, 0, k)),
        scratch_shapes=[
            pltpu.VMEM((ca, W0 + 2 * P), jnp.bfloat16),   # persistent xy buffer
            pltpu.VMEM((res_ch, W0), jnp.float32),        # residual stream x
            pltpu.VMEM((skip_ch, W0), jnp.float32),       # skip accumulator
        ],
        compiler_params=pltpu.CompilerParams(
            dimension_semantics=("parallel", "parallel")),
    )(a_pad, a_pad, s_pad, s_pad, sw, wv_all, wor_all, wos_all, ew)

    return out[:, :in_ch, :T], out[:, in_ch:, :T]          # .chunk(2, 1)


# ---------------------------------------------------------------------------
# Pure-JAX reference (f32) for a numerical sanity check.
# ---------------------------------------------------------------------------
def wn_reference(audio, spect, start_w, layer_params, end_w,
                 dilations, radix, dil_ch, res_ch, skip_ch):
    B, in_ch, T = audio.shape
    x = jnp.einsum('oi,bit->bot', start_w, audio)
    cum = None
    n = len(dilations)
    for i, d in enumerate(dilations):
        wv, wo = layer_params[i]
        p = d * (radix - 1) // 2
        xy = jnp.concatenate([x, spect], axis=1)
        xy_pad = jnp.pad(xy, ((0, 0), (0, 0), (p, p)))
        acc = jnp.zeros((B, 2 * dil_ch, T), jnp.float32)
        for r in range(radix):
            acc = acc + jnp.einsum(
                'oc,bct->bot', wv[r],
                jax.lax.slice_in_dim(xy_pad, r * d, r * d + T, axis=2))
        z = jnp.tanh(acc[:, :dil_ch]) * jax.nn.sigmoid(acc[:, dil_ch:])
        out = jnp.einsum('od,bdt->bot', wo, z)
        if i < n - 1:
            x = x + out[:, :res_ch]
            skip = out[:, res_ch:]
        else:
            skip = out
        cum = skip if cum is None else cum + skip
    o = jnp.einsum('os,bst->bot', end_w, cum)
    return o[:, :in_ch], o[:, in_ch:]


if __name__ == "__main__":
    # Small shapes consistent with the module (T not a multiple of the tile,
    # so the multi-tile + tail-masking paths are exercised).
    B, in_ch, aux_ch, T = 2, 4, 8, 720
    dil_ch = res_ch = skip_ch = 16
    n_layers, radix = 4, 3
    dilations = [2 ** i for i in range(n_layers)]

    key = jax.random.PRNGKey(0)
    keys = jax.random.split(key, 4 + 2 * n_layers)

    audio = jax.random.normal(keys[0], (B, in_ch, T), jnp.float32)
    spect = jax.random.normal(keys[1], (B, aux_ch, T), jnp.float32)

    # Deterministic synthetic parameters (bias=False), PyTorch-equivalent
    # effective (weight-normalized) weights.
    start_w = 0.1 * jax.random.normal(keys[2], (res_ch, in_ch), jnp.float32)
    layer_params = []
    for i in range(n_layers):
        wv = 0.1 * jax.random.normal(
            keys[3 + 2 * i], (radix, 2 * dil_ch, res_ch + aux_ch), jnp.float32)
        co = skip_ch if i == n_layers - 1 else res_ch + skip_ch
        wo = 0.1 * jax.random.normal(keys[4 + 2 * i], (co, dil_ch), jnp.float32)
        layer_params.append((wv, wo))

    # Module default: zero_init=True for the end conv.
    end_w_zero = jnp.zeros((2 * in_ch, skip_ch), jnp.float32)
    out_a, out_b = wn_forward(audio, spect, start_w, layer_params, end_w_zero,
                              dilations, radix, dil_ch, res_ch, skip_ch)
    jax.block_until_ready((out_a, out_b))
    assert out_a.shape == (B, in_ch, T) and out_b.shape == (B, in_ch, T)

    # Numerical sanity check with a non-zero end conv (zero-init end makes the
    # default output trivially zero).  Loose tolerance covers bf16 matmul inputs.
    end_w_chk = 0.1 * jax.random.normal(
        keys[3 + 2 * n_layers], (2 * in_ch, skip_ch), jnp.float32)
    ka, kb = wn_forward(audio, spect, start_w, layer_params, end_w_chk,
                        dilations, radix, dil_ch, res_ch, skip_ch)
    ra, rb = wn_reference(audio, spect, start_w, layer_params, end_w_chk,
                          dilations, radix, dil_ch, res_ch, skip_ch)
    k = jnp.concatenate([ka, kb], axis=1)
    r = jnp.concatenate([ra, rb], axis=1)
    jax.block_until_ready((k, r))
    rel = float(jnp.max(jnp.abs(k - r)) / (jnp.max(jnp.abs(r)) + 1e-6))
    assert rel < 0.08, f"kernel/reference mismatch: rel err {rel}"

    print("KERNEL_OK")
</pallas_src>

<mosaic_0001>
module attributes {stable_mosaic.version = 11 : i64} {
  func.func @kernel(%arg0: i32, %arg1: i32, %arg2: memref<1x4x512xbf16, #tpu.memory_space<vmem>>, %arg3: memref<1x4x512xbf16, #tpu.memory_space<vmem>>, %arg4: memref<1x8x512xbf16, #tpu.memory_space<vmem>>, %arg5: memref<1x8x512xbf16, #tpu.memory_space<vmem>>, %arg6: memref<16x4xbf16, #tpu.memory_space<vmem>>, %arg7: memref<4x3x32x24xbf16, #tpu.memory_space<vmem>>, %arg8: memref<4x16x16xbf16, #tpu.memory_space<vmem>>, %arg9: memref<4x16x16xbf16, #tpu.memory_space<vmem>>, %arg10: memref<8x16xbf16, #tpu.memory_space<vmem>>, %arg11: memref<1x8x512xf32, #tpu.memory_space<vmem>>, %arg12: memref<24x558xbf16, #tpu.memory_space<vmem>>, %arg13: memref<16x542xf32, #tpu.memory_space<vmem>>, %arg14: memref<16x542xf32, #tpu.memory_space<vmem>>) attributes {dimension_semantics = [#tpu.dimension_semantics<parallel>, #tpu.dimension_semantics<parallel>], iteration_bounds = array<i64: 2, 2>, scalar_prefetch = 0 : i64, scratch_operands = 3 : i64, tpu.core_type = #tpu.core_type<tc>, window_params = [{transform_indices = @transform_0, window_bounds = array<i64: 1, 4, 512>}, {transform_indices = @transform_1, window_bounds = array<i64: 1, 4, 512>}, {transform_indices = @transform_2, window_bounds = array<i64: 1, 8, 512>}, {transform_indices = @transform_3, window_bounds = array<i64: 1, 8, 512>}, {pipeline_mode = #tpu.pipeline_mode<synchronous>, transform_indices = @transform_4, window_bounds = array<i64: 16, 4>}, {pipeline_mode = #tpu.pipeline_mode<synchronous>, transform_indices = @transform_5, window_bounds = array<i64: 4, 3, 32, 24>}, {pipeline_mode = #tpu.pipeline_mode<synchronous>, transform_indices = @transform_6, window_bounds = array<i64: 4, 16, 16>}, {pipeline_mode = #tpu.pipeline_mode<synchronous>, transform_indices = @transform_7, window_bounds = array<i64: 4, 16, 16>}, {pipeline_mode = #tpu.pipeline_mode<synchronous>, transform_indices = @transform_8, window_bounds = array<i64: 8, 16>}, {transform_indices = @transform_9, window_bounds = array<i64: 1, 8, 512>}]} {
    %c0 = arith.constant 0 : index
    %c0_0 = arith.constant 0 : index
    %0 = vector.load %arg6[%c0, %c0_0] : memref<16x4xbf16, #tpu.memory_space<vmem>>, vector<16x4xbf16>
    %c0_1 = arith.constant 0 : index
    %c0_2 = arith.constant 0 : index
    %c0_3 = arith.constant 0 : index
    %1 = vector.load %arg2[%c0_1, %c0_2, %c0_3] : memref<1x4x512xbf16, #tpu.memory_space<vmem>>, vector<1x4x512xbf16>
    %2 = vector.shape_cast %1 : vector<1x4x512xbf16> to vector<4x512xbf16>
    %cst = arith.constant dense<0.000000e+00> : vector<16x512xf32>
    %3 = tpu.matmul %0, %2, %cst {dimension_numbers = #tpu.dot_dimension_numbers<[1], [0], [0], [1], [0, 0, 1, 1], [], []>} : vector<16x4xbf16>, vector<4x512xbf16>, vector<16x512xf32> -> vector<16x512xf32>
    %c0_4 = arith.constant 0 : index
    %c0_5 = arith.constant 0 : index
    %4 = vector.load %arg13[%c0_4, %c0_5] : memref<16x542xf32, #tpu.memory_space<vmem>>, vector<16x512xf32>
    tpu.vector_store %arg13[%c0_4, %c0_5], %3 {strides = array<i32>} : memref<16x542xf32, #tpu.memory_space<vmem>>, vector<16x512xf32>,
    %c0_6 = arith.constant 0 : index
    %c0_7 = arith.constant 0 : index
    %5 = vector.load %arg6[%c0_6, %c0_7] : memref<16x4xbf16, #tpu.memory_space<vmem>>, vector<16x4xbf16>
    %c0_8 = arith.constant 0 : index
    %c0_9 = arith.constant 0 : index
    %c0_10 = arith.constant 0 : index
    %6 = vector.load %arg3[%c0_8, %c0_9, %c0_10] : memref<1x4x512xbf16, #tpu.memory_space<vmem>>, vector<1x4x30xbf16>
    %7 = vector.shape_cast %6 : vector<1x4x30xbf16> to vector<4x30xbf16>
    %cst_11 = arith.constant dense<0.000000e+00> : vector<16x30xf32>
    %8 = tpu.matmul %5, %7, %cst_11 {dimension_numbers = #tpu.dot_dimension_numbers<[1], [0], [0], [1], [0, 0, 1, 1], [], []>} : vector<16x4xbf16>, vector<4x30xbf16>, vector<16x30xf32> -> vector<16x30xf32>
    %c0_12 = arith.constant 0 : index
    %c512 = arith.constant 512 : index
    %9 = vector.load %arg13[%c0_12, %c512] : memref<16x542xf32, #tpu.memory_space<vmem>>, vector<16x30xf32>
    tpu.vector_store %arg13[%c0_12, %c512], %8 {strides = array<i32>} : memref<16x542xf32, #tpu.memory_space<vmem>>, vector<16x30xf32>,
    %c0_13 = arith.constant 0 : index
    %c0_14 = arith.constant 0 : index
    %c0_15 = arith.constant 0 : index
    %10 = vector.load %arg4[%c0_13, %c0_14, %c0_15] : memref<1x8x512xbf16, #tpu.memory_space<vmem>>, vector<1x8x512xbf16>
    %11 = vector.shape_cast %10 : vector<1x8x512xbf16> to vector<8x512xbf16>
    %c16 = arith.constant 16 : index
    %c8 = arith.constant 8 : index
    %12 = vector.load %arg12[%c16, %c8] : memref<24x558xbf16, #tpu.memory_space<vmem>>, vector<8x512xbf16>
    tpu.vector_store %arg12[%c16, %c8], %11 {strides = array<i32>} : memref<24x558xbf16, #tpu.memory_space<vmem>>, vector<8x512xbf16>,
    %c0_16 = arith.constant 0 : index
    %c0_17 = arith.constant 0 : index
    %c0_18 = arith.constant 0 : index
    %13 = vector.load %arg5[%c0_16, %c0_17, %c0_18] : memref<1x8x512xbf16, #tpu.memory_space<vmem>>, vector<1x8x30xbf16>
    %14 = vector.shape_cast %13 : vector<1x8x30xbf16> to vector<8x30xbf16>
    %c16_19 = arith.constant 16 : index
    %c520 = arith.constant 520 : index
    %15 = vector.load %arg12[%c16_19, %c520] : memref<24x558xbf16, #tpu.memory_space<vmem>>, vector<8x30xbf16>
    tpu.vector_store %arg12[%c16_19, %c520], %14 {strides = array<i32>} : memref<24x558xbf16, #tpu.memory_space<vmem>>, vector<8x30xbf16>,
    %cst_20 = arith.constant 0.000000e+00 : bf16
    %16 = vector.broadcast %cst_20 : bf16 to vector<24x8xbf16>
    %c0_21 = arith.constant 0 : index
    %c0_22 = arith.constant 0 : index
    %17 = vector.load %arg12[%c0_21, %c0_22] : memref<24x558xbf16, #tpu.memory_space<vmem>>, vector<24x8xbf16>
    tpu.vector_store %arg12[%c0_21, %c0_22], %16 {strides = array<i32>} : memref<24x558xbf16, #tpu.memory_space<vmem>>, vector<24x8xbf16>,
    %cst_23 = arith.constant 0.000000e+00 : bf16
    %18 = vector.broadcast %cst_23 : bf16 to vector<24x8xbf16>
    %c0_24 = arith.constant 0 : index
    %c550 = arith.constant 550 : index
    %19 = vector.load %arg12[%c0_24, %c550] : memref<24x558xbf16, #tpu.memory_space<vmem>>, vector<24x8xbf16>
    tpu.vector_store %arg12[%c0_24, %c550], %18 {strides = array<i32>} : memref<24x558xbf16, #tpu.memory_space<vmem>>, vector<24x8xbf16>,
    %c512_i32 = arith.constant 512 : i32
    %20 = arith.muli %arg1, %c512_i32 : i32
    %c15_i32 = arith.constant 15 : i32
    %21 = arith.subi %20, %c15_i32 : i32
    %22 = tpu.iota {dimensions = array<i32: 1>} : vector<1x542xi32>
    %23 = vector.broadcast %21 : i32 to vector<1x542xi32>
    %24 = arith.addi %23, %22 : vector<1x542xi32>
    %c0_i32 = arith.constant 0 : i32
    %25 = vector.broadcast %c0_i32 : i32 to vector<1x542xi32>
    %26 = arith.cmpi sge, %24, %25 : vector<1x542xi32>
    %c720_i32 = arith.constant 720 : i32
    %27 = vector.broadcast %c720_i32 : i32 to vector<1x542xi32>
    %28 = arith.cmpi slt, %24, %27 : vector<1x542xi32>
    %29 = arith.andi %26, %28 : vector<1x542xi1>
    %c0_25 = arith.constant 0 : index
    %c0_26 = arith.constant 0 : index
    %30 = vector.load %arg13[%c0_25, %c0_26] : memref<16x542xf32, #tpu.memory_space<vmem>>, vector<16x542xf32>
    %cst_27 = arith.constant 0.000000e+00 : f32
    %31 = vector.shape_cast %29 : vector<1x542xi1> to vector<1x542xi1>
    %32 = vector.broadcast %31 : vector<1x542xi1> to vector<16x542xi1>
    %33 = vector.broadcast %cst_27 : f32 to vector<16x542xf32>
    %34 = arith.select %32, %30, %33 : vector<16x542xi1>, vector<16x542xf32>
    %35 = arith.truncf %34 : vector<16x542xf32> to vector<16x542xbf16>
    %c0_28 = arith.constant 0 : index
    %c8_29 = arith.constant 8 : index
    %36 = vector.load %arg12[%c0_28, %c8_29] : memref<24x558xbf16, #tpu.memory_space<vmem>>, vector<16x542xbf16>
    tpu.vector_store %arg12[%c0_28, %c8_29], %35 {strides = array<i32>} : memref<24x558xbf16, #tpu.memory_space<vmem>>, vector<16x542xbf16>,
    %cst_30 = arith.constant 0.000000e+00 : f32
    %37 = vector.broadcast %cst_30 : f32 to vector<32x542xf32>
    %c0_31 = arith.constant 0 : index
    %c0_32 = arith.constant 0 : index
    %c0_33 = arith.constant 0 : index
    %c0_34 = arith.constant 0 : index
    %38 = vector.load %arg7[%c0_31, %c0_32, %c0_33, %c0_34] : memref<4x3x32x24xbf16, #tpu.memory_space<vmem>>, vector<1x1x32x24xbf16>
    %39 = vector.shape_cast %38 : vector<1x1x32x24xbf16> to vector<32x24xbf16>
    %c0_35 = arith.constant 0 : index
    %c7 = arith.constant 7 : index
    %40 = vector.load %arg12[%c0_35, %c7] : memref<24x558xbf16, #tpu.memory_space<vmem>>, vector<24x542xbf16>
    %cst_36 = arith.constant dense<0.000000e+00> : vector<32x542xf32>
    %41 = tpu.matmul %39, %40, %cst_36 {dimension_numbers = #tpu.dot_dimension_numbers<[1], [0], [0], [1], [0, 0, 1, 1], [], []>} : vector<32x24xbf16>, vector<24x542xbf16>, vector<32x542xf32> -> vector<32x542xf32>
    %42 = arith.addf %37, %41 : vector<32x542xf32>
    %c0_37 = arith.constant 0 : index
    %c1 = arith.constant 1 : index
    %c0_38 = arith.constant 0 : index
    %c0_39 = arith.constant 0 : index
    %43 = vector.load %arg7[%c0_37, %c1, %c0_38, %c0_39] : memref<4x3x32x24xbf16, #tpu.memory_space<vmem>>, vector<1x1x32x24xbf16>
    %44 = vector.shape_cast %43 : vector<1x1x32x24xbf16> to vector<32x24xbf16>
    %c0_40 = arith.constant 0 : index
    %c8_41 = arith.constant 8 : index
    %45 = vector.load %arg12[%c0_40, %c8_41] : memref<24x558xbf16, #tpu.memory_space<vmem>>, vector<24x542xbf16>
    %cst_42 = arith.constant dense<0.000000e+00> : vector<32x542xf32>
    %46 = tpu.matmul %44, %45, %cst_42 {dimension_numbers = #tpu.dot_dimension_numbers<[1], [0], [0], [1], [0, 0, 1, 1], [], []>} : vector<32x24xbf16>, vector<24x542xbf16>, vector<32x542xf32> -> vector<32x542xf32>
    %47 = arith.addf %42, %46 : vector<32x542xf32>
    %c0_43 = arith.constant 0 : index
    %c2 = arith.constant 2 : index
    %c0_44 = arith.constant 0 : index
    %c0_45 = arith.constant 0 : index
    %48 = vector.load %arg7[%c0_43, %c2, %c0_44, %c0_45] : memref<4x3x32x24xbf16, #tpu.memory_space<vmem>>, vector<1x1x32x24xbf16>
    %49 = vector.shape_cast %48 : vector<1x1x32x24xbf16> to vector<32x24xbf16>
    %c0_46 = arith.constant 0 : index
    %c9 = arith.constant 9 : index
    %50 = vector.load %arg12[%c0_46, %c9] : memref<24x558xbf16, #tpu.memory_space<vmem>>, vector<24x542xbf16>
    %cst_47 = arith.constant dense<0.000000e+00> : vector<32x542xf32>
    %51 = tpu.matmul %49, %50, %cst_47 {dimension_numbers = #tpu.dot_dimension_numbers<[1], [0], [0], [1], [0, 0, 1, 1], [], []>} : vector<32x24xbf16>, vector<24x542xbf16>, vector<32x542xf32> -> vector<32x542xf32>
    %52 = arith.addf %47, %51 : vector<32x542xf32>
    %53 = vector.extract_strided_slice %52 {offsets = [0, 0], sizes = [16, 542], strides = [1, 1]} : vector<32x542xf32> to vector<16x542xf32>
    %54 = math.tanh %53 : vector<16x542xf32>
    %55 = vector.extract_strided_slice %52 {offsets = [16, 0], sizes = [16, 542], strides = [1, 1]} : vector<32x542xf32> to vector<16x542xf32>
    %56 = arith.negf %55 : vector<16x542xf32>
    %57 = math.exp %56 : vector<16x542xf32>
    %cst_48 = arith.constant 1.000000e+00 : f32
    %58 = vector.broadcast %cst_48 : f32 to vector<16x542xf32>
    %59 = arith.addf %58, %57 : vector<16x542xf32>
    %60 = arith.divf %58, %59 : vector<16x542xf32>
    %61 = arith.mulf %54, %60 : vector<16x542xf32>
    %62 = arith.truncf %61 : vector<16x542xf32> to vector<16x542xbf16>
    %c0_49 = arith.constant 0 : index
    %c0_50 = arith.constant 0 : index
    %63 = vector.load %arg13[%c0_49, %c0_50] : memref<16x542xf32, #tpu.memory_space<vmem>>, vector<16x542xf32>
    %c0_51 = arith.constant 0 : index
    %c0_52 = arith.constant 0 : index
    %c0_53 = arith.constant 0 : index
    %64 = vector.load %arg8[%c0_51, %c0_52, %c0_53] : memref<4x16x16xbf16, #tpu.memory_space<vmem>>, vector<1x16x16xbf16>
    %65 = vector.shape_cast %64 : vector<1x16x16xbf16> to vector<16x16xbf16>
    %cst_54 = arith.constant dense<0.000000e+00> : vector<16x542xf32>
    %66 = tpu.matmul %65, %62, %cst_54 {dimension_numbers = #tpu.dot_dimension_numbers<[1], [0], [0], [1], [0, 0, 1, 1], [], []>} : vector<16x16xbf16>, vector<16x542xbf16>, vector<16x542xf32> -> vector<16x542xf32>
    %67 = arith.addf %63, %66 : vector<16x542xf32>
    %c0_55 = arith.constant 0 : index
    %c0_56 = arith.constant 0 : index
    %68 = vector.load %arg13[%c0_55, %c0_56] : memref<16x542xf32, #tpu.memory_space<vmem>>, vector<16x542xf32>
    tpu.vector_store %arg13[%c0_55, %c0_56], %67 {strides = array<i32>} : memref<16x542xf32, #tpu.memory_space<vmem>>, vector<16x542xf32>,
    %c0_57 = arith.constant 0 : index
    %c0_58 = arith.constant 0 : index
    %c0_59 = arith.constant 0 : index
    %69 = vector.load %arg9[%c0_57, %c0_58, %c0_59] : memref<4x16x16xbf16, #tpu.memory_space<vmem>>, vector<1x16x16xbf16>
    %70 = vector.shape_cast %69 : vector<1x16x16xbf16> to vector<16x16xbf16>
    %cst_60 = arith.constant dense<0.000000e+00> : vector<16x542xf32>
    %71 = tpu.matmul %70, %62, %cst_60 {dimension_numbers = #tpu.dot_dimension_numbers<[1], [0], [0], [1], [0, 0, 1, 1], [], []>} : vector<16x16xbf16>, vector<16x542xbf16>, vector<16x542xf32> -> vector<16x542xf32>
    %c0_61 = arith.constant 0 : index
    %c0_62 = arith.constant 0 : index
    %72 = vector.load %arg14[%c0_61, %c0_62] : memref<16x542xf32, #tpu.memory_space<vmem>>, vector<16x542xf32>
    tpu.vector_store %arg14[%c0_61, %c0_62], %71 {strides = array<i32>} : memref<16x542xf32, #tpu.memory_space<vmem>>, vector<16x542xf32>,
    %c0_63 = arith.constant 0 : index
    %c0_64 = arith.constant 0 : index
    %73 = vector.load %arg13[%c0_63, %c0_64] : memref<16x542xf32, #tpu.memory_space<vmem>>, vector<16x542xf32>
    %cst_65 = arith.constant 0.000000e+00 : f32
    %74 = vector.shape_cast %29 : vector<1x542xi1> to vector<1x542xi1>
    %75 = vector.broadcast %74 : vector<1x542xi1> to vector<16x542xi1>
    %76 = vector.broadcast %cst_65 : f32 to vector<16x542xf32>
    %77 = arith.select %75, %73, %76 : vector<16x542xi1>, vector<16x542xf32>
    %78 = arith.truncf %77 : vector<16x542xf32> to vector<16x542xbf16>
    %c0_66 = arith.constant 0 : index
    %c8_67 = arith.constant 8 : index
    %79 = vector.load %arg12[%c0_66, %c8_67] : memref<24x558xbf16, #tpu.memory_space<vmem>>, vector<16x542xbf16>
    tpu.vector_store %arg12[%c0_66, %c8_67], %78 {strides = array<i32>} : memref<24x558xbf16, #tpu.memory_space<vmem>>, vector<16x542xbf16>,
    %cst_68 = arith.constant 0.000000e+00 : f32
    %80 = vector.broadcast %cst_68 : f32 to vector<32x542xf32>
    %c1_69 = arith.constant 1 : index
    %c0_70 = arith.constant 0 : index
    %c0_71 = arith.constant 0 : index
    %c0_72 = arith.constant 0 : index
    %81 = vector.load %arg7[%c1_69, %c0_70, %c0_71, %c0_72] : memref<4x3x32x24xbf16, #tpu.memory_space<vmem>>, vector<1x1x32x24xbf16>
    %82 = vector.shape_cast %81 : vector<1x1x32x24xbf16> to vector<32x24xbf16>
    %c0_73 = arith.constant 0 : index
    %c6 = arith.constant 6 : index
    %83 = vector.load %arg12[%c0_73, %c6] : memref<24x558xbf16, #tpu.memory_space<vmem>>, vector<24x542xbf16>
    %cst_74 = arith.constant dense<0.000000e+00> : vector<32x542xf32>
    %84 = tpu.matmul %82, %83, %cst_74 {dimension_numbers = #tpu.dot_dimension_numbers<[1], [0], [0], [1], [0, 0, 1, 1], [], []>} : vector<32x24xbf16>, vector<24x542xbf16>, vector<32x542xf32> -> vector<32x542xf32>
    %85 = arith.addf %80, %84 : vector<32x542xf32>
    %c1_75 = arith.constant 1 : index
    %c1_76 = arith.constant 1 : index
    %c0_77 = arith.constant 0 : index
    %c0_78 = arith.constant 0 : index
    %86 = vector.load %arg7[%c1_75, %c1_76, %c0_77, %c0_78] : memref<4x3x32x24xbf16, #tpu.memory_space<vmem>>, vector<1x1x32x24xbf16>
    %87 = vector.shape_cast %86 : vector<1x1x32x24xbf16> to vector<32x24xbf16>
    %c0_79 = arith.constant 0 : index
    %c8_80 = arith.constant 8 : index
    %88 = vector.load %arg12[%c0_79, %c8_80] : memref<24x558xbf16, #tpu.memory_space<vmem>>, vector<24x542xbf16>
    %cst_81 = arith.constant dense<0.000000e+00> : vector<32x542xf32>
    %89 = tpu.matmul %87, %88, %cst_81 {dimension_numbers = #tpu.dot_dimension_numbers<[1], [0], [0], [1], [0, 0, 1, 1], [], []>} : vector<32x24xbf16>, vector<24x542xbf16>, vector<32x542xf32> -> vector<32x542xf32>
    %90 = arith.addf %85, %89 : vector<32x542xf32>
    %c1_82 = arith.constant 1 : index
    %c2_83 = arith.constant 2 : index
    %c0_84 = arith.constant 0 : index
    %c0_85 = arith.constant 0 : index
    %91 = vector.load %arg7[%c1_82, %c2_83, %c0_84, %c0_85] : memref<4x3x32x24xbf16, #tpu.memory_space<vmem>>, vector<1x1x32x24xbf16>
    %92 = vector.shape_cast %91 : vector<1x1x32x24xbf16> to vector<32x24xbf16>
    %c0_86 = arith.constant 0 : index
    %c10 = arith.constant 10 : index
    %93 = vector.load %arg12[%c0_86, %c10] : memref<24x558xbf16, #tpu.memory_space<vmem>>, vector<24x542xbf16>
    %cst_87 = arith.constant dense<0.000000e+00> : vector<32x542xf32>
    %94 = tpu.matmul %92, %93, %cst_87 {dimension_numbers = #tpu.dot_dimension_numbers<[1], [0], [0], [1], [0, 0, 1, 1], [], []>} : vector<32x24xbf16>, vector<24x542xbf16>, vector<32x542xf32> -> vector<32x542xf32>
    %95 = arith.addf %90, %94 : vector<32x542xf32>
    %96 = vector.extract_strided_slice %95 {offsets = [0, 0], sizes = [16, 542], strides = [1, 1]} : vector<32x542xf32> to vector<16x542xf32>
    %97 = math.tanh %96 : vector<16x542xf32>
    %98 = vector.extract_strided_slice %95 {offsets = [16, 0], sizes = [16, 542], strides = [1, 1]} : vector<32x542xf32> to vector<16x542xf32>
    %99 = arith.negf %98 : vector<16x542xf32>
    %100 = math.exp %99 : vector<16x542xf32>
    %cst_88 = arith.constant 1.000000e+00 : f32
    %101 = vector.broadcast %cst_88 : f32 to vector<16x542xf32>
    %102 = arith.addf %101, %100 : vector<16x542xf32>
    %103 = arith.divf %101, %102 : vector<16x542xf32>
    %104 = arith.mulf %97, %103 : vector<16x542xf32>
    %105 = arith.truncf %104 : vector<16x542xf32> to vector<16x542xbf16>
    %c0_89 = arith.constant 0 : index
    %c0_90 = arith.constant 0 : index
    %106 = vector.load %arg13[%c0_89, %c0_90] : memref<16x542xf32, #tpu.memory_space<vmem>>, vector<16x542xf32>
    %c1_91 = arith.constant 1 : index
    %c0_92 = arith.constant 0 : index
    %c0_93 = arith.constant 0 : index
    %107 = vector.load %arg8[%c1_91, %c0_92, %c0_93] : memref<4x16x16xbf16, #tpu.memory_space<vmem>>, vector<1x16x16xbf16>
    %108 = vector.shape_cast %107 : vector<1x16x16xbf16> to vector<16x16xbf16>
    %cst_94 = arith.constant dense<0.000000e+00> : vector<16x542xf32>
    %109 = tpu.matmul %108, %105, %cst_94 {dimension_numbers = #tpu.dot_dimension_numbers<[1], [0], [0], [1], [0, 0, 1, 1], [], []>} : vector<16x16xbf16>, vector<16x542xbf16>, vector<16x542xf32> -> vector<16x542xf32>
    %110 = arith.addf %106, %109 : vector<16x542xf32>
    %c0_95 = arith.constant 0 : index
    %c0_96 = arith.constant 0 : index
    %111 = vector.load %arg13[%c0_95, %c0_96] : memref<16x542xf32, #tpu.memory_space<vmem>>, vector<16x542xf32>
    tpu.vector_store %arg13[%c0_95, %c0_96], %110 {strides = array<i32>} : memref<16x542xf32, #tpu.memory_space<vmem>>, vector<16x542xf32>,
    %c1_97 = arith.constant 1 : index
    %c0_98 = arith.constant 0 : index
    %c0_99 = arith.constant 0 : index
    %112 = vector.load %arg9[%c1_97, %c0_98, %c0_99] : memref<4x16x16xbf16, #tpu.memory_space<vmem>>, vector<1x16x16xbf16>
    %113 = vector.shape_cast %112 : vector<1x16x16xbf16> to vector<16x16xbf16>
    %cst_100 = arith.constant dense<0.000000e+00> : vector<16x542xf32>
    %114 = tpu.matmul %113, %105, %cst_100 {dimension_numbers = #tpu.dot_dimension_numbers<[1], [0], [0], [1], [0, 0, 1, 1], [], []>} : vector<16x16xbf16>, vector<16x542xbf16>, vector<16x542xf32> -> vector<16x542xf32>
    %c0_101 = arith.constant 0 : index
    %c0_102 = arith.constant 0 : index
    %115 = vector.load %arg14[%c0_101, %c0_102] : memref<16x542xf32, #tpu.memory_space<vmem>>, vector<16x542xf32>
    %116 = arith.addf %115, %114 : vector<16x542xf32>
    %c0_103 = arith.constant 0 : index
    %c0_104 = arith.constant 0 : index
    %117 = vector.load %arg14[%c0_103, %c0_104] : memref<16x542xf32, #tpu.memory_space<vmem>>, vector<16x542xf32>
    tpu.vector_store %arg14[%c0_103, %c0_104], %116 {strides = array<i32>} : memref<16x542xf32, #tpu.memory_space<vmem>>, vector<16x542xf32>,
    %c0_105 = arith.constant 0 : index
    %c0_106 = arith.constant 0 : index
    %118 = vector.load %arg13[%c0_105, %c0_106] : memref<16x542xf32, #tpu.memory_space<vmem>>, vector<16x542xf32>
    %cst_107 = arith.constant 0.000000e+00 : f32
    %119 = vector.shape_cast %29 : vector<1x542xi1> to vector<1x542xi1>
    %120 = vector.broadcast %119 : vector<1x542xi1> to vector<16x542xi1>
    %121 = vector.broadcast %cst_107 : f32 to vector<16x542xf32>
    %122 = arith.select %120, %118, %121 : vector<16x542xi1>, vector<16x542xf32>
    %123 = arith.truncf %122 : vector<16x542xf32> to vector<16x542xbf16>
    %c0_108 = arith.constant 0 : index
    %c8_109 = arith.constant 8 : index
    %124 = vector.load %arg12[%c0_108, %c8_109] : memref<24x558xbf16, #tpu.memory_space<vmem>>, vector<16x542xbf16>
    tpu.vector_store %arg12[%c0_108, %c8_109], %123 {strides = array<i32>} : memref<24x558xbf16, #tpu.memory_space<vmem>>, vector<16x542xbf16>,
    %cst_110 = arith.constant 0.000000e+00 : f32
    %125 = vector.broadcast %cst_110 : f32 to vector<32x542xf32>
    %c2_111 = arith.constant 2 : index
    %c0_112 = arith.constant 0 : index
    %c0_113 = arith.constant 0 : index
    %c0_114 = arith.constant 0 : index
    %126 = vector.load %arg7[%c2_111, %c0_112, %c0_113, %c0_114] : memref<4x3x32x24xbf16, #tpu.memory_space<vmem>>, vector<1x1x32x24xbf16>
    %127 = vector.shape_cast %126 : vector<1x1x32x24xbf16> to vector<32x24xbf16>
    %c0_115 = arith.constant 0 : index
    %c4 = arith.constant 4 : index
    %128 = vector.load %arg12[%c0_115, %c4] : memref<24x558xbf16, #tpu.memory_space<vmem>>, vector<24x542xbf16>
    %cst_116 = arith.constant dense<0.000000e+00> : vector<32x542xf32>
    %129 = tpu.matmul %127, %128, %cst_116 {dimension_numbers = #tpu.dot_dimension_numbers<[1], [0], [0], [1], [0, 0, 1, 1], [], []>} : vector<32x24xbf16>, vector<24x542xbf16>, vector<32x542xf32> -> vector<32x542xf32>
    %130 = arith.addf %125, %129 : vector<32x542xf32>
    %c2_117 = arith.constant 2 : index
    %c1_118 = arith.constant 1 : index
    %c0_119 = arith.constant 0 : index
    %c0_120 = arith.constant 0 : index
    %131 = vector.load %arg7[%c2_117, %c1_118, %c0_119, %c0_120] : memref<4x3x32x24xbf16, #tpu.memory_space<vmem>>, vector<1x1x32x24xbf16>
    %132 = vector.shape_cast %131 : vector<1x1x32x24xbf16> to vector<32x24xbf16>
    %c0_121 = arith.constant 0 : index
    %c8_122 = arith.constant 8 : index
    %133 = vector.load %arg12[%c0_121, %c8_122] : memref<24x558xbf16, #tpu.memory_space<vmem>>, vector<24x542xbf16>
    %cst_123 = arith.constant dense<0.000000e+00> : vector<32x542xf32>
    %134 = tpu.matmul %132, %133, %cst_123 {dimension_numbers = #tpu.dot_dimension_numbers<[1], [0], [0], [1], [0, 0, 1, 1], [], []>} : vector<32x24xbf16>, vector<24x542xbf16>, vector<32x542xf32> -> vector<32x542xf32>
    %135 = arith.addf %130, %134 : vector<32x542xf32>
    %c2_124 = arith.constant 2 : index
    %c2_125 = arith.constant 2 : index
    %c0_126 = arith.constant 0 : index
    %c0_127 = arith.constant 0 : index
    %136 = vector.load %arg7[%c2_124, %c2_125, %c0_126, %c0_127] : memref<4x3x32x24xbf16, #tpu.memory_space<vmem>>, vector<1x1x32x24xbf16>
    %137 = vector.shape_cast %136 : vector<1x1x32x24xbf16> to vector<32x24xbf16>
    %c0_128 = arith.constant 0 : index
    %c12 = arith.constant 12 : index
    %138 = vector.load %arg12[%c0_128, %c12] : memref<24x558xbf16, #tpu.memory_space<vmem>>, vector<24x542xbf16>
    %cst_129 = arith.constant dense<0.000000e+00> : vector<32x542xf32>
    %139 = tpu.matmul %137, %138, %cst_129 {dimension_numbers = #tpu.dot_dimension_numbers<[1], [0], [0], [1], [0, 0, 1, 1], [], []>} : vector<32x24xbf16>, vector<24x542xbf16>, vector<32x542xf32> -> vector<32x542xf32>
    %140 = arith.addf %135, %139 : vector<32x542xf32>
    %141 = vector.extract_strided_slice %140 {offsets = [0, 0], sizes = [16, 542], strides = [1, 1]} : vector<32x542xf32> to vector<16x542xf32>
    %142 = math.tanh %141 : vector<16x542xf32>
    %143 = vector.extract_strided_slice %140 {offsets = [16, 0], sizes = [16, 542], strides = [1, 1]} : vector<32x542xf32> to vector<16x542xf32>
    %144 = arith.negf %143 : vector<16x542xf32>
    %145 = math.exp %144 : vector<16x542xf32>
    %cst_130 = arith.constant 1.000000e+00 : f32
    %146 = vector.broadcast %cst_130 : f32 to vector<16x542xf32>
    %147 = arith.addf %146, %145 : vector<16x542xf32>
    %148 = arith.divf %146, %147 : vector<16x542xf32>
    %149 = arith.mulf %142, %148 : vector<16x542xf32>
    %150 = arith.truncf %149 : vector<16x542xf32> to vector<16x542xbf16>
    %c0_131 = arith.constant 0 : index
    %c0_132 = arith.constant 0 : index
    %151 = vector.load %arg13[%c0_131, %c0_132] : memref<16x542xf32, #tpu.memory_space<vmem>>, vector<16x542xf32>
    %c2_133 = arith.constant 2 : index
    %c0_134 = arith.constant 0 : index
    %c0_135 = arith.constant 0 : index
    %152 = vector.load %arg8[%c2_133, %c0_134, %c0_135] : memref<4x16x16xbf16, #tpu.memory_space<vmem>>, vector<1x16x16xbf16>
    %153 = vector.shape_cast %152 : vector<1x16x16xbf16> to vector<16x16xbf16>
    %cst_136 = arith.constant dense<0.000000e+00> : vector<16x542xf32>
    %154 = tpu.matmul %153, %150, %cst_136 {dimension_numbers = #tpu.dot_dimension_numbers<[1], [0], [0], [1], [0, 0, 1, 1], [], []>} : vector<16x16xbf16>, vector<16x542xbf16>, vector<16x542xf32> -> vector<16x542xf32>
    %155 = arith.addf %151, %154 : vector<16x542xf32>
    %c0_137 = arith.constant 0 : index
    %c0_138 = arith.constant 0 : index
    %156 = vector.load %arg13[%c0_137, %c0_138] : memref<16x542xf32, #tpu.memory_space<vmem>>, vector<16x542xf32>
    tpu.vector_store %arg13[%c0_137, %c0_138], %155 {strides = array<i32>} : memref<16x542xf32, #tpu.memory_space<vmem>>, vector<16x542xf32>,
    %c2_139 = arith.constant 2 : index
    %c0_140 = arith.constant 0 : index
    %c0_141 = arith.constant 0 : index
    %157 = vector.load %arg9[%c2_139, %c0_140, %c0_141] : memref<4x16x16xbf16, #tpu.memory_space<vmem>>, vector<1x16x16xbf16>
    %158 = vector.shape_cast %157 : vector<1x16x16xbf16> to vector<16x16xbf16>
    %cst_142 = arith.constant dense<0.000000e+00> : vector<16x542xf32>
    %159 = tpu.matmul %158, %150, %cst_142 {dimension_numbers = #tpu.dot_dimension_numbers<[1], [0], [0], [1], [0, 0, 1, 1], [], []>} : vector<16x16xbf16>, vector<16x542xbf16>, vector<16x542xf32> -> vector<16x542xf32>
    %c0_143 = arith.constant 0 : index
    %c0_144 = arith.constant 0 : index
    %160 = vector.load %arg14[%c0_143, %c0_144] : memref<16x542xf32, #tpu.memory_space<vmem>>, vector<16x542xf32>
    %161 = arith.addf %160, %159 : vector<16x542xf32>
    %c0_145 = arith.constant 0 : index
    %c0_146 = arith.constant 0 : index
    %162 = vector.load %arg14[%c0_145, %c0_146] : memref<16x542xf32, #tpu.memory_space<vmem>>, vector<16x542xf32>
    tpu.vector_store %arg14[%c0_145, %c0_146], %161 {strides = array<i32>} : memref<16x542xf32, #tpu.memory_space<vmem>>, vector<16x542xf32>,
    %c0_147 = arith.constant 0 : index
    %c0_148 = arith.constant 0 : index
    %163 = vector.load %arg13[%c0_147, %c0_148] : memref<16x542xf32, #tpu.memory_space<vmem>>, vector<16x542xf32>
    %cst_149 = arith.constant 0.000000e+00 : f32
    %164 = vector.shape_cast %29 : vector<1x542xi1> to vector<1x542xi1>
    %165 = vector.broadcast %164 : vector<1x542xi1> to vector<16x542xi1>
    %166 = vector.broadcast %cst_149 : f32 to vector<16x542xf32>
    %167 = arith.select %165, %163, %166 : vector<16x542xi1>, vector<16x542xf32>
    %168 = arith.truncf %167 : vector<16x542xf32> to vector<16x542xbf16>
    %c0_150 = arith.constant 0 : index
    %c8_151 = arith.constant 8 : index
    %169 = vector.load %arg12[%c0_150, %c8_151] : memref<24x558xbf16, #tpu.memory_space<vmem>>, vector<16x542xbf16>
    tpu.vector_store %arg12[%c0_150, %c8_151], %168 {strides = array<i32>} : memref<24x558xbf16, #tpu.memory_space<vmem>>, vector<16x542xbf16>,
    %cst_152 = arith.constant 0.000000e+00 : f32
    %170 = vector.broadcast %cst_152 : f32 to vector<32x542xf32>
    %c3 = arith.constant 3 : index
    %c0_153 = arith.constant 0 : index
    %c0_154 = arith.constant 0 : index
    %c0_155 = arith.constant 0 : index
    %171 = vector.load %arg7[%c3, %c0_153, %c0_154, %c0_155] : memref<4x3x32x24xbf16, #tpu.memory_space<vmem>>, vector<1x1x32x24xbf16>
    %172 = vector.shape_cast %171 : vector<1x1x32x24xbf16> to vector<32x24xbf16>
    %c0_156 = arith.constant 0 : index
    %c0_157 = arith.constant 0 : index
    %173 = vector.load %arg12[%c0_156, %c0_157] : memref<24x558xbf16, #tpu.memory_space<vmem>>, vector<24x542xbf16>
    %cst_158 = arith.constant dense<0.000000e+00> : vector<32x542xf32>
    %174 = tpu.matmul %172, %173, %cst_158 {dimension_numbers = #tpu.dot_dimension_numbers<[1], [0], [0], [1], [0, 0, 1, 1], [], []>} : vector<32x24xbf16>, vector<24x542xbf16>, vector<32x542xf32> -> vector<32x542xf32>
    %175 = arith.addf %170, %174 : vector<32x542xf32>
    %c3_159 = arith.constant 3 : index
    %c1_160 = arith.constant 1 : index
    %c0_161 = arith.constant 0 : index
    %c0_162 = arith.constant 0 : index
    %176 = vector.load %arg7[%c3_159, %c1_160, %c0_161, %c0_162] : memref<4x3x32x24xbf16, #tpu.memory_space<vmem>>, vector<1x1x32x24xbf16>
    %177 = vector.shape_cast %176 : vector<1x1x32x24xbf16> to vector<32x24xbf16>
    %c0_163 = arith.constant 0 : index
    %c8_164 = arith.constant 8 : index
    %178 = vector.load %arg12[%c0_163, %c8_164] : memref<24x558xbf16, #tpu.memory_space<vmem>>, vector<24x542xbf16>
    %cst_165 = arith.constant dense<0.000000e+00> : vector<32x542xf32>
    %179 = tpu.matmul %177, %178, %cst_165 {dimension_numbers = #tpu.dot_dimension_numbers<[1], [0], [0], [1], [0, 0, 1, 1], [], []>} : vector<32x24xbf16>, vector<24x542xbf16>, vector<32x542xf32> -> vector<32x542xf32>
    %180 = arith.addf %175, %179 : vector<32x542xf32>
    %c3_166 = arith.constant 3 : index
    %c2_167 = arith.constant 2 : index
    %c0_168 = arith.constant 0 : index
    %c0_169 = arith.constant 0 : index
    %181 = vector.load %arg7[%c3_166, %c2_167, %c0_168, %c0_169] : memref<4x3x32x24xbf16, #tpu.memory_space<vmem>>, vector<1x1x32x24xbf16>
    %182 = vector.shape_cast %181 : vector<1x1x32x24xbf16> to vector<32x24xbf16>
    %c0_170 = arith.constant 0 : index
    %c16_171 = arith.constant 16 : index
    %183 = vector.load %arg12[%c0_170, %c16_171] : memref<24x558xbf16, #tpu.memory_space<vmem>>, vector<24x542xbf16>
    %cst_172 = arith.constant dense<0.000000e+00> : vector<32x542xf32>
    %184 = tpu.matmul %182, %183, %cst_172 {dimension_numbers = #tpu.dot_dimension_numbers<[1], [0], [0], [1], [0, 0, 1, 1], [], []>} : vector<32x24xbf16>, vector<24x542xbf16>, vector<32x542xf32> -> vector<32x542xf32>
    %185 = arith.addf %180, %184 : vector<32x542xf32>
    %186 = vector.extract_strided_slice %185 {offsets = [0, 0], sizes = [16, 542], strides = [1, 1]} : vector<32x542xf32> to vector<16x542xf32>
    %187 = math.tanh %186 : vector<16x542xf32>
    %188 = vector.extract_strided_slice %185 {offsets = [16, 0], sizes = [16, 542], strides = [1, 1]} : vector<32x542xf32> to vector<16x542xf32>
    %189 = arith.negf %188 : vector<16x542xf32>
    %190 = math.exp %189 : vector<16x542xf32>
    %cst_173 = arith.constant 1.000000e+00 : f32
    %191 = vector.broadcast %cst_173 : f32 to vector<16x542xf32>
    %192 = arith.addf %191, %190 : vector<16x542xf32>
    %193 = arith.divf %191, %192 : vector<16x542xf32>
    %194 = arith.mulf %187, %193 : vector<16x542xf32>
    %195 = arith.truncf %194 : vector<16x542xf32> to vector<16x542xbf16>
    %c3_174 = arith.constant 3 : index
    %c0_175 = arith.constant 0 : index
    %c0_176 = arith.constant 0 : index
    %196 = vector.load %arg9[%c3_174, %c0_175, %c0_176] : memref<4x16x16xbf16, #tpu.memory_space<vmem>>, vector<1x16x16xbf16>
    %197 = vector.shape_cast %196 : vector<1x16x16xbf16> to vector<16x16xbf16>
    %cst_177 = arith.constant dense<0.000000e+00> : vector<16x542xf32>
    %198 = tpu.matmul %197, %195, %cst_177 {dimension_numbers = #tpu.dot_dimension_numbers<[1], [0], [0], [1], [0, 0, 1, 1], [], []>} : vector<16x16xbf16>, vector<16x542xbf16>, vector<16x542xf32> -> vector<16x542xf32>
    %c0_178 = arith.constant 0 : index
    %c0_179 = arith.constant 0 : index
    %199 = vector.load %arg14[%c0_178, %c0_179] : memref<16x542xf32, #tpu.memory_space<vmem>>, vector<16x542xf32>
    %200 = arith.addf %199, %198 : vector<16x542xf32>
    %c0_180 = arith.constant 0 : index
    %c0_181 = arith.constant 0 : index
    %201 = vector.load %arg14[%c0_180, %c0_181] : memref<16x542xf32, #tpu.memory_space<vmem>>, vector<16x542xf32>
    tpu.vector_store %arg14[%c0_180, %c0_181], %200 {strides = array<i32>} : memref<16x542xf32, #tpu.memory_space<vmem>>, vector<16x542xf32>,
    %c0_182 = arith.constant 0 : index
    %c0_183 = arith.constant 0 : index
    %202 = vector.load %arg10[%c0_182, %c0_183] : memref<8x16xbf16, #tpu.memory_space<vmem>>, vector<8x16xbf16>
    %c0_184 = arith.constant 0 : index
    %c15 = arith.constant 15 : index
    %203 = vector.load %arg14[%c0_184, %c15] : memref<16x542xf32, #tpu.memory_space<vmem>>, vector<16x512xf32>
    %204 = arith.truncf %203 : vector<16x512xf32> to vector<16x512xbf16>
    %cst_185 = arith.constant dense<0.000000e+00> : vector<8x512xf32>
    %205 = tpu.matmul %202, %204, %cst_185 {dimension_numbers = #tpu.dot_dimension_numbers<[1], [0], [0], [1], [0, 0, 1, 1], [], []>} : vector<8x16xbf16>, vector<16x512xbf16>, vector<8x512xf32> -> vector<8x512xf32>
    %c0_186 = arith.constant 0 : index
    %c0_187 = arith.constant 0 : index
    %c0_188 = arith.constant 0 : index
    %206 = vector.load %arg11[%c0_186, %c0_187, %c0_188] : memref<1x8x512xf32, #tpu.memory_space<vmem>>, vector<1x8x512xf32>
    %207 = vector.shape_cast %206 : vector<1x8x512xf32> to vector<8x512xf32>
    %208 = vector.shape_cast %205 : vector<8x512xf32> to vector<1x8x512xf32>
    tpu.vector_store %arg11[%c0_186, %c0_187, %c0_188], %208 {strides = array<i32>} : memref<1x8x512xf32, #tpu.memory_space<vmem>>, vector<1x8x512xf32>,
    return
  }
  func.func @transform_0(%arg0: i32, %arg1: i32) -> (i32, i32, i32) {
    %c0_i32 = arith.constant 0 : i32
    %c0_i32_0 = arith.constant 0 : i32
    return %arg0, %c0_i32, %arg1 : i32, i32, i32
  }
  func.func @transform_1(%arg0: i32, %arg1: i32) -> (i32, i32, i32) {
    %c1_i32 = arith.constant 1 : i32
    %0 = arith.addi %arg1, %c1_i32 : i32
    %c0_i32 = arith.constant 0 : i32
    %c0_i32_0 = arith.constant 0 : i32
    return %arg0, %c0_i32, %0 : i32, i32, i32
  }
  func.func @transform_2(%arg0: i32, %arg1: i32) -> (i32, i32, i32) {
    %c0_i32 = arith.constant 0 : i32
    %c0_i32_0 = arith.constant 0 : i32
    return %arg0, %c0_i32, %arg1 : i32, i32, i32
  }
  func.func @transform_3(%arg0: i32, %arg1: i32) -> (i32, i32, i32) {
    %c1_i32 = arith.constant 1 : i32
    %0 = arith.addi %arg1, %c1_i32 : i32
    %c0_i32 = arith.constant 0 : i32
    %c0_i32_0 = arith.constant 0 : i32
    return %arg0, %c0_i32, %0 : i32, i32, i32
  }
  func.func @transform_4(%arg0: i32, %arg1: i32) -> (i32, i32) {
    %c0_i32 = arith.constant 0 : i32
    %c0_i32_0 = arith.constant 0 : i32
    %c0_i32_1 = arith.constant 0 : i32
    return %c0_i32, %c0_i32_0 : i32, i32
  }
  func.func @transform_5(%arg0: i32, %arg1: i32) -> (i32, i32, i32, i32) {
    %c0_i32 = arith.constant 0 : i32
    %c0_i32_0 = arith.constant 0 : i32
    %c0_i32_1 = arith.constant 0 : i32
    %c0_i32_2 = arith.constant 0 : i32
    %c0_i32_3 = arith.constant 0 : i32
    return %c0_i32, %c0_i32_0, %c0_i32_1, %c0_i32_2 : i32, i32, i32, i32
  }
  func.func @transform_6(%arg0: i32, %arg1: i32) -> (i32, i32, i32) {
    %c0_i32 = arith.constant 0 : i32
    %c0_i32_0 = arith.constant 0 : i32
    %c0_i32_1 = arith.constant 0 : i32
    %c0_i32_2 = arith.constant 0 : i32
    return %c0_i32, %c0_i32_0, %c0_i32_1 : i32, i32, i32
  }
  func.func @transform_7(%arg0: i32, %arg1: i32) -> (i32, i32, i32) {
    %c0_i32 = arith.constant 0 : i32
    %c0_i32_0 = arith.constant 0 : i32
    %c0_i32_1 = arith.constant 0 : i32
    %c0_i32_2 = arith.constant 0 : i32
    return %c0_i32, %c0_i32_0, %c0_i32_1 : i32, i32, i32
  }
  func.func @transform_8(%arg0: i32, %arg1: i32) -> (i32, i32) {
    %c0_i32 = arith.constant 0 : i32
    %c0_i32_0 = arith.constant 0 : i32
    %c0_i32_1 = arith.constant 0 : i32
    return %c0_i32, %c0_i32_0 : i32, i32
  }
  func.func @transform_9(%arg0: i32, %arg1: i32) -> (i32, i32, i32) {
    %c0_i32 = arith.constant 0 : i32
    %c0_i32_0 = arith.constant 0 : i32
    return %arg0, %c0_i32, %arg1 : i32, i32, i32
  }
}

</mosaic_0001>

<llo_original>
// kernel: tpu_custom_call.1
$region0: #{tpu_custom_call.1}
  #allocation0 [shape = 'u32[]', space=smem, size = 0x4, offset = 0x4, fixed_abs, tag = 'smem constant byte address 0x4 - core index']
  #allocation1 [shape = 'u32[144,128]{1,0:T(1,128)}', space=vmem, size = 0x12000, scoped, tag = 'internal scratch']
  #allocation2 [shape = 'bf16[24,558]{1,0:T(8,128)(2,1)}', space=vmem, size = 0x7800, scoped, tag = 'scratch operand']
  #allocation3 [shape = 'f32[16,542]{1,0:T(8,128)}', space=vmem, size = 0xa000, scoped, tag = 'scratch operand']
  #allocation4 [shape = 'f32[16,542]{1,0:T(8,128)}', space=vmem, size = 0xa000, scoped, tag = 'scratch operand']
  %s0 = inlined_call_operand.vmem [shape: bf16[2,4,1536], index: 0, kind: input, shape index: {}]
  %s1 = inlined_call_operand.vmem [shape: bf16[2,4,1536], index: 1, kind: input, shape index: {}]
  %s2 = inlined_call_operand.vmem [shape: bf16[2,8,1536], index: 2, kind: input, shape index: {}]
  %s3 = inlined_call_operand.vmem [shape: bf16[2,8,1536], index: 3, kind: input, shape index: {}]
  %s4 = inlined_call_operand.vmem [shape: bf16[16,4], index: 4, kind: input, shape index: {}]
  %s5 = inlined_call_operand.vmem [shape: bf16[4,3,32,24], index: 5, kind: input, shape index: {}]
  %s6 = inlined_call_operand.vmem [shape: bf16[4,16,16], index: 6, kind: input, shape index: {}]
  %s7 = inlined_call_operand.vmem [shape: bf16[4,16,16], index: 7, kind: input, shape index: {}]
  %s8 = inlined_call_operand.vmem [shape: bf16[8,16], index: 8, kind: input, shape index: {}]
  %s9 = inlined_call_operand.hbm [shape: f32[2,8,1024], index: 9, kind: output, shape index: {}]
  %s10 = sld [smem:[#allocation0]]
  $region69: #{tpu_custom_call.1} parent=0
    _
  %s12 = ssub.s32 1, %s10
  %s13 = scalar_select 0, %s12, %s10
  $region1: #{tpu_custom_call.1} parent=0
    #allocation5 [shape = 'u8[32768]{0}', space=vmem, size = 0x8000, scoped, tag = 'output window, operand 0']
    #allocation6 [shape = 's32[2]{0}', space=sflag, size = 0x8, scoped, tag = 'scoped memory for tpu_custom_call.1']
    %14 = vsyncpa [#allocation6], 0
    %s15 = scalar_lea.sflag [#allocation6], 1
    %16 = vsyncpa %s15, 0
    loop: start=0, step=1, limit=6
    $region2: #{tpu_custom_call.1} parent=1 // loop_pre_header
      _
    $region3: #{tpu_custom_call.1} parent=1 // loop_header
      %s18 = sphi 0, %s22
      %p19 = scmp.ge.s32.totalorder %s18, 6
      %s25 = sphi 0, %s37
      %s26 = sphi 0, %s33
      %s27 = sphi 0, %s25
      %s28 = sphi 0, %s26
      %s29 = sphi 0, %s27
      %s30 = sphi 0, %s28
      %s42 = sphi 0, %s44
      %s45 = sphi 0, %s42
      %s46 = sphi 0, %s45
      %s62 = sphi 0, %s46
      %s72 = sphi 0, %s74
      %s75 = sphi 0, %s72
      %s76 = sphi 0, %s75
      %s92 = sphi 0, %s76
      %s100 = sphi 0, %s102
      %s103 = sphi 0, %s100
      %s104 = sphi 0, %s103
      %s120 = sphi 0, %s104
      %s130 = sphi 0, %s132
      %s133 = sphi 0, %s130
      %s134 = sphi 0, %s133
      %s150 = sphi 0, %s134
      %s154 = sphi 0, %s154
      %s156 = sphi 0, %s154
      %s157 = sphi 0, %s156
      %s171 = sphi 0, %s157
      %s175 = sphi 0, %s175
      %s177 = sphi 0, %s175
      %s178 = sphi 0, %s177
      %s192 = sphi 0, %s178
      %s196 = sphi 0, %s196
      %s198 = sphi 0, %s196
      %s199 = sphi 0, %s198
      %s213 = sphi 0, %s199
      %s217 = sphi 0, %s217
      %s219 = sphi 0, %s217
      %s220 = sphi 0, %s219
      %s234 = sphi 0, %s220
      %s238 = sphi 0, %s238
      %s240 = sphi 0, %s238
      %s241 = sphi 0, %s240
      %s255 = sphi 0, %s241
      %s263 = sphi 0, %s265
      %s266 = sphi 0, %s263
      %s267 = sphi 0, %s266
      %s283 = sphi 0, %s267
    $region4: #{tpu_custom_call.1} parent=1 // loop_header_branch
      %21 = sbr.rel (%p19) target = $region8
    $region5: #{tpu_custom_call.1} parent=1 // loop_body
      %s23 = ssub.s32 %s18, 1
      %s24 = ssub.s32 %s18, 2
      %s31 = sadd.s32 1, %s26
      %p32 = scmp.ge.s32.totalorder %s31, 2
      %s33 = scalar_select %p32, 0, %s31
      %s34 = sadd.s32 1, %s25
      %s35 = scalar_select %p32, %s34, %s25
      %p36 = scmp.ge.s32.totalorder %s35, 2
      %s37 = scalar_select %p36, 0, %s35
      %s38 = ssub.s32 %s25, %s37
      %s39 = ssub.s32 %s26, %s33
      %s40 = sor.u32 %s38, %s39
      %p41 = scmp.eq.s32.totalorder %s40, 0
      %s43 = sadd.s32 %s42, 1
      %s44 = scalar_select %p41, %s42, %s43
      %p47 = pneg %p41
      %p48 = scmp.eq.s32.totalorder %s18, 3
      %p49 = por %p47, %p48
      %p50 = scmp.ne.s32.totalorder %s42, %s45
      %p51 = scmp.eq.s32.totalorder %s18, 0
      %p52 = por %p50, %p51
      %p53 = scmp.ne.s32.totalorder %s42, %s45
      %p54 = scmp.eq.s32.totalorder %s23, 3
      %p55 = por %p53, %p54
      %p56 = scmp.ne.s32.totalorder %s45, %s46
      %p57 = scmp.eq.s32.totalorder %s23, 0
      %p58 = por %p56, %p57
      %p59 = scmp.ne.s32.totalorder %s45, %s46
      %p60 = scmp.eq.s32.totalorder %s24, 3
      %p61 = por %p59, %p60
      %p63 = scmp.ne.s32.totalorder %s46, %s62
      %p64 = scmp.eq.s32.totalorder %s24, 0
      %p65 = por %p63, %p64
      %s66 = sadd.s32 %s26, 1
      %s67 = sadd.s32 %s33, 1
      %s68 = ssub.s32 %s25, %s37
      %s69 = ssub.s32 %s66, %s67
      %s70 = sor.u32 %s68, %s69
      %p71 = scmp.eq.s32.totalorder %s70, 0
      %s73 = sadd.s32 %s72, 1
      %s74 = scalar_select %p71, %s72, %s73
      %p77 = pneg %p71
      %p78 = scmp.eq.s32.totalorder %s18, 3
      %p79 = por %p77, %p78
      %p80 = scmp.ne.s32.totalorder %s72, %s75
      %p81 = scmp.eq.s32.totalorder %s18, 0
      %p82 = por %p80, %p81
      %p83 = scmp.ne.s32.totalorder %s72, %s75
      %p84 = scmp.eq.s32.totalorder %s23, 3
      %p85 = por %p83, %p84
      %p86 = scmp.ne.s32.totalorder %s75, %s76
      %p87 = scmp.eq.s32.totalorder %s23, 0
      %p88 = por %p86, %p87
      %p89 = scmp.ne.s32.totalorder %s75, %s76
      %p90 = scmp.eq.s32.totalorder %s24, 3
      %p91 = por %p89, %p90
      %p93 = scmp.ne.s32.totalorder %s76, %s92
      %p94 = scmp.eq.s32.totalorder %s24, 0
      %p95 = por %p93, %p94
      %s96 = ssub.s32 %s25, %s37
      %s97 = ssub.s32 %s26, %s33
      %s98 = sor.u32 %s96, %s97
      %p99 = scmp.eq.s32.totalorder %s98, 0
      %s101 = sadd.s32 %s100, 1
      %s102 = scalar_select %p99, %s100, %s101
      %p105 = pneg %p99
      %p106 = scmp.eq.s32.totalorder %s18, 3
      %p107 = por %p105, %p106
      %p108 = scmp.ne.s32.totalorder %s100, %s103
      %p109 = scmp.eq.s32.totalorder %s18, 0
      %p110 = por %p108, %p109
      %p111 = scmp.ne.s32.totalorder %s100, %s103
      %p112 = scmp.eq.s32.totalorder %s23, 3
      %p113 = por %p111, %p112
      %p114 = scmp.ne.s32.totalorder %s103, %s104
      %p115 = scmp.eq.s32.totalorder %s23, 0
      %p116 = por %p114, %p115
      %p117 = scmp.ne.s32.totalorder %s103, %s104
      %p118 = scmp.eq.s32.totalorder %s24, 3
      %p119 = por %p117, %p118
      %p121 = scmp.ne.s32.totalorder %s104, %s120
      %p122 = scmp.eq.s32.totalorder %s24, 0
      %p123 = por %p121, %p122
      %s124 = sadd.s32 %s26, 1
      %s125 = sadd.s32 %s33, 1
      %s126 = ssub.s32 %s25, %s37
      %s127 = ssub.s32 %s124, %s125
      %s128 = sor.u32 %s126, %s127
      %p129 = scmp.eq.s32.totalorder %s128, 0
      %s131 = sadd.s32 %s130, 1
      %s132 = scalar_select %p129, %s130, %s131
      %p135 = pneg %p129
      %p136 = scmp.eq.s32.totalorder %s18, 3
      %p137 = por %p135, %p136
      %p138 = scmp.ne.s32.totalorder %s130, %s133
      %p139 = scmp.eq.s32.totalorder %s18, 0
      %p140 = por %p138, %p139
      %p141 = scmp.ne.s32.totalorder %s130, %s133
      %p142 = scmp.eq.s32.totalorder %s23, 3
      %p143 = por %p141, %p142
      %p144 = scmp.ne.s32.totalorder %s133, %s134
      %p145 = scmp.eq.s32.totalorder %s23, 0
      %p146 = por %p144, %p145
      %p147 = scmp.ne.s32.totalorder %s133, %s134
      %p148 = scmp.eq.s32.totalorder %s24, 3
      %p149 = por %p147, %p148
      %p151 = scmp.ne.s32.totalorder %s134, %s150
      %p152 = scmp.eq.s32.totalorder %s24, 0
      %p153 = por %p151, %p152
      %s155 = sadd.s32 %s154, 1
      %p158 = scmp.eq.s32.totalorder %s18, 3
      %p159 = scmp.ne.s32.totalorder %s154, %s156
      %p160 = scmp.eq.s32.totalorder %s18, 0
      %p161 = por %p159, %p160
      %p162 = scmp.ne.s32.totalorder %s154, %s156
      %p163 = scmp.eq.s32.totalorder %s23, 3
      %p164 = por %p162, %p163
      %p165 = scmp.ne.s32.totalorder %s156, %s157
      %p166 = scmp.eq.s32.totalorder %s23, 0
      %p167 = por %p165, %p166
      %p168 = scmp.ne.s32.totalorder %s156, %s157
      %p169 = scmp.eq.s32.totalorder %s24, 3
      %p170 = por %p168, %p169
      %p172 = scmp.ne.s32.totalorder %s157, %s171
      %p173 = scmp.eq.s32.totalorder %s24, 0
      %p174 = por %p172, %p173
      %s176 = sadd.s32 %s175, 1
      %p179 = scmp.eq.s32.totalorder %s18, 3
      %p180 = scmp.ne.s32.totalorder %s175, %s177
      %p181 = scmp.eq.s32.totalorder %s18, 0
      %p182 = por %p180, %p181
      %p183 = scmp.ne.s32.totalorder %s175, %s177
      %p184 = scmp.eq.s32.totalorder %s23, 3
      %p185 = por %p183, %p184
      %p186 = scmp.ne.s32.totalorder %s177, %s178
      %p187 = scmp.eq.s32.totalorder %s23, 0
      %p188 = por %p186, %p187
      %p189 = scmp.ne.s32.totalorder %s177, %s178
      %p190 = scmp.eq.s32.totalorder %s24, 3
      %p191 = por %p189, %p190
      %p193 = scmp.ne.s32.totalorder %s178, %s192
      %p194 = scmp.eq.s32.totalorder %s24, 0
      %p195 = por %p193, %p194
      %s197 = sadd.s32 %s196, 1
      %p200 = scmp.eq.s32.totalorder %s18, 3
      %p201 = scmp.ne.s32.totalorder %s196, %s198
      %p202 = scmp.eq.s32.totalorder %s18, 0
      %p203 = por %p201, %p202
      %p204 = scmp.ne.s32.totalorder %s196, %s198
      %p205 = scmp.eq.s32.totalorder %s23, 3
      %p206 = por %p204, %p205
      %p207 = scmp.ne.s32.totalorder %s198, %s199
      %p208 = scmp.eq.s32.totalorder %s23, 0
      %p209 = por %p207, %p208
      %p210 = scmp.ne.s32.totalorder %s198, %s199
      %p211 = scmp.eq.s32.totalorder %s24, 3
      %p212 = por %p210, %p211
      %p214 = scmp.ne.s32.totalorder %s199, %s213
      %p215 = scmp.eq.s32.totalorder %s24, 0
      %p216 = por %p214, %p215
      %s218 = sadd.s32 %s217, 1
      %p221 = scmp.eq.s32.totalorder %s18, 3
      %p222 = scmp.ne.s32.totalorder %s217, %s219
      %p223 = scmp.eq.s32.totalorder %s18, 0
      %p224 = por %p222, %p223
      %p225 = scmp.ne.s32.totalorder %s217, %s219
      %p226 = scmp.eq.s32.totalorder %s23, 3
      %p227 = por %p225, %p226
      %p228 = scmp.ne.s32.totalorder %s219, %s220
      %p229 = scmp.eq.s32.totalorder %s23, 0
      %p230 = por %p228, %p229
      %p231 = scmp.ne.s32.totalorder %s219, %s220
      %p232 = scmp.eq.s32.totalorder %s24, 3
      %p233 = por %p231, %p232
      %p235 = scmp.ne.s32.totalorder %s220, %s234
      %p236 = scmp.eq.s32.totalorder %s24, 0
      %p237 = por %p235, %p236
      %s239 = sadd.s32 %s238, 1
      %p242 = scmp.eq.s32.totalorder %s18, 3
      %p243 = scmp.ne.s32.totalorder %s238, %s240
      %p244 = scmp.eq.s32.totalorder %s18, 0
      %p245 = por %p243, %p244
      %p246 = scmp.ne.s32.totalorder %s238, %s240
      %p247 = scmp.eq.s32.totalorder %s23, 3
      %p248 = por %p246, %p247
      %p249 = scmp.ne.s32.totalorder %s240, %s241
      %p250 = scmp.eq.s32.totalorder %s23, 0
      %p251 = por %p249, %p250
      %p252 = scmp.ne.s32.totalorder %s240, %s241
      %p253 = scmp.eq.s32.totalorder %s24, 3
      %p254 = por %p252, %p253
      %p256 = scmp.ne.s32.totalorder %s241, %s255
      %p257 = scmp.eq.s32.totalorder %s24, 0
      %p258 = por %p256, %p257
      %s259 = ssub.s32 %s25, %s37
      %s260 = ssub.s32 %s26, %s33
      %s261 = sor.u32 %s259, %s260
      %p262 = scmp.eq.s32.totalorder %s261, 0
      %s264 = sadd.s32 %s263, 1
      %s265 = scalar_select %p262, %s263, %s264
      %p268 = pneg %p262
      %p269 = scmp.eq.s32.totalorder %s18, 3
      %p270 = por %p268, %p269
      %p271 = scmp.ne.s32.totalorder %s263, %s266
      %p272 = scmp.eq.s32.totalorder %s18, 0
      %p273 = por %p271, %p272
      %p274 = scmp.ne.s32.totalorder %s263, %s266
      %p275 = scmp.eq.s32.totalorder %s23, 3
      %p276 = por %p274, %p275
      %p277 = scmp.ne.s32.totalorder %s266, %s267
      %p278 = scmp.eq.s32.totalorder %s23, 0
      %p279 = por %p277, %p278
      %p280 = scmp.ne.s32.totalorder %s266, %s267
      %p281 = scmp.eq.s32.totalorder %s24, 3
      %p282 = por %p280, %p281
      %p284 = scmp.ne.s32.totalorder %s267, %s283
      %p285 = scmp.eq.s32.totalorder %s24, 0
      %p286 = por %p284, %p285
      %p287 = scmp.le.s32.totalorder 1, %s18
      %p288 = scmp.lt.s32.totalorder %s18, 5
      %p289 = pnand %p287, %p288
      %p290 = pneg %p289
      // Predicated region
      $region9: #{tpu_custom_call.1} parent=5 // pred_check
        _
      $region10: #{tpu_custom_call.1} parent=5 // pred_check_branch
        %292 = sbr.rel (%p289) target = $region12
      $region11: #{tpu_custom_call.1} parent=5 // pred_region
        %s293 = ssub.s32 %s18, 1
        // Predicated region
        $region13: #{tpu_custom_call.1} parent=11 // pred_check
          %p294 = pneg %p167
        $region14: #{tpu_custom_call.1} parent=11 // pred_check_branch
          %296 = sbr.rel (%p294) target = $region16
        $region15: #{tpu_custom_call.1} parent=11 // pred_region
          _
        $region16: #{tpu_custom_call.1} parent=11 // pred_fallthru
          _
        // Predicated region
        $region17: #{tpu_custom_call.1} parent=11 // pred_check
          %p297 = pneg %p188
        $region18: #{tpu_custom_call.1} parent=11 // pred_check_branch
          %299 = sbr.rel (%p297) target = $region20
        $region19: #{tpu_custom_call.1} parent=11 // pred_region
          _
        $region20: #{tpu_custom_call.1} parent=11 // pred_fallthru
          _
        // Predicated region
        $region21: #{tpu_custom_call.1} parent=11 // pred_check
          %p300 = pneg %p209
        $region22: #{tpu_custom_call.1} parent=11 // pred_check_branch
          %302 = sbr.rel (%p300) target = $region24
        $region23: #{tpu_custom_call.1} parent=11 // pred_region
          _
        $region24: #{tpu_custom_call.1} parent=11 // pred_fallthru
          _
        // Predicated region
        $region25: #{tpu_custom_call.1} parent=11 // pred_check
          %p303 = pneg %p230
        $region26: #{tpu_custom_call.1} parent=11 // pred_check_branch
          %305 = sbr.rel (%p303) target = $region28
        $region27: #{tpu_custom_call.1} parent=11 // pred_region
          _
        $region28: #{tpu_custom_call.1} parent=11 // pred_fallthru
          _
        // Predicated region
        $region29: #{tpu_custom_call.1} parent=11 // pred_check
          %p306 = pneg %p251
        $region30: #{tpu_custom_call.1} parent=11 // pred_check_branch
          %308 = sbr.rel (%p306) target = $region32
        $region31: #{tpu_custom_call.1} parent=11 // pred_region
          _
        $region32: #{tpu_custom_call.1} parent=11 // pred_fallthru
          _
      $region12: #{tpu_custom_call.1} parent=5 // pred_fallthru
        _
      %p309 = scmp.lt.s32.totalorder %s18, 4
      // Predicated region
      $region33: #{tpu_custom_call.1} parent=5 // pred_check
        %p310 = pneg %p309
      $region34: #{tpu_custom_call.1} parent=5 // pred_check_branch
        %312 = sbr.rel (%p310) target = $region36
      $region35: #{tpu_custom_call.1} parent=5 // pred_region
        // Predicated region
        $region37: #{tpu_custom_call.1} parent=35 // pred_check
          %p313 = pneg %p52
        $region38: #{tpu_custom_call.1} parent=35 // pred_check_branch
          %315 = sbr.rel (%p313) target = $region40
        $region39: #{tpu_custom_call.1} parent=35 // pred_region
          %s316 = smul.u32 4, %s26
          %p317 = scmp.lt.s32.totalorder %s25, 1
          %s318 = scalar_select %p317, %s25, 1
          %p319 = scmp.lt.s32.totalorder %s316, 11
          %s320 = scalar_select %p319, %s316, 11
          %s321 = smul.addr %s318, 12
          %s322 = sadd.s32 %s320, %s321
          %s323 = smul.addr %s322, 2
          %s324 = scalar_lea.vmem %s0, %s323
          %s325 = smul.u32 4, %s26
        $region40: #{tpu_custom_call.1} parent=35 // pred_fallthru
          _
        // Predicated region
        $region41: #{tpu_custom_call.1} parent=35 // pred_check
          %p326 = pneg %p82
        $region42: #{tpu_custom_call.1} parent=35 // pred_check_branch
          %328 = sbr.rel (%p326) target = $region44
        $region43: #{tpu_custom_call.1} parent=35 // pred_region
          %s329 = sadd.s32 %s26, 1
          %s330 = smul.u32 4, %s329
          %p331 = scmp.lt.s32.totalorder %s25, 1
          %s332 = scalar_select %p331, %s25, 1
          %p333 = scmp.lt.s32.totalorder %s330, 11
          %s334 = scalar_select %p333, %s330, 11
          %s335 = smul.addr %s332, 12
          %s336 = sadd.s32 %s334, %s335
          %s337 = smul.addr %s336, 2
          %s338 = scalar_lea.vmem %s1, %s337
          %s339 = sadd.s32 %s26, 1
          %s340 = smul.u32 4, %s339
        $region44: #{tpu_custom_call.1} parent=35 // pred_fallthru
          _
        // Predicated region
        $region45: #{tpu_custom_call.1} parent=35 // pred_check
          %p341 = pneg %p110
        $region46: #{tpu_custom_call.1} parent=35 // pred_check_branch
          %343 = sbr.rel (%p341) target = $region48
        $region47: #{tpu_custom_call.1} parent=35 // pred_region
          %s344 = smul.u32 4, %s26
          %p345 = scmp.lt.s32.totalorder %s25, 1
          %s346 = scalar_select %p345, %s25, 1
          %p347 = scmp.lt.s32.totalorder %s344, 11
          %s348 = scalar_select %p347, %s344, 11
          %s349 = smul.addr %s346, 12
          %s350 = sadd.s32 %s348, %s349
          %s351 = smul.addr %s350, 4
          %s352 = scalar_lea.vmem %s2, %s351
          %s353 = smul.u32 4, %s26
        $region48: #{tpu_custom_call.1} parent=35 // pred_fallthru
          _
        // Predicated region
        $region49: #{tpu_custom_call.1} parent=35 // pred_check
          %p354 = pneg %p140
        $region50: #{tpu_custom_call.1} parent=35 // pred_check_branch
          %356 = sbr.rel (%p354) target = $region52
        $region51: #{tpu_custom_call.1} parent=35 // pred_region
          %s357 = sadd.s32 %s26, 1
          %s358 = smul.u32 4, %s357
          %p359 = scmp.lt.s32.totalorder %s25, 1
          %s360 = scalar_select %p359, %s25, 1
          %p361 = scmp.lt.s32.totalorder %s358, 11
          %s362 = scalar_select %p361, %s358, 11
          %s363 = smul.addr %s360, 12
          %s364 = sadd.s32 %s362, %s363
          %s365 = smul.addr %s364, 4
          %s366 = scalar_lea.vmem %s3, %s365
          %s367 = sadd.s32 %s26, 1
          %s368 = smul.u32 4, %s367
        $region52: #{tpu_custom_call.1} parent=35 // pred_fallthru
          _
      $region36: #{tpu_custom_call.1} parent=5 // pred_fallthru
        _
      %p369 = scmp.le.s32.totalorder 1, %s18
      %p370 = scmp.lt.s32.totalorder %s18, 5
      %p371 = pnand %p369, %p370
      %p372 = pneg %p371
      // Predicated region
      $region53: #{tpu_custom_call.1} parent=5 // pred_check
        _
      $region54: #{tpu_custom_call.1} parent=5 // pred_check_branch
        %374 = sbr.rel (%p371) target = $region56
      $region55: #{tpu_custom_call.1} parent=5 // pred_region
        %s375 = ssub.s32 %s18, 1
        %s376 = smul.u32 4, %s28
        %p377 = scmp.lt.s32.totalorder %s27, 1
        %s378 = scalar_select %p377, %s27, 1
        %p379 = scmp.lt.s32.totalorder %s376, 11
        %s380 = scalar_select %p379, %s376, 11
        %s381 = smul.addr %s378, 12
        %s382 = sadd.s32 %s380, %s381
        %s383 = smul.addr %s382, 2
        %s384 = scalar_lea.vmem %s0, %s383
        %p385 = pneg %p58
        %p386 = pneg %p55
        %s387 = sadd.s32 %s28, 1
        %s388 = smul.u32 4, %s387
        %p389 = scmp.lt.s32.totalorder %s27, 1
        %s390 = scalar_select %p389, %s27, 1
        %p391 = scmp.lt.s32.totalorder %s388, 11
        %s392 = scalar_select %p391, %s388, 11
        %s393 = smul.addr %s390, 12
        %s394 = sadd.s32 %s392, %s393
        %s395 = smul.addr %s394, 2
        %s396 = scalar_lea.vmem %s1, %s395
        %p397 = pneg %p88
        %p398 = pneg %p85
        %s399 = smul.u32 4, %s28
        %p400 = scmp.lt.s32.totalorder %s27, 1
        %s401 = scalar_select %p400, %s27, 1
        %p402 = scmp.lt.s32.totalorder %s399, 11
        %s403 = scalar_select %p402, %s399, 11
        %s404 = smul.addr %s401, 12
        %s405 = sadd.s32 %s403, %s404
        %s406 = smul.addr %s405, 4
        %s407 = scalar_lea.vmem %s2, %s406
        %p408 = pneg %p116
        %p409 = pneg %p113
        %s410 = sadd.s32 %s28, 1
        %s411 = smul.u32 4, %s410
        %p412 = scmp.lt.s32.totalorder %s27, 1
        %s413 = scalar_select %p412, %s27, 1
        %p414 = scmp.lt.s32.totalorder %s411, 11
        %s415 = scalar_select %p414, %s411, 11
        %s416 = smul.addr %s413, 12
        %s417 = sadd.s32 %s415, %s416
        %s418 = smul.addr %s417, 4
        %s419 = scalar_lea.vmem %s3, %s418
        %p420 = pneg %p146
        %p421 = pneg %p143
        %p422 = pneg %p167
        %p423 = pneg %p164
        %p424 = pneg %p188
        %p425 = pneg %p185
        %p426 = pneg %p209
        %p427 = pneg %p206
        %p428 = pneg %p230
        %p429 = pneg %p227
        %p430 = pneg %p251
        %p431 = pneg %p248
        %p432 = pneg %p279
        %p433 = pneg %p276
        %s434 = sand.u32 %s266, 1
        %s435 = scalar_lea.sflag [#allocation6], %s434
        %s436 = sand.u32 %s266, 1
        %s437 = smul.addr %s436, 32
        %s438 = scalar_lea.vmem [#allocation5], %s437
        %s439 = smul.u32 4, %s28
        %p440 = scmp.lt.s32.totalorder %s27, 1
        %s441 = scalar_select %p440, %s27, 1
        %p442 = scmp.lt.s32.totalorder %s439, 11
        %s443 = scalar_select %p442, %s439, 11
        %s444 = smul.addr %s441, 12
        %s445 = sadd.s32 %s443, %s444
        %s446 = smul.addr %s445, 2
        %s447 = scalar_lea.vmem %s0, %s446
        %s448 = smul.u32 4, %s28
        %s449 = sadd.s32 %s28, 1
        %s450 = smul.u32 4, %s449
        %p451 = scmp.lt.s32.totalorder %s27, 1
        %s452 = scalar_select %p451, %s27, 1
        %p453 = scmp.lt.s32.totalorder %s450, 11
        %s454 = scalar_select %p453, %s450, 11
        %s455 = smul.addr %s452, 12
        %s456 = sadd.s32 %s454, %s455
        %s457 = smul.addr %s456, 2
        %s458 = scalar_lea.vmem %s1, %s457
        %s459 = sadd.s32 %s28, 1
        %s460 = smul.u32 4, %s459
        %s461 = smul.u32 4, %s28
        %p462 = scmp.lt.s32.totalorder %s27, 1
        %s463 = scalar_select %p462, %s27, 1
        %p464 = scmp.lt.s32.totalorder %s461, 11
        %s465 = scalar_select %p464, %s461, 11
        %s466 = smul.addr %s463, 12
        %s467 = sadd.s32 %s465, %s466
        %s468 = smul.addr %s467, 4
        %s469 = scalar_lea.vmem %s2, %s468
        %s470 = smul.u32 4, %s28
        %s471 = sadd.s32 %s28, 1
        %s472 = smul.u32 4, %s471
        %p473 = scmp.lt.s32.totalorder %s27, 1
        %s474 = scalar_select %p473, %s27, 1
        %p475 = scmp.lt.s32.totalorder %s472, 11
        %s476 = scalar_select %p475, %s472, 11
        %s477 = smul.addr %s474, 12
        %s478 = sadd.s32 %s476, %s477
        %s479 = smul.addr %s478, 4
        %s480 = scalar_lea.vmem %s3, %s479
        %s481 = sadd.s32 %s28, 1
        %s482 = smul.u32 4, %s481
        %s483 = smul.u32 4, %s28
        %v485 = vld [vmem:[%s4] sm:$0xf]
        %v486 = vld [vmem:[%s4 + $0x4] sm:$0xf]
        %v487 = vld [vmem:[%s447] sm:$0xff]
        %v490 = vunpack.c.l.b16 %v485
        %v491 = vunpack.c.l.b16 %v486
        %v492 = vpack.c.b16 %v491, %v490
        %v494 = vcombine.high %v487, %v487
        %v496 = vunpack.c.l.s4 1983009808
        %v497 = vunpack.c.0.s8 %v496
        %v498 = vlaneseq
        %v499 = vshrl.u32 %v498, 7
        %v500 = vsub.s32 %v497, %v499
        %v501 = vrot.slane %v487, %v500
        %v503 = vunpack.c.l.s4 1983009808
        %v504 = vunpack.c.0.s8 %v503
        %v505 = vlaneseq
        %v506 = vshrl.u32 %v505, 7
        %v507 = vsub.s32 %v504, %v506
        %v508 = vrot.slane %v494, %v507
        %v509 = vcombine.high %v501, %v501
        %v510 = vcombine.high %v508, %v508
        %vm511 = vcmask 31744
        %v513 = vsel %vm511, %v492, 0
        %vm515 = vcmask 1041408
        %v517 = vsel %vm515, %v501, 0
        %v520 = vsel %vm515, %v509, 0
        %v523 = vsel %vm515, %v508, 0
        %v526 = vsel %vm515, %v510, 0
        %528 = vmatprep.subr.bf16.mxu0 %v520
        %529 = vmatpush1.bf16.msra.mxu0 %v517
        %530 = vmatprep.subr.bf16.mxu0 0
        %531 = vmatpush1.bf16.msra.mxu0 0
        %532 = vmatprep.subr.bf16.mxu0 0
        %533 = vmatpush1.bf16.msra.mxu0 0
        %534 = vmatprep.subr.bf16.mxu0 0
        %535 = vmatpush1.bf16.msra.mxu0 0
        %536 = vmatprep.subr.bf16.mxu0 0
        %537 = vmatpush1.bf16.msra.mxu0 0
        %538 = vmatprep.subr.bf16.mxu0 0
        %539 = vmatpush1.bf16.msra.mxu0 0
        %540 = vmatprep.subr.bf16.mxu0 0
        %541 = vmatpush1.bf16.msra.mxu0 0
        %542 = vmatprep.subr.bf16.mxu0 0
        %543 = vmatpush1.bf16.msra.mxu0 0
        %544 = vmatprep.subr.bf16.mxu0 0
        %545 = vmatpush1.bf16.msra.mxu0 0
        %546 = vmatprep.subr.bf16.mxu0 0
        %547 = vmatpush1.bf16.msra.mxu0 0
        %548 = vmatprep.subr.bf16.mxu0 0
        %549 = vmatpush1.bf16.msra.mxu0 0
        %550 = vmatprep.subr.bf16.mxu0 0
        %551 = vmatpush1.bf16.msra.mxu0 0
        %552 = vmatprep.subr.bf16.mxu0 0
        %553 = vmatpush1.bf16.msra.mxu0 0
        %554 = vmatprep.subr.bf16.mxu0 0
        %555 = vmatpush1.bf16.msra.mxu0 0
        %556 = vmatprep.subr.bf16.mxu0 0
        %557 = vmatpush1.bf16.msra.mxu0 0
        %558 = vmatprep.subr.bf16.mxu0 0
        %559 = vmatpush1.bf16.msra.mxu0 0
        %560 = vmatprep.mubr.bf16.mxu0 0
        %561 = vmatmul.mubr.bf16.gmra.mrb[0].mxu0 %v513
        %v562 = vpop.f32.mrb[0].mxu0
        %v563 = vadd.f32 0.0, %v562
        %v564 = vpop.f32.mrb[0].mxu0
        %v565 = vadd.f32 0.0, %v564
        %v566 = vpop.f32.mrb[0].mxu0
        %v567 = vadd.f32 0.0, %v566
        %v568 = vpop.f32.mrb[0].mxu0
        %v569 = vadd.f32 0.0, %v568
        %570 = vdwg.mxu0
        %571 = vmatprep.subr.bf16.mxu0 %v526
        %572 = vmatpush1.bf16.msra.mxu0 %v523
        %573 = vmatprep.subr.bf16.mxu0 0
        %574 = vmatpush1.bf16.msra.mxu0 0
        %575 = vmatprep.subr.bf16.mxu0 0
        %576 = vmatpush1.bf16.msra.mxu0 0
        %577 = vmatprep.subr.bf16.mxu0 0
        %578 = vmatpush1.bf16.msra.mxu0 0
        %579 = vmatprep.subr.bf16.mxu0 0
        %580 = vmatpush1.bf16.msra.mxu0 0
        %581 = vmatprep.subr.bf16.mxu0 0
        %582 = vmatpush1.bf16.msra.mxu0 0
        %583 = vmatprep.subr.bf16.mxu0 0
        %584 = vmatpush1.bf16.msra.mxu0 0
        %585 = vmatprep.subr.bf16.mxu0 0
        %586 = vmatpush1.bf16.msra.mxu0 0
        %587 = vmatprep.subr.bf16.mxu0 0
        %588 = vmatpush1.bf16.msra.mxu0 0
        %589 = vmatprep.subr.bf16.mxu0 0
        %590 = vmatpush1.bf16.msra.mxu0 0
        %591 = vmatprep.subr.bf16.mxu0 0
        %592 = vmatpush1.bf16.msra.mxu0 0
        %593 = vmatprep.subr.bf16.mxu0 0
        %594 = vmatpush1.bf16.msra.mxu0 0
        %595 = vmatprep.subr.bf16.mxu0 0
        %596 = vmatpush1.bf16.msra.mxu0 0
        %597 = vmatprep.subr.bf16.mxu0 0
        %598 = vmatpush1.bf16.msra.mxu0 0
        %599 = vmatprep.subr.bf16.mxu0 0
        %600 = vmatpush1.bf16.msra.mxu0 0
        %601 = vmatprep.subr.bf16.mxu0 0
        %602 = vmatpush1.bf16.msra.mxu0 0
        %603 = vmatprep.mubr.bf16.mxu0 0
        %604 = vmatmul.mubr.bf16.gmra.mrb[0].mxu0 %v513
        %v605 = vpop.f32.mrb[0].mxu0
        %v606 = vadd.f32 0.0, %v605
        %v607 = vpop.f32.mrb[0].mxu0
        %v608 = vadd.f32 0.0, %v607
        %v609 = vpop.f32.mrb[0].mxu0
        %v610 = vadd.f32 0.0, %v609
        %v611 = vpop.f32.mrb[0].mxu0
        %v612 = vadd.f32 0.0, %v611
        %613 = vdwg.mxu0
        %614 = vst [vmem:[#allocation3] sm:$0xff] %v563
        %615 = vst [vmem:[#allocation3 + $0x8] sm:$0xff] %v565
        %616 = vst [vmem:[#allocation3 + $0x10] sm:$0xff] %v606
        %617 = vst [vmem:[#allocation3 + $0x18] sm:$0xff] %v608
        %618 = vst [vmem:[#allocation3 + $0x28] sm:$0xff] %v567
        %619 = vst [vmem:[#allocation3 + $0x30] sm:$0xff] %v569
        %620 = vst [vmem:[#allocation3 + $0x38] sm:$0xff] %v610
        %621 = vst [vmem:[#allocation3 + $0x40] sm:$0xff] %v612
        %v622 = vld [vmem:[%s4] sm:$0xf]
        %v623 = vld [vmem:[%s4 + $0x4] sm:$0xf]
        %v624 = vld [vmem:[%s458] sm:$0x3]
        %v627 = vunpack.c.l.b16 %v622
        %v628 = vunpack.c.l.b16 %v623
        %v629 = vpack.c.b16 %v628, %v627
        %v631 = vsel %vm511, %v629, 0
        %v634 = vsel %vm515, %v624, 0
        %636 = vmatprep.subr.bf16.mxu0 0
        %637 = vmatpush1.bf16.msra.mxu0 %v634
        %638 = vmatprep.subr.bf16.mxu0 0
        %639 = vmatpush1.bf16.msra.mxu0 0
        %640 = vmatprep.subr.bf16.mxu0 0
        %641 = vmatpush1.bf16.msra.mxu0 0
        %642 = vmatprep.subr.bf16.mxu0 0
        %643 = vmatpush1.bf16.msra.mxu0 0
        %644 = vmatprep.subr.bf16.mxu0 0
        %645 = vmatpush1.bf16.msra.mxu0 0
        %646 = vmatprep.subr.bf16.mxu0 0
        %647 = vmatpush1.bf16.msra.mxu0 0
        %648 = vmatprep.subr.bf16.mxu0 0
        %649 = vmatpush1.bf16.msra.mxu0 0
        %650 = vmatprep.subr.bf16.mxu0 0
        %651 = vmatpush1.bf16.msra.mxu0 0
        %652 = vmatprep.subr.bf16.mxu0 0
        %653 = vmatpush1.bf16.msra.mxu0 0
        %654 = vmatprep.subr.bf16.mxu0 0
        %655 = vmatpush1.bf16.msra.mxu0 0
        %656 = vmatprep.subr.bf16.mxu0 0
        %657 = vmatpush1.bf16.msra.mxu0 0
        %658 = vmatprep.subr.bf16.mxu0 0
        %659 = vmatpush1.bf16.msra.mxu0 0
        %660 = vmatprep.subr.bf16.mxu0 0
        %661 = vmatpush1.bf16.msra.mxu0 0
        %662 = vmatprep.subr.bf16.mxu0 0
        %663 = vmatpush1.bf16.msra.mxu0 0
        %664 = vmatprep.subr.bf16.mxu0 0
        %665 = vmatpush1.bf16.msra.mxu0 0
        %666 = vmatprep.subr.bf16.mxu0 0
        %667 = vmatpush1.bf16.msra.mxu0 0
        %668 = vmatprep.mubr.bf16.mxu0 0
        %669 = vmatmul.mubr.bf16.gmra.mrb[0].mxu0 %v631
        %v670 = vpop.f32.mrb[0].mxu0
        %v671 = vadd.f32 0.0, %v670
        %v672 = vpop.f32.mrb[0].mxu0
        %v673 = vpop.f32.mrb[0].mxu0
        %v674 = vadd.f32 0.0, %v673
        %v675 = vpop.f32.mrb[0].mxu0
        %676 = vdwg.mxu0
        %vm677 = vcmask 244736
        %678 = vst.msk [vmem:[#allocation3 + $0x20] sm:$0xff] %vm677, %v671
        %679 = vst.msk [vmem:[#allocation3 + $0x48] sm:$0xff] %vm677, %v674
        %v680 = vld [vmem:[%s469] sm:$0xff]
        %v681 = vld [vmem:[%s469 + $0x8] sm:$0xff]
        %684 = vrot.lane.b32.xlu0 %v680, 8
        %v685 = vpop.permute.xlu0 %684
        %686 = vrot.lane.b32.xlu0 %v681, 8
        %v687 = vpop.permute.xlu0 %686
        %v688 = vrot.slane %v685, 4
        %v689 = vrot.slane %v687, 4
        %vm690 = vcmask 64512
        %v691 = vsel %vm690, %v688, %v685
        %vm692 = vcmask 1043456
        %v693 = vsel %vm692, %v688, %v689
        %v694 = vsel %vm690, %v693, %v687
        %vm698 = vcmask 1043520
        %vm699 = vcmask 1047556
        %vm700 = vmor %vm699, %vm698
        %701 = vst.msk [vmem:[#allocation2 + $0x28] sm:$0xff] %vm700, %v691
        %702 = vst [vmem:[#allocation2 + $0x30] sm:$0xff] %v694
        %vm703 = vcmask 60416
        %704 = vst.msk [vmem:[#allocation2 + $0x38] sm:$0xf] %vm703, %v689
        %v705 = vld [vmem:[%s480] sm:$0xf]
        %707 = vrot.lane.b32.xlu0 %v705, 8
        %v708 = vpop.permute.xlu0 %707
        %vm710 = vcmask 306240
        %711 = vst.msk [vmem:[#allocation2 + $0x38] sm:$0xf] %vm710, %v708
        %712 = vst.msk [vmem:[#allocation2] sm:$0xf] %vm703, 0
        %713 = vst.msk [vmem:[#allocation2 + $0x14] sm:$0xf] %vm703, 0
        %714 = vst.msk [vmem:[#allocation2 + $0x28] sm:$0xf] %vm703, 0
        %vm715 = vcmask 372016
        %716 = vst.msk [vmem:[#allocation2 + $0x10] sm:$0xf] %vm715, 0
        %717 = vst.msk [vmem:[#allocation2 + $0x24] sm:$0xf] %vm715, 0
        %718 = vst.msk [vmem:[#allocation2 + $0x38] sm:$0xf] %vm715, 0
        %s719 = smul.u32 %s28, 512
        %s720 = ssub.s32 %s719, 15
        %v721 = vlaneseq
        %v722 = vand.u32 %v721, 127
        %v723 = vadd.s32 %v722, 128
        %v724 = vadd.s32 %v722, 256
        %v725 = vadd.s32 %v722, 384
        %v726 = vadd.s32 %v722, 512
        %v727 = vstv %s720
        %v728 = vadd.s32 %v727, %v722
        %v729 = vadd.s32 %v727, %v723
        %v730 = vadd.s32 %v727, %v724
        %v731 = vadd.s32 %v727, %v725
        %v732 = vadd.s32 %v727, %v726
        %vm733 = vcmp.ge.s32.totalorder %v728, 0
        %vm734 = vcmp.ge.s32.totalorder %v729, 0
        %vm735 = vcmp.ge.s32.totalorder %v730, 0
        %vm736 = vcmp.ge.s32.totalorder %v731, 0
        %vm737 = vcmp.ge.s32.totalorder %v732, 0
        %vm738 = vcmp.lt.s32.totalorder %v728, 720
        %vm739 = vcmp.lt.s32.totalorder %v729, 720
        %vm740 = vcmp.lt.s32.totalorder %v730, 720
        %vm741 = vcmp.lt.s32.totalorder %v731, 720
        %vm742 = vcmp.lt.s32.totalorder %v732, 720
        %vm743 = vmand %vm733, %vm738
        %vm744 = vmand %vm734, %vm739
        %vm745 = vmand %vm735, %vm740
        %vm746 = vmand %vm736, %vm741
        %vm747 = vmand %vm737, %vm742
        %v748 = vld [vmem:[#allocation3] sm:$0xff]
        %v749 = vld [vmem:[#allocation3 + $0x8] sm:$0xff]
        %v750 = vld [vmem:[#allocation3 + $0x10] sm:$0xff]
        %v751 = vld [vmem:[#allocation3 + $0x18] sm:$0xff]
        %v752 = vld [vmem:[#allocation3 + $0x20] sm:$0xff]
        %v753 = vld [vmem:[#allocation3 + $0x28] sm:$0xff]
        %v754 = vld [vmem:[#allocation3 + $0x30] sm:$0xff]
        %v755 = vld [vmem:[#allocation3 + $0x38] sm:$0xff]
        %v756 = vld [vmem:[#allocation3 + $0x40] sm:$0xff]
        %v757 = vld [vmem:[#allocation3 + $0x48] sm:$0xff]
        %v758 = vsel %vm743, 1, 0
        %v759 = vsel %vm744, 1, 0
        %v760 = vsel %vm745, 1, 0
        %v761 = vsel %vm746, 1, 0
        %v762 = vsel %vm747, 1, 0
        %vm763 = vcmp.eq.s32.totalorder %v758, 1
        %vm764 = vcmp.eq.s32.totalorder %v759, 1
        %vm765 = vcmp.eq.s32.totalorder %v760, 1
        %vm766 = vcmp.eq.s32.totalorder %v761, 1
        %vm767 = vcmp.eq.s32.totalorder %v762, 1
        %v768 = vsel %vm763, %v748, 0.0
        %v769 = vsel %vm764, %v749, 0.0
        %v770 = vsel %vm765, %v750, 0.0
        %v771 = vsel %vm766, %v751, 0.0
        %v772 = vsel %vm767, %v752, 0.0
        %v773 = vsel %vm763, %v753, 0.0
        %v774 = vsel %vm764, %v754, 0.0
        %v775 = vsel %vm765, %v755, 0.0
        %v776 = vsel %vm766, %v756, 0.0
        %v777 = vsel %vm767, %v757, 0.0
        %v778 = vpack.c.bf16 %v773, %v768
        %v779 = vpack.c.bf16 %v774, %v769
        %v780 = vpack.c.bf16 %v775, %v770
        %v781 = vpack.c.bf16 %v776, %v771
        %v782 = vpack.c.bf16 %v777, %v772
        %v788 = vunpack.c.l.b16 %v778
        %v789 = vunpack.c.l.b16 %v779
        %v790 = vunpack.c.l.b16 %v780
        %v791 = vunpack.c.l.b16 %v781
        %v792 = vunpack.c.l.b16 %v782
        %v793 = vunpack.c.h.b16 %v778
        %v794 = vunpack.c.h.b16 %v779
        %v795 = vunpack.c.h.b16 %v780
        %v796 = vunpack.c.h.b16 %v781
        %v797 = vunpack.c.h.b16 %v782
        %v798 = vpack.c.b16 %v789, %v788
        %v799 = vpack.c.b16 %v791, %v790
        %v800 = vpack.c.b16 %v792, %v792
        %v801 = vpack.c.b16 %v794, %v793
        %v802 = vpack.c.b16 %v796, %v795
        %v803 = vpack.c.b16 %v797, %v797
        %804 = vrot.lane.b32.xlu0 %v798, 8
        %v805 = vpop.permute.xlu0 %804
        %806 = vrot.lane.b32.xlu0 %v799, 8
        %v807 = vpop.permute.xlu0 %806
        %808 = vrot.lane.b32.xlu0 %v800, 8
        %v809 = vpop.permute.xlu0 %808
        %810 = vrot.lane.b32.xlu0 %v801, 8
        %v811 = vpop.permute.xlu0 %810
        %812 = vrot.lane.b32.xlu0 %v802, 8
        %v813 = vpop.permute.xlu0 %812
        %814 = vrot.lane.b32.xlu0 %v803, 8
        %v815 = vpop.permute.xlu0 %814
        %v816 = vrot.slane %v805, 4
        %v817 = vrot.slane %v807, 4
        %v818 = vrot.slane %v811, 4
        %v819 = vrot.slane %v813, 4
        %v820 = vsel %vm690, %v816, %v805
        %v821 = vsel %vm692, %v816, %v817
        %v822 = vsel %vm690, %v821, %v807
        %v823 = vsel %vm690, %v817, %v809
        %v824 = vsel %vm690, %v818, %v811
        %v825 = vsel %vm692, %v818, %v819
        %v826 = vsel %vm690, %v825, %v813
        %v827 = vsel %vm690, %v819, %v815
        %834 = vst.msk [vmem:[#allocation2] sm:$0xff] %vm700, %v820
        %835 = vst [vmem:[#allocation2 + $0x8] sm:$0xff] %v822
        %vm836 = vcmask 306176
        %837 = vst.msk [vmem:[#allocation2 + $0x10] sm:$0xf] %vm836, %v823
        %838 = vst.msk [vmem:[#allocation2 + $0x14] sm:$0xff] %vm700, %v824
        %839 = vst [vmem:[#allocation2 + $0x1c] sm:$0xff] %v826
        %840 = vst.msk [vmem:[#allocation2 + $0x24] sm:$0xf] %vm836, %v827
        %v841 = vld [vmem:[%s5] sm:$0xf]
        %v842 = vld [vmem:[%s5 + $0x4] sm:$0xf]
        %v843 = vld [vmem:[%s5 + $0x8] sm:$0xf]
        %v844 = vld [vmem:[%s5 + $0xc] sm:$0xf]
        %v845 = vld [vmem:[#allocation2] sm:$0xff]
        %v846 = vld [vmem:[#allocation2 + $0x8] sm:$0xff]
        %v847 = vld [vmem:[#allocation2 + $0x10] sm:$0xf]
        %v848 = vld [vmem:[#allocation2 + $0x14] sm:$0xff]
        %v849 = vld [vmem:[#allocation2 + $0x1c] sm:$0xff]
        %v850 = vld [vmem:[#allocation2 + $0x24] sm:$0xf]
        %v851 = vld [vmem:[#allocation2 + $0x28] sm:$0xff]
        %v852 = vld [vmem:[#allocation2 + $0x30] sm:$0xff]
        %v853 = vld [vmem:[#allocation2 + $0x38] sm:$0xf]
        %s854 = scalar_lea.vmem %s5, 16
        %v855 = vld [vmem:[%s854] sm:$0xf]
        %v856 = vld [vmem:[%s854 + $0x4] sm:$0xf]
        %v857 = vld [vmem:[%s854 + $0x8] sm:$0xf]
        %v858 = vld [vmem:[%s854 + $0xc] sm:$0xf]
        %v863 = vunpack.c.l.b16 %v855
        %v864 = vunpack.c.l.b16 %v856
        %v865 = vunpack.c.l.b16 %v857
        %v866 = vunpack.c.l.b16 %v858
        %v867 = vpack.c.b16 %v864, %v863
        %v868 = vpack.c.b16 %v866, %v865
        %v878 = vunpack.c.l.b16 %v845
        %v879 = vunpack.c.h.b16 %v845
        %v880 = vunpack.c.l.b16 %v846
        %v881 = vunpack.c.h.b16 %v846
        %v882 = vunpack.c.l.b16 %v847
        %v883 = vunpack.c.l.b16 %v848
        %v884 = vunpack.c.h.b16 %v848
        %v885 = vunpack.c.l.b16 %v849
        %v886 = vunpack.c.h.b16 %v849
        %v887 = vunpack.c.l.b16 %v850
        %v888 = vunpack.c.l.b16 %v851
        %v889 = vunpack.c.h.b16 %v851
        %v890 = vunpack.c.l.b16 %v852
        %v891 = vunpack.c.h.b16 %v852
        %v892 = vunpack.c.l.b16 %v853
        %v893 = vpack.c.b16 %v883, %v878
        %v894 = vpack.c.b16 %v884, %v879
        %v895 = vpack.c.b16 %v885, %v880
        %v896 = vpack.c.b16 %v886, %v881
        %v897 = vpack.c.b16 %v887, %v882
        %v898 = vpack.c.b16 %v888, %v888
        %v899 = vpack.c.b16 %v889, %v889
        %v900 = vpack.c.b16 %v890, %v890
        %v901 = vpack.c.b16 %v891, %v891
        %v902 = vpack.c.b16 %v892, %v892
        %903 = vrot.lane.b32.xlu0 %v893, 120
        %v904 = vpop.permute.xlu0 %903
        %905 = vrot.lane.b32.xlu0 %v894, 120
        %v906 = vpop.permute.xlu0 %905
        %907 = vrot.lane.b32.xlu0 %v895, 120
        %v908 = vpop.permute.xlu0 %907
        %909 = vrot.lane.b32.xlu0 %v896, 120
        %v910 = vpop.permute.xlu0 %909
        %911 = vrot.lane.b32.xlu0 %v897, 120
        %v912 = vpop.permute.xlu0 %911
        %913 = vrot.lane.b32.xlu0 %v898, 120
        %v914 = vpop.permute.xlu0 %913
        %915 = vrot.lane.b32.xlu0 %v899, 120
        %v916 = vpop.permute.xlu0 %915
        %917 = vrot.lane.b32.xlu0 %v900, 120
        %v918 = vpop.permute.xlu0 %917
        %919 = vrot.lane.b32.xlu0 %v901, 120
        %v920 = vpop.permute.xlu0 %919
        %921 = vrot.lane.b32.xlu0 %v902, 120
        %v922 = vpop.permute.xlu0 %921
        %vm923 = vcmask 982016
        %v924 = vsel %vm923, %v904, %v906
        %v925 = vsel %vm923, %v906, %v908
        %v926 = vsel %vm923, %v908, %v910
        %v927 = vsel %vm923, %v910, %v912
        %v928 = vsel %vm923, %v914, %v916
        %v929 = vsel %vm923, %v916, %v918
        %v930 = vsel %vm923, %v918, %v920
        %v931 = vsel %vm923, %v920, %v922
        %vm937 = vcmask 195584
        %v939 = vsel %vm937, %v867, 0
        %v942 = vsel %vm937, %v868, 0
        %vm944 = vcmask 1043456
        %v946 = vsel %vm944, %v928, 0
        %v949 = vsel %vm944, %v929, 0
        %v952 = vsel %vm944, %v930, 0
        %v955 = vsel %vm944, %v931, 0
        %v958 = vsel %vm944, %v922, 0
        %960 = vmatprep.subr.bf16.mxu0 %v925
        %961 = vmatpush1.bf16.msra.mxu0 %v924
        %962 = vmatprep.subr.bf16.mxu0 %v949
        %963 = vmatpush1.bf16.msra.mxu0 %v946
        %964 = vmatprep.subr.bf16.mxu0 0
        %965 = vmatpush1.bf16.msra.mxu0 0
        %966 = vmatprep.subr.bf16.mxu0 0
        %967 = vmatpush1.bf16.msra.mxu0 0
        %968 = vmatprep.subr.bf16.mxu0 0
        %969 = vmatpush1.bf16.msra.mxu0 0
        %970 = vmatprep.subr.bf16.mxu0 0
        %971 = vmatpush1.bf16.msra.mxu0 0
        %972 = vmatprep.subr.bf16.mxu0 0
        %973 = vmatpush1.bf16.msra.mxu0 0
        %974 = vmatprep.subr.bf16.mxu0 0
        %975 = vmatpush1.bf16.msra.mxu0 0
        %976 = vmatprep.subr.bf16.mxu0 0
        %977 = vmatpush1.bf16.msra.mxu0 0
        %978 = vmatprep.subr.bf16.mxu0 0
        %979 = vmatpush1.bf16.msra.mxu0 0
        %980 = vmatprep.subr.bf16.mxu0 0
        %981 = vmatpush1.bf16.msra.mxu0 0
        %982 = vmatprep.subr.bf16.mxu0 0
        %983 = vmatpush1.bf16.msra.mxu0 0
        %984 = vmatprep.subr.bf16.mxu0 0
        %985 = vmatpush1.bf16.msra.mxu0 0
        %986 = vmatprep.subr.bf16.mxu0 0
        %987 = vmatpush1.bf16.msra.mxu0 0
        %988 = vmatprep.subr.bf16.mxu0 0
        %989 = vmatpush1.bf16.msra.mxu0 0
        %990 = vmatprep.subr.bf16.mxu0 0
        %991 = vmatpush1.bf16.msra.mxu0 0
        %992 = vmatprep.mubr.bf16.mxu0 0
        %993 = vmatmul.mubr.bf16.gmra.mrb[0].mxu0 %v939
        %v994 = vpop.f32.mrb[0].mxu0
        %v995 = vadd.f32 0.0, %v994
        %v996 = vpop.f32.mrb[0].mxu0
        %v997 = vadd.f32 0.0, %v996
        %v998 = vpop.f32.mrb[0].mxu0
        %v999 = vadd.f32 0.0, %v998
        %v1000 = vpop.f32.mrb[0].mxu0
        %v1001 = vadd.f32 0.0, %v1000
        %1002 = vmatprep.mubr.bf16.mxu0 0
        %1003 = vmatmul.mubr.bf16.gmra.mrb[0].mxu0 %v942
        %v1004 = vpop.f32.mrb[0].mxu0
        %v1005 = vadd.f32 0.0, %v1004
        %v1006 = vpop.f32.mrb[0].mxu0
        %v1007 = vadd.f32 0.0, %v1006
        %v1008 = vpop.f32.mrb[0].mxu0
        %v1009 = vadd.f32 0.0, %v1008
        %v1010 = vpop.f32.mrb[0].mxu0
        %v1011 = vadd.f32 0.0, %v1010
        %1012 = vdwg.mxu0
        %1013 = vmatprep.subr.bf16.mxu0 %v927
        %1014 = vmatpush1.bf16.msra.mxu0 %v926
        %1015 = vmatprep.subr.bf16.mxu0 %v955
        %1016 = vmatpush1.bf16.msra.mxu0 %v952
        %1017 = vmatprep.subr.bf16.mxu0 0
        %1018 = vmatpush1.bf16.msra.mxu0 0
        %1019 = vmatprep.subr.bf16.mxu0 0
        %1020 = vmatpush1.bf16.msra.mxu0 0
        %1021 = vmatprep.subr.bf16.mxu0 0
        %1022 = vmatpush1.bf16.msra.mxu0 0
        %1023 = vmatprep.subr.bf16.mxu0 0
        %1024 = vmatpush1.bf16.msra.mxu0 0
        %1025 = vmatprep.subr.bf16.mxu0 0
        %1026 = vmatpush1.bf16.msra.mxu0 0
        %1027 = vmatprep.subr.bf16.mxu0 0
        %1028 = vmatpush1.bf16.msra.mxu0 0
        %1029 = vmatprep.subr.bf16.mxu0 0
        %1030 = vmatpush1.bf16.msra.mxu0 0
        %1031 = vmatprep.subr.bf16.mxu0 0
        %1032 = vmatpush1.bf16.msra.mxu0 0
        %1033 = vmatprep.subr.bf16.mxu0 0
        %1034 = vmatpush1.bf16.msra.mxu0 0
        %1035 = vmatprep.subr.bf16.mxu0 0
        %1036 = vmatpush1.bf16.msra.mxu0 0
        %1037 = vmatprep.subr.bf16.mxu0 0
        %1038 = vmatpush1.bf16.msra.mxu0 0
        %1039 = vmatprep.subr.bf16.mxu0 0
        %1040 = vmatpush1.bf16.msra.mxu0 0
        %1041 = vmatprep.subr.bf16.mxu0 0
        %1042 = vmatpush1.bf16.msra.mxu0 0
        %1043 = vmatprep.subr.bf16.mxu0 0
        %1044 = vmatpush1.bf16.msra.mxu0 0
        %1045 = vmatprep.mubr.bf16.mxu0 0
        %1046 = vmatmul.mubr.bf16.gmra.mrb[0].mxu0 %v939
        %v1047 = vpop.f32.mrb[0].mxu0
        %v1048 = vadd.f32 0.0, %v1047
        %v1049 = vpop.f32.mrb[0].mxu0
        %v1050 = vadd.f32 0.0, %v1049
        %v1051 = vpop.f32.mrb[0].mxu0
        %v1052 = vadd.f32 0.0, %v1051
        %v1053 = vpop.f32.mrb[0].mxu0
        %v1054 = vadd.f32 0.0, %v1053
        %1055 = vmatprep.mubr.bf16.mxu0 0
        %1056 = vmatmul.mubr.bf16.gmra.mrb[0].mxu0 %v942
        %v1057 = vpop.f32.mrb[0].mxu0
        %v1058 = vadd.f32 0.0, %v1057
        %v1059 = vpop.f32.mrb[0].mxu0
        %v1060 = vadd.f32 0.0, %v1059
        %v1061 = vpop.f32.mrb[0].mxu0
        %v1062 = vadd.f32 0.0, %v1061
        %v1063 = vpop.f32.mrb[0].mxu0
        %v1064 = vadd.f32 0.0, %v1063
        %1065 = vdwg.mxu0
        %1066 = vmatprep.subr.bf16.mxu0 0
        %1067 = vmatpush1.bf16.msra.mxu0 %v912
        %1068 = vmatprep.subr.bf16.mxu0 0
        %1069 = vmatpush1.bf16.msra.mxu0 %v958
        %1070 = vmatprep.subr.bf16.mxu0 0
        %1071 = vmatpush1.bf16.msra.mxu0 0
        %1072 = vmatprep.subr.bf16.mxu0 0
        %1073 = vmatpush1.bf16.msra.mxu0 0
        %1074 = vmatprep.subr.bf16.mxu0 0
        %1075 = vmatpush1.bf16.msra.mxu0 0
        %1076 = vmatprep.subr.bf16.mxu0 0
        %1077 = vmatpush1.bf16.msra.mxu0 0
        %1078 = vmatprep.subr.bf16.mxu0 0
        %1079 = vmatpush1.bf16.msra.mxu0 0
        %1080 = vmatprep.subr.bf16.mxu0 0
        %1081 = vmatpush1.bf16.msra.mxu0 0
        %1082 = vmatprep.subr.bf16.mxu0 0
        %1083 = vmatpush1.bf16.msra.mxu0 0
        %1084 = vmatprep.subr.bf16.mxu0 0
        %1085 = vmatpush1.bf16.msra.mxu0 0
        %1086 = vmatprep.subr.bf16.mxu0 0
        %1087 = vmatpush1.bf16.msra.mxu0 0
        %1088 = vmatprep.subr.bf16.mxu0 0
        %1089 = vmatpush1.bf16.msra.mxu0 0
        %1090 = vmatprep.subr.bf16.mxu0 0
        %1091 = vmatpush1.bf16.msra.mxu0 0
        %1092 = vmatprep.subr.bf16.mxu0 0
        %1093 = vmatpush1.bf16.msra.mxu0 0
        %1094 = vmatprep.subr.bf16.mxu0 0
        %1095 = vmatpush1.bf16.msra.mxu0 0
        %1096 = vmatprep.subr.bf16.mxu0 0
        %1097 = vmatpush1.bf16.msra.mxu0 0
        %1098 = vmatprep.mubr.bf16.mxu0 0
        %1099 = vmatmul.mubr.bf16.gmra.mrb[0].mxu0 %v939
        %v1100 = vpop.f32.mrb[0].mxu0
        %v1101 = vadd.f32 0.0, %v1100
        %v1102 = vpop.f32.mrb[0].mxu0
        %v1103 = vpop.f32.mrb[0].mxu0
        %v1104 = vadd.f32 0.0, %v1103
        %v1105 = vpop.f32.mrb[0].mxu0
        %1106 = vmatprep.mubr.bf16.mxu0 0
        %1107 = vmatmul.mubr.bf16.gmra.mrb[0].mxu0 %v942
        %v1108 = vpop.f32.mrb[0].mxu0
        %v1109 = vadd.f32 0.0, %v1108
        %v1110 = vpop.f32.mrb[0].mxu0
        %v1111 = vpop.f32.mrb[0].mxu0
        %v1112 = vadd.f32 0.0, %v1111
        %v1113 = vpop.f32.mrb[0].mxu0
        %1114 = vdwg.mxu0
        %v1119 = vunpack.c.l.b16 %v841
        %v1120 = vunpack.c.l.b16 %v842
        %v1121 = vunpack.c.l.b16 %v843
        %v1122 = vunpack.c.l.b16 %v844
        %v1123 = vpack.c.b16 %v1120, %v1119
        %v1124 = vpack.c.b16 %v1122, %v1121
        %1125 = vrot.lane.b32.xlu0 %v893, 121
        %v1126 = vpop.permute.xlu0 %1125
        %1127 = vrot.lane.b32.xlu0 %v894, 121
        %v1128 = vpop.permute.xlu0 %1127
        %1129 = vrot.lane.b32.xlu0 %v895, 121
        %v1130 = vpop.permute.xlu0 %1129
        %1131 = vrot.lane.b32.xlu0 %v896, 121
        %v1132 = vpop.permute.xlu0 %1131
        %1133 = vrot.lane.b32.xlu0 %v897, 121
        %v1134 = vpop.permute.xlu0 %1133
        %1135 = vrot.lane.b32.xlu0 %v898, 121
        %v1136 = vpop.permute.xlu0 %1135
        %1137 = vrot.lane.b32.xlu0 %v899, 121
        %v1138 = vpop.permute.xlu0 %1137
        %1139 = vrot.lane.b32.xlu0 %v900, 121
        %v1140 = vpop.permute.xlu0 %1139
        %1141 = vrot.lane.b32.xlu0 %v901, 121
        %v1142 = vpop.permute.xlu0 %1141
        %1143 = vrot.lane.b32.xlu0 %v902, 121
        %v1144 = vpop.permute.xlu0 %1143
        %vm1145 = vcmask 990208
        %v1146 = vsel %vm1145, %v1126, %v1128
        %v1147 = vsel %vm1145, %v1128, %v1130
        %v1148 = vsel %vm1145, %v1130, %v1132
        %v1149 = vsel %vm1145, %v1132, %v1134
        %v1150 = vsel %vm1145, %v1136, %v1138
        %v1151 = vsel %vm1145, %v1138, %v1140
        %v1152 = vsel %vm1145, %v1140, %v1142
        %v1153 = vsel %vm1145, %v1142, %v1144
        %v1160 = vsel %vm937, %v1123, 0
        %v1163 = vsel %vm937, %v1124, 0
        %v1166 = vsel %vm944, %v1150, 0
        %v1169 = vsel %vm944, %v1151, 0
        %v1172 = vsel %vm944, %v1152, 0
        %v1175 = vsel %vm944, %v1153, 0
        %v1178 = vsel %vm944, %v1144, 0
        %1180 = vmatprep.subr.bf16.mxu0 %v1147
        %1181 = vmatpush1.bf16.msra.mxu0 %v1146
        %1182 = vmatprep.subr.bf16.mxu0 %v1169
        %1183 = vmatpush1.bf16.msra.mxu0 %v1166
        %1184 = vmatprep.subr.bf16.mxu0 0
        %1185 = vmatpush1.bf16.msra.mxu0 0
        %1186 = vmatprep.subr.bf16.mxu0 0
        %1187 = vmatpush1.bf16.msra.mxu0 0
        %1188 = vmatprep.subr.bf16.mxu0 0
        %1189 = vmatpush1.bf16.msra.mxu0 0
        %1190 = vmatprep.subr.bf16.mxu0 0
        %1191 = vmatpush1.bf16.msra.mxu0 0
        %1192 = vmatprep.subr.bf16.mxu0 0
        %1193 = vmatpush1.bf16.msra.mxu0 0
        %1194 = vmatprep.subr.bf16.mxu0 0
        %1195 = vmatpush1.bf16.msra.mxu0 0
        %1196 = vmatprep.subr.bf16.mxu0 0
        %1197 = vmatpush1.bf16.msra.mxu0 0
        %1198 = vmatprep.subr.bf16.mxu0 0
        %1199 = vmatpush1.bf16.msra.mxu0 0
        %1200 = vmatprep.subr.bf16.mxu0 0
        %1201 = vmatpush1.bf16.msra.mxu0 0
        %1202 = vmatprep.subr.bf16.mxu0 0
        %1203 = vmatpush1.bf16.msra.mxu0 0
        %1204 = vmatprep.subr.bf16.mxu0 0
        %1205 = vmatpush1.bf16.msra.mxu0 0
        %1206 = vmatprep.subr.bf16.mxu0 0
        %1207 = vmatpush1.bf16.msra.mxu0 0
        %1208 = vmatprep.subr.bf16.mxu0 0
        %1209 = vmatpush1.bf16.msra.mxu0 0
        %1210 = vmatprep.subr.bf16.mxu0 0
        %1211 = vmatpush1.bf16.msra.mxu0 0
        %1212 = vmatprep.mubr.bf16.mxu0 0
        %1213 = vmatmul.mubr.bf16.gmra.mrb[0].mxu0 %v1160
        %v1214 = vpop.f32.mrb[0].mxu0
        %v1215 = vadd.f32 %v995, %v1214
        %v1216 = vpop.f32.mrb[0].mxu0
        %v1217 = vadd.f32 %v997, %v1216
        %v1218 = vpop.f32.mrb[0].mxu0
        %v1219 = vadd.f32 %v999, %v1218
        %v1220 = vpop.f32.mrb[0].mxu0
        %v1221 = vadd.f32 %v1001, %v1220
        %1222 = vmatprep.mubr.bf16.mxu0 0
        %1223 = vmatmul.mubr.bf16.gmra.mrb[0].mxu0 %v1163
        %v1224 = vpop.f32.mrb[0].mxu0
        %v1225 = vadd.f32 %v1005, %v1224
        %v1226 = vpop.f32.mrb[0].mxu0
        %v1227 = vadd.f32 %v1007, %v1226
        %v1228 = vpop.f32.mrb[0].mxu0
        %v1229 = vadd.f32 %v1009, %v1228
        %v1230 = vpop.f32.mrb[0].mxu0
        %v1231 = vadd.f32 %v1011, %v1230
        %1232 = vdwg.mxu0
        %1233 = vmatprep.subr.bf16.mxu0 %v1149
        %1234 = vmatpush1.bf16.msra.mxu0 %v1148
        %1235 = vmatprep.subr.bf16.mxu0 %v1175
        %1236 = vmatpush1.bf16.msra.mxu0 %v1172
        %1237 = vmatprep.subr.bf16.mxu0 0
        %1238 = vmatpush1.bf16.msra.mxu0 0
        %1239 = vmatprep.subr.bf16.mxu0 0
        %1240 = vmatpush1.bf16.msra.mxu0 0
        %1241 = vmatprep.subr.bf16.mxu0 0
        %1242 = vmatpush1.bf16.msra.mxu0 0
        %1243 = vmatprep.subr.bf16.mxu0 0
        %1244 = vmatpush1.bf16.msra.mxu0 0
        %1245 = vmatprep.subr.bf16.mxu0 0
        %1246 = vmatpush1.bf16.msra.mxu0 0
        %1247 = vmatprep.subr.bf16.mxu0 0
        %1248 = vmatpush1.bf16.msra.mxu0 0
        %1249 = vmatprep.subr.bf16.mxu0 0
        %1250 = vmatpush1.bf16.msra.mxu0 0
        %1251 = vmatprep.subr.bf16.mxu0 0
        %1252 = vmatpush1.bf16.msra.mxu0 0
        %1253 = vmatprep.subr.bf16.mxu0 0
        %1254 = vmatpush1.bf16.msra.mxu0 0
        %1255 = vmatprep.subr.bf16.mxu0 0
        %1256 = vmatpush1.bf16.msra.mxu0 0
        %1257 = vmatprep.subr.bf16.mxu0 0
        %1258 = vmatpush1.bf16.msra.mxu0 0
        %1259 = vmatprep.subr.bf16.mxu0 0
        %1260 = vmatpush1.bf16.msra.mxu0 0
        %1261 = vmatprep.subr.bf16.mxu0 0
        %1262 = vmatpush1.bf16.msra.mxu0 0
        %1263 = vmatprep.subr.bf16.mxu0 0
        %1264 = vmatpush1.bf16.msra.mxu0 0
        %1265 = vmatprep.mubr.bf16.mxu0 0
        %1266 = vmatmul.mubr.bf16.gmra.mrb[0].mxu0 %v1160
        %v1267 = vpop.f32.mrb[0].mxu0
        %v1268 = vadd.f32 %v1048, %v1267
        %v1269 = vpop.f32.mrb[0].mxu0
        %v1270 = vadd.f32 %v1050, %v1269
        %v1271 = vpop.f32.mrb[0].mxu0
        %v1272 = vadd.f32 %v1052, %v1271
        %v1273 = vpop.f32.mrb[0].mxu0
        %v1274 = vadd.f32 %v1054, %v1273
        %1275 = vmatprep.mubr.bf16.mxu0 0
        %1276 = vmatmul.mubr.bf16.gmra.mrb[0].mxu0 %v1163
        %v1277 = vpop.f32.mrb[0].mxu0
        %v1278 = vadd.f32 %v1058, %v1277
        %v1279 = vpop.f32.mrb[0].mxu0
        %v1280 = vadd.f32 %v1060, %v1279
        %v1281 = vpop.f32.mrb[0].mxu0
        %v1282 = vadd.f32 %v1062, %v1281
        %v1283 = vpop.f32.mrb[0].mxu0
        %v1284 = vadd.f32 %v1064, %v1283
        %1285 = vdwg.mxu0
        %1286 = vmatprep.subr.bf16.mxu0 0
        %1287 = vmatpush1.bf16.msra.mxu0 %v1134
        %1288 = vmatprep.subr.bf16.mxu0 0
        %1289 = vmatpush1.bf16.msra.mxu0 %v1178
        %1290 = vmatprep.subr.bf16.mxu0 0
        %1291 = vmatpush1.bf16.msra.mxu0 0
        %1292 = vmatprep.subr.bf16.mxu0 0
        %1293 = vmatpush1.bf16.msra.mxu0 0
        %1294 = vmatprep.subr.bf16.mxu0 0
        %1295 = vmatpush1.bf16.msra.mxu0 0
        %1296 = vmatprep.subr.bf16.mxu0 0
        %1297 = vmatpush1.bf16.msra.mxu0 0
        %1298 = vmatprep.subr.bf16.mxu0 0
        %1299 = vmatpush1.bf16.msra.mxu0 0
        %1300 = vmatprep.subr.bf16.mxu0 0
        %1301 = vmatpush1.bf16.msra.mxu0 0
        %1302 = vmatprep.subr.bf16.mxu0 0
        %1303 = vmatpush1.bf16.msra.mxu0 0
        %1304 = vmatprep.subr.bf16.mxu0 0
        %1305 = vmatpush1.bf16.msra.mxu0 0
        %1306 = vmatprep.subr.bf16.mxu0 0
        %1307 = vmatpush1.bf16.msra.mxu0 0
        %1308 = vmatprep.subr.bf16.mxu0 0
        %1309 = vmatpush1.bf16.msra.mxu0 0
        %1310 = vmatprep.subr.bf16.mxu0 0
        %1311 = vmatpush1.bf16.msra.mxu0 0
        %1312 = vmatprep.subr.bf16.mxu0 0
        %1313 = vmatpush1.bf16.msra.mxu0 0
        %1314 = vmatprep.subr.bf16.mxu0 0
        %1315 = vmatpush1.bf16.msra.mxu0 0
        %1316 = vmatprep.subr.bf16.mxu0 0
        %1317 = vmatpush1.bf16.msra.mxu0 0
        %1318 = vmatprep.mubr.bf16.mxu0 0
        %1319 = vmatmul.mubr.bf16.gmra.mrb[0].mxu0 %v1160
        %v1320 = vpop.f32.mrb[0].mxu0
        %v1321 = vadd.f32 %v1101, %v1320
        %v1322 = vpop.f32.mrb[0].mxu0
        %v1323 = vpop.f32.mrb[0].mxu0
        %v1324 = vadd.f32 %v1104, %v1323
        %v1325 = vpop.f32.mrb[0].mxu0
        %1326 = vmatprep.mubr.bf16.mxu0 0
        %1327 = vmatmul.mubr.bf16.gmra.mrb[0].mxu0 %v1163
        %v1328 = vpop.f32.mrb[0].mxu0
        %v1329 = vadd.f32 %v1109, %v1328
        %v1330 = vpop.f32.mrb[0].mxu0
        %v1331 = vpop.f32.mrb[0].mxu0
        %v1332 = vadd.f32 %v1112, %v1331
        %v1333 = vpop.f32.mrb[0].mxu0
        %1334 = vdwg.mxu0
        %s1335 = scalar_lea.vmem %s5, 32
        %v1336 = vld [vmem:[%s1335] sm:$0xf]
        %v1337 = vld [vmem:[%s1335 + $0x4] sm:$0xf]
        %v1338 = vld [vmem:[%s1335 + $0x8] sm:$0xf]
        %v1339 = vld [vmem:[%s1335 + $0xc] sm:$0xf]
        %v1344 = vunpack.c.l.b16 %v1336
        %v1345 = vunpack.c.l.b16 %v1337
        %v1346 = vunpack.c.l.b16 %v1338
        %v1347 = vunpack.c.l.b16 %v1339
        %v1348 = vpack.c.b16 %v1345, %v1344
        %v1349 = vpack.c.b16 %v1347, %v1346
        %1350 = vrot.lane.b32.xlu0 %v893, 119
        %v1351 = vpop.permute.xlu0 %1350
        %1352 = vrot.lane.b32.xlu0 %v894, 119
        %v1353 = vpop.permute.xlu0 %1352
        %1354 = vrot.lane.b32.xlu0 %v895, 119
        %v1355 = vpop.permute.xlu0 %1354
        %1356 = vrot.lane.b32.xlu0 %v896, 119
        %v1357 = vpop.permute.xlu0 %1356
        %1358 = vrot.lane.b32.xlu0 %v897, 119
        %v1359 = vpop.permute.xlu0 %1358
        %1360 = vrot.lane.b32.xlu0 %v898, 119
        %v1361 = vpop.permute.xlu0 %1360
        %1362 = vrot.lane.b32.xlu0 %v899, 119
        %v1363 = vpop.permute.xlu0 %1362
        %1364 = vrot.lane.b32.xlu0 %v900, 119
        %v1365 = vpop.permute.xlu0 %1364
        %1366 = vrot.lane.b32.xlu0 %v901, 119
        %v1367 = vpop.permute.xlu0 %1366
        %1368 = vrot.lane.b32.xlu0 %v902, 119
        %v1369 = vpop.permute.xlu0 %1368
        %vm1370 = vcmask 973824
        %v1371 = vsel %vm1370, %v1351, %v1353
        %v1372 = vsel %vm1370, %v1353, %v1355
        %v1373 = vsel %vm1370, %v1355, %v1357
        %v1374 = vsel %vm1370, %v1357, %v1359
        %v1375 = vsel %vm1370, %v1361, %v1363
        %v1376 = vsel %vm1370, %v1363, %v1365
        %v1377 = vsel %vm1370, %v1365, %v1367
        %v1378 = vsel %vm1370, %v1367, %v1369
        %v1385 = vsel %vm937, %v1348, 0
        %v1388 = vsel %vm937, %v1349, 0
        %v1391 = vsel %vm944, %v1375, 0
        %v1394 = vsel %vm944, %v1376, 0
        %v1397 = vsel %vm944, %v1377, 0
        %v1400 = vsel %vm944, %v1378, 0
        %v1403 = vsel %vm944, %v1369, 0
        %1405 = vmatprep.subr.bf16.mxu0 %v1372
        %1406 = vmatpush1.bf16.msra.mxu0 %v1371
        %1407 = vmatprep.subr.bf16.mxu0 %v1394
        %1408 = vmatpush1.bf16.msra.mxu0 %v1391
        %1409 = vmatprep.subr.bf16.mxu0 0
        %1410 = vmatpush1.bf16.msra.mxu0 0
        %1411 = vmatprep.subr.bf16.mxu0 0
        %1412 = vmatpush1.bf16.msra.mxu0 0
        %1413 = vmatprep.subr.bf16.mxu0 0
        %1414 = vmatpush1.bf16.msra.mxu0 0
        %1415 = vmatprep.subr.bf16.mxu0 0
        %1416 = vmatpush1.bf16.msra.mxu0 0
        %1417 = vmatprep.subr.bf16.mxu0 0
        %1418 = vmatpush1.bf16.msra.mxu0 0
        %1419 = vmatprep.subr.bf16.mxu0 0
        %1420 = vmatpush1.bf16.msra.mxu0 0
        %1421 = vmatprep.subr.bf16.mxu0 0
        %1422 = vmatpush1.bf16.msra.mxu0 0
        %1423 = vmatprep.subr.bf16.mxu0 0
        %1424 = vmatpush1.bf16.msra.mxu0 0
        %1425 = vmatprep.subr.bf16.mxu0 0
        %1426 = vmatpush1.bf16.msra.mxu0 0
        %1427 = vmatprep.subr.bf16.mxu0 0
        %1428 = vmatpush1.bf16.msra.mxu0 0
        %1429 = vmatprep.subr.bf16.mxu0 0
        %1430 = vmatpush1.bf16.msra.mxu0 0
        %1431 = vmatprep.subr.bf16.mxu0 0
        %1432 = vmatpush1.bf16.msra.mxu0 0
        %1433 = vmatprep.subr.bf16.mxu0 0
        %1434 = vmatpush1.bf16.msra.mxu0 0
        %1435 = vmatprep.subr.bf16.mxu0 0
        %1436 = vmatpush1.bf16.msra.mxu0 0
        %1437 = vmatprep.mubr.bf16.mxu0 0
        %1438 = vmatmul.mubr.bf16.gmra.mrb[0].mxu0 %v1385
        %v1439 = vpop.f32.mrb[0].mxu0
        %v1440 = vadd.f32 0.0, %v1439
        %v1441 = vpop.f32.mrb[0].mxu0
        %v1442 = vadd.f32 0.0, %v1441
        %v1443 = vpop.f32.mrb[0].mxu0
        %v1444 = vadd.f32 0.0, %v1443
        %v1445 = vpop.f32.mrb[0].mxu0
        %v1446 = vadd.f32 0.0, %v1445
        %1447 = vmatprep.mubr.bf16.mxu0 0
        %1448 = vmatmul.mubr.bf16.gmra.mrb[0].mxu0 %v1388
        %v1449 = vpop.f32.mrb[0].mxu0
        %v1450 = vadd.f32 0.0, %v1449
        %v1451 = vpop.f32.mrb[0].mxu0
        %v1452 = vadd.f32 0.0, %v1451
        %v1453 = vpop.f32.mrb[0].mxu0
        %v1454 = vadd.f32 0.0, %v1453
        %v1455 = vpop.f32.mrb[0].mxu0
        %v1456 = vadd.f32 0.0, %v1455
        %1457 = vdwg.mxu0
        %1458 = vmatprep.subr.bf16.mxu0 %v1374
        %1459 = vmatpush1.bf16.msra.mxu0 %v1373
        %1460 = vmatprep.subr.bf16.mxu0 %v1400
        %1461 = vmatpush1.bf16.msra.mxu0 %v1397
        %1462 = vmatprep.subr.bf16.mxu0 0
        %1463 = vmatpush1.bf16.msra.mxu0 0
        %1464 = vmatprep.subr.bf16.mxu0 0
        %1465 = vmatpush1.bf16.msra.mxu0 0
        %1466 = vmatprep.subr.bf16.mxu0 0
        %1467 = vmatpush1.bf16.msra.mxu0 0
        %1468 = vmatprep.subr.bf16.mxu0 0
        %1469 = vmatpush1.bf16.msra.mxu0 0
        %1470 = vmatprep.subr.bf16.mxu0 0
        %1471 = vmatpush1.bf16.msra.mxu0 0
        %1472 = vmatprep.subr.bf16.mxu0 0
        %1473 = vmatpush1.bf16.msra.mxu0 0
        %1474 = vmatprep.subr.bf16.mxu0 0
        %1475 = vmatpush1.bf16.msra.mxu0 0
        %1476 = vmatprep.subr.bf16.mxu0 0
        %1477 = vmatpush1.bf16.msra.mxu0 0
        %1478 = vmatprep.subr.bf16.mxu0 0
        %1479 = vmatpush1.bf16.msra.mxu0 0
        %1480 = vmatprep.subr.bf16.mxu0 0
        %1481 = vmatpush1.bf16.msra.mxu0 0
        %1482 = vmatprep.subr.bf16.mxu0 0
        %1483 = vmatpush1.bf16.msra.mxu0 0
        %1484 = vmatprep.subr.bf16.mxu0 0
        %1485 = vmatpush1.bf16.msra.mxu0 0
        %1486 = vmatprep.subr.bf16.mxu0 0
        %1487 = vmatpush1.bf16.msra.mxu0 0
        %1488 = vmatprep.subr.bf16.mxu0 0
        %1489 = vmatpush1.bf16.msra.mxu0 0
        %1490 = vmatprep.mubr.bf16.mxu0 0
        %1491 = vmatmul.mubr.bf16.gmra.mrb[0].mxu0 %v1385
        %v1492 = vpop.f32.mrb[0].mxu0
        %v1493 = vadd.f32 0.0, %v1492
        %v1494 = vpop.f32.mrb[0].mxu0
        %v1495 = vadd.f32 0.0, %v1494
        %v1496 = vpop.f32.mrb[0].mxu0
        %v1497 = vadd.f32 0.0, %v1496
        %v1498 = vpop.f32.mrb[0].mxu0
        %v1499 = vadd.f32 0.0, %v1498
        %1500 = vmatprep.mubr.bf16.mxu0 0
        %1501 = vmatmul.mubr.bf16.gmra.mrb[0].mxu0 %v1388
        %v1502 = vpop.f32.mrb[0].mxu0
        %v1503 = vadd.f32 0.0, %v1502
        %v1504 = vpop.f32.mrb[0].mxu0
        %v1505 = vadd.f32 0.0, %v1504
        %v1506 = vpop.f32.mrb[0].mxu0
        %v1507 = vadd.f32 0.0, %v1506
        %v1508 = vpop.f32.mrb[0].mxu0
        %v1509 = vadd.f32 0.0, %v1508
        %1510 = vdwg.mxu0
        %1511 = vmatprep.subr.bf16.mxu0 0
        %1512 = vmatpush1.bf16.msra.mxu0 %v1359
        %1513 = vmatprep.subr.bf16.mxu0 0
        %1514 = vmatpush1.bf16.msra.mxu0 %v1403
        %1515 = vmatprep.subr.bf16.mxu0 0
        %1516 = vmatpush1.bf16.msra.mxu0 0
        %1517 = vmatprep.subr.bf16.mxu0 0
        %1518 = vmatpush1.bf16.msra.mxu0 0
        %1519 = vmatprep.subr.bf16.mxu0 0
        %1520 = vmatpush1.bf16.msra.mxu0 0
        %1521 = vmatprep.subr.bf16.mxu0 0
        %1522 = vmatpush1.bf16.msra.mxu0 0
        %1523 = vmatprep.subr.bf16.mxu0 0
        %1524 = vmatpush1.bf16.msra.mxu0 0
        %1525 = vmatprep.subr.bf16.mxu0 0
        %1526 = vmatpush1.bf16.msra.mxu0 0
        %1527 = vmatprep.subr.bf16.mxu0 0
        %1528 = vmatpush1.bf16.msra.mxu0 0
        %1529 = vmatprep.subr.bf16.mxu0 0
        %1530 = vmatpush1.bf16.msra.mxu0 0
        %1531 = vmatprep.subr.bf16.mxu0 0
        %1532 = vmatpush1.bf16.msra.mxu0 0
        %1533 = vmatprep.subr.bf16.mxu0 0
        %1534 = vmatpush1.bf16.msra.mxu0 0
        %1535 = vmatprep.subr.bf16.mxu0 0
        %1536 = vmatpush1.bf16.msra.mxu0 0
        %1537 = vmatprep.subr.bf16.mxu0 0
        %1538 = vmatpush1.bf16.msra.mxu0 0
        %1539 = vmatprep.subr.bf16.mxu0 0
        %1540 = vmatpush1.bf16.msra.mxu0 0
        %1541 = vmatprep.subr.bf16.mxu0 0
        %1542 = vmatpush1.bf16.msra.mxu0 0
        %1543 = vmatprep.mubr.bf16.mxu0 0
        %1544 = vmatmul.mubr.bf16.gmra.mrb[0].mxu0 %v1385
        %v1545 = vpop.f32.mrb[0].mxu0
        %v1546 = vadd.f32 0.0, %v1545
        %v1547 = vpop.f32.mrb[0].mxu0
        %v1548 = vpop.f32.mrb[0].mxu0
        %v1549 = vadd.f32 0.0, %v1548
        %v1550 = vpop.f32.mrb[0].mxu0
        %1551 = vmatprep.mubr.bf16.mxu0 0
        %1552 = vmatmul.mubr.bf16.gmra.mrb[0].mxu0 %v1388
        %v1553 = vpop.f32.mrb[0].mxu0
        %v1554 = vadd.f32 0.0, %v1553
        %v1555 = vpop.f32.mrb[0].mxu0
        %v1556 = vpop.f32.mrb[0].mxu0
        %v1557 = vadd.f32 0.0, %v1556
        %v1558 = vpop.f32.mrb[0].mxu0
        %1559 = vdwg.mxu0
        %v1560 = vadd.f32 %v1215, %v1440
        %v1561 = vadd.f32 %v1217, %v1442
        %v1562 = vadd.f32 %v1268, %v1493
        %v1563 = vadd.f32 %v1270, %v1495
        %v1564 = vadd.f32 %v1321, %v1546
        %v1565 = vadd.f32 %v1219, %v1444
        %v1566 = vadd.f32 %v1221, %v1446
        %v1567 = vadd.f32 %v1272, %v1497
        %v1568 = vadd.f32 %v1274, %v1499
        %v1569 = vadd.f32 %v1324, %v1549
        %v1570 = vadd.f32 %v1225, %v1450
        %v1571 = vadd.f32 %v1227, %v1452
        %v1572 = vadd.f32 %v1278, %v1503
        %v1573 = vadd.f32 %v1280, %v1505
        %v1574 = vadd.f32 %v1329, %v1554
        %v1575 = vadd.f32 %v1229, %v1454
        %v1576 = vadd.f32 %v1231, %v1456
        %v1577 = vadd.f32 %v1282, %v1507
        %v1578 = vadd.f32 %v1284, %v1509
        %v1579 = vadd.f32 %v1332, %v1557
        %v1580 = vtanh.pop %v1560
        %v1581 = vtanh.pop %v1561
        %v1582 = vtanh.pop %v1562
        %v1583 = vtanh.pop %v1563
        %v1584 = vtanh.pop %v1564
        %v1585 = vtanh.pop %v1565
        %v1586 = vtanh.pop %v1566
        %v1587 = vtanh.pop %v1567
        %v1588 = vtanh.pop %v1568
        %v1589 = vtanh.pop %v1569
        %v1590 = vxor.u32 %v1570, 2147483648
        %v1591 = vxor.u32 %v1571, 2147483648
        %v1592 = vxor.u32 %v1572, 2147483648
        %v1593 = vxor.u32 %v1573, 2147483648
        %v1594 = vxor.u32 %v1574, 2147483648
        %v1595 = vxor.u32 %v1575, 2147483648
        %v1596 = vxor.u32 %v1576, 2147483648
        %v1597 = vxor.u32 %v1577, 2147483648
        %v1598 = vxor.u32 %v1578, 2147483648
        %v1599 = vxor.u32 %v1579, 2147483648
        %v1600 = vmul.f32 %v1590, 1.442695
        %v1601 = vpow.pop %v1600
        %v1602 = vmul.f32 %v1591, 1.442695
        %v1603 = vpow.pop %v1602
        %v1604 = vmul.f32 %v1592, 1.442695
        %v1605 = vpow.pop %v1604
        %v1606 = vmul.f32 %v1593, 1.442695
        %v1607 = vpow.pop %v1606
        %v1608 = vmul.f32 %v1594, 1.442695
        %v1609 = vpow.pop %v1608
        %v1610 = vmul.f32 %v1595, 1.442695
        %v1611 = vpow.pop %v1610
        %v1612 = vmul.f32 %v1596, 1.442695
        %v1613 = vpow.pop %v1612
        %v1614 = vmul.f32 %v1597, 1.442695
        %v1615 = vpow.pop %v1614
        %v1616 = vmul.f32 %v1598, 1.442695
        %v1617 = vpow.pop %v1616
        %v1618 = vmul.f32 %v1599, 1.442695
        %v1619 = vpow.pop %v1618
        %v1620 = vadd.f32 %v1601, 1.0
        %v1621 = vadd.f32 %v1603, 1.0
        %v1622 = vadd.f32 %v1605, 1.0
        %v1623 = vadd.f32 %v1607, 1.0
        %v1624 = vadd.f32 %v1609, 1.0
        %v1625 = vadd.f32 %v1611, 1.0
        %v1626 = vadd.f32 %v1613, 1.0
        %v1627 = vadd.f32 %v1615, 1.0
        %v1628 = vadd.f32 %v1617, 1.0
        %v1629 = vadd.f32 %v1619, 1.0
        %v1630 = vrcp.pop %v1620
        %v1631 = vmul.f32 1.0, %v1630
        %v1632 = vrcp.pop %v1621
        %v1633 = vmul.f32 1.0, %v1632
        %v1634 = vrcp.pop %v1622
        %v1635 = vmul.f32 1.0, %v1634
        %v1636 = vrcp.pop %v1623
        %v1637 = vmul.f32 1.0, %v1636
        %v1638 = vrcp.pop %v1624
        %v1639 = vmul.f32 1.0, %v1638
        %v1640 = vrcp.pop %v1625
        %v1641 = vmul.f32 1.0, %v1640
        %v1642 = vrcp.pop %v1626
        %v1643 = vmul.f32 1.0, %v1642
        %v1644 = vrcp.pop %v1627
        %v1645 = vmul.f32 1.0, %v1644
        %v1646 = vrcp.pop %v1628
        %v1647 = vmul.f32 1.0, %v1646
        %v1648 = vrcp.pop %v1629
        %v1649 = vmul.f32 1.0, %v1648
        %v1650 = vmul.f32 %v1580, %v1631
        %v1651 = vmul.f32 %v1581, %v1633
        %v1652 = vmul.f32 %v1582, %v1635
        %v1653 = vmul.f32 %v1583, %v1637
        %v1654 = vmul.f32 %v1584, %v1639
        %v1655 = vmul.f32 %v1585, %v1641
        %v1656 = vmul.f32 %v1586, %v1643
        %v1657 = vmul.f32 %v1587, %v1645
        %v1658 = vmul.f32 %v1588, %v1647
        %v1659 = vmul.f32 %v1589, %v1649
        %v1660 = vpack.c.bf16 %v1655, %v1650
        %v1661 = vpack.c.bf16 %v1656, %v1651
        %v1662 = vpack.c.bf16 %v1657, %v1652
        %v1663 = vpack.c.bf16 %v1658, %v1653
        %v1664 = vpack.c.bf16 %v1659, %v1654
        %v1665 = vld [vmem:[#allocation3] sm:$0xff]
        %v1666 = vld [vmem:[#allocation3 + $0x8] sm:$0xff]
        %v1667 = vld [vmem:[#allocation3 + $0x10] sm:$0xff]
        %v1668 = vld [vmem:[#allocation3 + $0x18] sm:$0xff]
        %v1669 = vld [vmem:[#allocation3 + $0x20] sm:$0xff]
        %v1670 = vld [vmem:[#allocation3 + $0x28] sm:$0xff]
        %v1671 = vld [vmem:[#allocation3 + $0x30] sm:$0xff]
        %v1672 = vld [vmem:[#allocation3 + $0x38] sm:$0xff]
        %v1673 = vld [vmem:[#allocation3 + $0x40] sm:$0xff]
        %v1674 = vld [vmem:[#allocation3 + $0x48] sm:$0xff]
        %v1675 = vld [vmem:[%s6] sm:$0xf]
        %v1676 = vld [vmem:[%s6 + $0x4] sm:$0xf]
        %v1679 = vunpack.c.l.b16 %v1675
        %v1680 = vunpack.c.l.b16 %v1676
        %v1681 = vpack.c.b16 %v1680, %v1679
        %vm1682 = vcmask 130048
        %v1684 = vsel %vm1682, %v1681, 0
        %1686 = vmatprep.subr.bf16.mxu0 %v1661
        %1687 = vmatpush1.bf16.msra.mxu0 %v1660
        %1688 = vmatprep.subr.bf16.mxu0 0
        %1689 = vmatpush1.bf16.msra.mxu0 0
        %1690 = vmatprep.subr.bf16.mxu0 0
        %1691 = vmatpush1.bf16.msra.mxu0 0
        %1692 = vmatprep.subr.bf16.mxu0 0
        %1693 = vmatpush1.bf16.msra.mxu0 0
        %1694 = vmatprep.subr.bf16.mxu0 0
        %1695 = vmatpush1.bf16.msra.mxu0 0
        %1696 = vmatprep.subr.bf16.mxu0 0
        %1697 = vmatpush1.bf16.msra.mxu0 0
        %1698 = vmatprep.subr.bf16.mxu0 0
        %1699 = vmatpush1.bf16.msra.mxu0 0
        %1700 = vmatprep.subr.bf16.mxu0 0
        %1701 = vmatpush1.bf16.msra.mxu0 0
        %1702 = vmatprep.subr.bf16.mxu0 0
        %1703 = vmatpush1.bf16.msra.mxu0 0
        %1704 = vmatprep.subr.bf16.mxu0 0
        %1705 = vmatpush1.bf16.msra.mxu0 0
        %1706 = vmatprep.subr.bf16.mxu0 0
        %1707 = vmatpush1.bf16.msra.mxu0 0
        %1708 = vmatprep.subr.bf16.mxu0 0
        %1709 = vmatpush1.bf16.msra.mxu0 0
        %1710 = vmatprep.subr.bf16.mxu0 0
        %1711 = vmatpush1.bf16.msra.mxu0 0
        %1712 = vmatprep.subr.bf16.mxu0 0
        %1713 = vmatpush1.bf16.msra.mxu0 0
        %1714 = vmatprep.subr.bf16.mxu0 0
        %1715 = vmatpush1.bf16.msra.mxu0 0
        %1716 = vmatprep.subr.bf16.mxu0 0
        %1717 = vmatpush1.bf16.msra.mxu0 0
        %1718 = vmatprep.mubr.bf16.mxu0 0
        %1719 = vmatmul.mubr.bf16.gmra.mrb[0].mxu0 %v1684
        %v1720 = vpop.f32.mrb[0].mxu0
        %v1721 = vadd.f32 0.0, %v1720
        %v1722 = vpop.f32.mrb[0].mxu0
        %v1723 = vadd.f32 0.0, %v1722
        %v1724 = vpop.f32.mrb[0].mxu0
        %v1725 = vadd.f32 0.0, %v1724
        %v1726 = vpop.f32.mrb[0].mxu0
        %v1727 = vadd.f32 0.0, %v1726
        %1728 = vdwg.mxu0
        %1729 = vmatprep.subr.bf16.mxu0 %v1663
        %1730 = vmatpush1.bf16.msra.mxu0 %v1662
        %1731 = vmatprep.subr.bf16.mxu0 0
        %1732 = vmatpush1.bf16.msra.mxu0 0
        %1733 = vmatprep.subr.bf16.mxu0 0
        %1734 = vmatpush1.bf16.msra.mxu0 0
        %1735 = vmatprep.subr.bf16.mxu0 0
        %1736 = vmatpush1.bf16.msra.mxu0 0
        %1737 = vmatprep.subr.bf16.mxu0 0
        %1738 = vmatpush1.bf16.msra.mxu0 0
        %1739 = vmatprep.subr.bf16.mxu0 0
        %1740 = vmatpush1.bf16.msra.mxu0 0
        %1741 = vmatprep.subr.bf16.mxu0 0
        %1742 = vmatpush1.bf16.msra.mxu0 0
        %1743 = vmatprep.subr.bf16.mxu0 0
        %1744 = vmatpush1.bf16.msra.mxu0 0
        %1745 = vmatprep.subr.bf16.mxu0 0
        %1746 = vmatpush1.bf16.msra.mxu0 0
        %1747 = vmatprep.subr.bf16.mxu0 0
        %1748 = vmatpush1.bf16.msra.mxu0 0
        %1749 = vmatprep.subr.bf16.mxu0 0
        %1750 = vmatpush1.bf16.msra.mxu0 0
        %1751 = vmatprep.subr.bf16.mxu0 0
        %1752 = vmatpush1.bf16.msra.mxu0 0
        %1753 = vmatprep.subr.bf16.mxu0 0
        %1754 = vmatpush1.bf16.msra.mxu0 0
        %1755 = vmatprep.subr.bf16.mxu0 0
        %1756 = vmatpush1.bf16.msra.mxu0 0
        %1757 = vmatprep.subr.bf16.mxu0 0
        %1758 = vmatpush1.bf16.msra.mxu0 0
        %1759 = vmatprep.subr.bf16.mxu0 0
        %1760 = vmatpush1.bf16.msra.mxu0 0
        %1761 = vmatprep.mubr.bf16.mxu0 0
        %1762 = vmatmul.mubr.bf16.gmra.mrb[0].mxu0 %v1684
        %v1763 = vpop.f32.mrb[0].mxu0
        %v1764 = vadd.f32 0.0, %v1763
        %v1765 = vpop.f32.mrb[0].mxu0
        %v1766 = vadd.f32 0.0, %v1765
        %v1767 = vpop.f32.mrb[0].mxu0
        %v1768 = vadd.f32 0.0, %v1767
        %v1769 = vpop.f32.mrb[0].mxu0
        %v1770 = vadd.f32 0.0, %v1769
        %1771 = vdwg.mxu0
        %1772 = vmatprep.subr.bf16.mxu0 0
        %1773 = vmatpush1.bf16.msra.mxu0 %v1664
        %1774 = vmatprep.subr.bf16.mxu0 0
        %1775 = vmatpush1.bf16.msra.mxu0 0
        %1776 = vmatprep.subr.bf16.mxu0 0
        %1777 = vmatpush1.bf16.msra.mxu0 0
        %1778 = vmatprep.subr.bf16.mxu0 0
        %1779 = vmatpush1.bf16.msra.mxu0 0
        %1780 = vmatprep.subr.bf16.mxu0 0
        %1781 = vmatpush1.bf16.msra.mxu0 0
        %1782 = vmatprep.subr.bf16.mxu0 0
        %1783 = vmatpush1.bf16.msra.mxu0 0
        %1784 = vmatprep.subr.bf16.mxu0 0
        %1785 = vmatpush1.bf16.msra.mxu0 0
        %1786 = vmatprep.subr.bf16.mxu0 0
        %1787 = vmatpush1.bf16.msra.mxu0 0
        %1788 = vmatprep.subr.bf16.mxu0 0
        %1789 = vmatpush1.bf16.msra.mxu0 0
        %1790 = vmatprep.subr.bf16.mxu0 0
        %1791 = vmatpush1.bf16.msra.mxu0 0
        %1792 = vmatprep.subr.bf16.mxu0 0
        %1793 = vmatpush1.bf16.msra.mxu0 0
        %1794 = vmatprep.subr.bf16.mxu0 0
        %1795 = vmatpush1.bf16.msra.mxu0 0
        %1796 = vmatprep.subr.bf16.mxu0 0
        %1797 = vmatpush1.bf16.msra.mxu0 0
        %1798 = vmatprep.subr.bf16.mxu0 0
        %1799 = vmatpush1.bf16.msra.mxu0 0
        %1800 = vmatprep.subr.bf16.mxu0 0
        %1801 = vmatpush1.bf16.msra.mxu0 0
        %1802 = vmatprep.subr.bf16.mxu0 0
        %1803 = vmatpush1.bf16.msra.mxu0 0
        %1804 = vmatprep.mubr.bf16.mxu0 0
        %1805 = vmatmul.mubr.bf16.gmra.mrb[0].mxu0 %v1684
        %v1806 = vpop.f32.mrb[0].mxu0
        %v1807 = vadd.f32 0.0, %v1806
        %v1808 = vpop.f32.mrb[0].mxu0
        %v1809 = vpop.f32.mrb[0].mxu0
        %v1810 = vadd.f32 0.0, %v1809
        %v1811 = vpop.f32.mrb[0].mxu0
        %1812 = vdwg.mxu0
        %v1813 = vadd.f32 %v1665, %v1721
        %v1814 = vadd.f32 %v1666, %v1723
        %v1815 = vadd.f32 %v1667, %v1764
        %v1816 = vadd.f32 %v1668, %v1766
        %v1817 = vadd.f32 %v1669, %v1807
        %v1818 = vadd.f32 %v1670, %v1725
        %v1819 = vadd.f32 %v1671, %v1727
        %v1820 = vadd.f32 %v1672, %v1768
        %v1821 = vadd.f32 %v1673, %v1770
        %v1822 = vadd.f32 %v1674, %v1810
        %1823 = vst [vmem:[#allocation3] sm:$0xff] %v1813
        %1824 = vst [vmem:[#allocation3 + $0x8] sm:$0xff] %v1814
        %1825 = vst [vmem:[#allocation3 + $0x10] sm:$0xff] %v1815
        %1826 = vst [vmem:[#allocation3 + $0x18] sm:$0xff] %v1816
        %1827 = vst.msk [vmem:[#allocation3 + $0x20] sm:$0xff] %vm677, %v1817
        %1828 = vst [vmem:[#allocation3 + $0x28] sm:$0xff] %v1818
        %1829 = vst [vmem:[#allocation3 + $0x30] sm:$0xff] %v1819
        %1830 = vst [vmem:[#allocation3 + $0x38] sm:$0xff] %v1820
        %1831 = vst [vmem:[#allocation3 + $0x40] sm:$0xff] %v1821
        %1832 = vst.msk [vmem:[#allocation3 + $0x48] sm:$0xff] %vm677, %v1822
        %v1833 = vld [vmem:[%s7] sm:$0xf]
        %v1834 = vld [vmem:[%s7 + $0x4] sm:$0xf]
        %v1837 = vunpack.c.l.b16 %v1833
        %v1838 = vunpack.c.l.b16 %v1834
        %v1839 = vpack.c.b16 %v1838, %v1837
        %v1841 = vsel %vm1682, %v1839, 0
        %1843 = vmatprep.subr.bf16.mxu0 %v1661
        %1844 = vmatpush1.bf16.msra.mxu0 %v1660
        %1845 = vmatprep.subr.bf16.mxu0 0
        %1846 = vmatpush1.bf16.msra.mxu0 0
        %1847 = vmatprep.subr.bf16.mxu0 0
        %1848 = vmatpush1.bf16.msra.mxu0 0
        %1849 = vmatprep.subr.bf16.mxu0 0
        %1850 = vmatpush1.bf16.msra.mxu0 0
        %1851 = vmatprep.subr.bf16.mxu0 0
        %1852 = vmatpush1.bf16.msra.mxu0 0
        %1853 = vmatprep.subr.bf16.mxu0 0
        %1854 = vmatpush1.bf16.msra.mxu0 0
        %1855 = vmatprep.subr.bf16.mxu0 0
        %1856 = vmatpush1.bf16.msra.mxu0 0
        %1857 = vmatprep.subr.bf16.mxu0 0
        %1858 = vmatpush1.bf16.msra.mxu0 0
        %1859 = vmatprep.subr.bf16.mxu0 0
        %1860 = vmatpush1.bf16.msra.mxu0 0
        %1861 = vmatprep.subr.bf16.mxu0 0
        %1862 = vmatpush1.bf16.msra.mxu0 0
        %1863 = vmatprep.subr.bf16.mxu0 0
        %1864 = vmatpush1.bf16.msra.mxu0 0
        %1865 = vmatprep.subr.bf16.mxu0 0
        %1866 = vmatpush1.bf16.msra.mxu0 0
        %1867 = vmatprep.subr.bf16.mxu0 0
        %1868 = vmatpush1.bf16.msra.mxu0 0
        %1869 = vmatprep.subr.bf16.mxu0 0
        %1870 = vmatpush1.bf16.msra.mxu0 0
        %1871 = vmatprep.subr.bf16.mxu0 0
        %1872 = vmatpush1.bf16.msra.mxu0 0
        %1873 = vmatprep.subr.bf16.mxu0 0
        %1874 = vmatpush1.bf16.msra.mxu0 0
        %1875 = vmatprep.mubr.bf16.mxu0 0
        %1876 = vmatmul.mubr.bf16.gmra.mrb[0].mxu0 %v1841
        %v1877 = vpop.f32.mrb[0].mxu0
        %v1878 = vadd.f32 0.0, %v1877
        %v1879 = vpop.f32.mrb[0].mxu0
        %v1880 = vadd.f32 0.0, %v1879
        %v1881 = vpop.f32.mrb[0].mxu0
        %v1882 = vadd.f32 0.0, %v1881
        %v1883 = vpop.f32.mrb[0].mxu0
        %v1884 = vadd.f32 0.0, %v1883
        %1885 = vdwg.mxu0
        %1886 = vmatprep.subr.bf16.mxu0 %v1663
        %1887 = vmatpush1.bf16.msra.mxu0 %v1662
        %1888 = vmatprep.subr.bf16.mxu0 0
        %1889 = vmatpush1.bf16.msra.mxu0 0
        %1890 = vmatprep.subr.bf16.mxu0 0
        %1891 = vmatpush1.bf16.msra.mxu0 0
        %1892 = vmatprep.subr.bf16.mxu0 0
        %1893 = vmatpush1.bf16.msra.mxu0 0
        %1894 = vmatprep.subr.bf16.mxu0 0
        %1895 = vmatpush1.bf16.msra.mxu0 0
        %1896 = vmatprep.subr.bf16.mxu0 0
        %1897 = vmatpush1.bf16.msra.mxu0 0
        %1898 = vmatprep.subr.bf16.mxu0 0
        %1899 = vmatpush1.bf16.msra.mxu0 0
        %1900 = vmatprep.subr.bf16.mxu0 0
        %1901 = vmatpush1.bf16.msra.mxu0 0
        %1902 = vmatprep.subr.bf16.mxu0 0
        %1903 = vmatpush1.bf16.msra.mxu0 0
        %1904 = vmatprep.subr.bf16.mxu0 0
        %1905 = vmatpush1.bf16.msra.mxu0 0
        %1906 = vmatprep.subr.bf16.mxu0 0
        %1907 = vmatpush1.bf16.msra.mxu0 0
        %1908 = vmatprep.subr.bf16.mxu0 0
        %1909 = vmatpush1.bf16.msra.mxu0 0
        %1910 = vmatprep.subr.bf16.mxu0 0
        %1911 = vmatpush1.bf16.msra.mxu0 0
        %1912 = vmatprep.subr.bf16.mxu0 0
        %1913 = vmatpush1.bf16.msra.mxu0 0
        %1914 = vmatprep.subr.bf16.mxu0 0
        %1915 = vmatpush1.bf16.msra.mxu0 0
        %1916 = vmatprep.subr.bf16.mxu0 0
        %1917 = vmatpush1.bf16.msra.mxu0 0
        %1918 = vmatprep.mubr.bf16.mxu0 0
        %1919 = vmatmul.mubr.bf16.gmra.mrb[0].mxu0 %v1841
        %v1920 = vpop.f32.mrb[0].mxu0
        %v1921 = vadd.f32 0.0, %v1920
        %v1922 = vpop.f32.mrb[0].mxu0
        %v1923 = vadd.f32 0.0, %v1922
        %v1924 = vpop.f32.mrb[0].mxu0
        %v1925 = vadd.f32 0.0, %v1924
        %v1926 = vpop.f32.mrb[0].mxu0
        %v1927 = vadd.f32 0.0, %v1926
        %1928 = vdwg.mxu0
        %1929 = vmatprep.subr.bf16.mxu0 0
        %1930 = vmatpush1.bf16.msra.mxu0 %v1664
        %1931 = vmatprep.subr.bf16.mxu0 0
        %1932 = vmatpush1.bf16.msra.mxu0 0
        %1933 = vmatprep.subr.bf16.mxu0 0
        %1934 = vmatpush1.bf16.msra.mxu0 0
        %1935 = vmatprep.subr.bf16.mxu0 0
        %1936 = vmatpush1.bf16.msra.mxu0 0
        %1937 = vmatprep.subr.bf16.mxu0 0
        %1938 = vmatpush1.bf16.msra.mxu0 0
        %1939 = vmatprep.subr.bf16.mxu0 0
        %1940 = vmatpush1.bf16.msra.mxu0 0
        %1941 = vmatprep.subr.bf16.mxu0 0
        %1942 = vmatpush1.bf16.msra.mxu0 0
        %1943 = vmatprep.subr.bf16.mxu0 0
        %1944 = vmatpush1.bf16.msra.mxu0 0
        %1945 = vmatprep.subr.bf16.mxu0 0
        %1946 = vmatpush1.bf16.msra.mxu0 0
        %1947 = vmatprep.subr.bf16.mxu0 0
        %1948 = vmatpush1.bf16.msra.mxu0 0
        %1949 = vmatprep.subr.bf16.mxu0 0
        %1950 = vmatpush1.bf16.msra.mxu0 0
        %1951 = vmatprep.subr.bf16.mxu0 0
        %1952 = vmatpush1.bf16.msra.mxu0 0
        %1953 = vmatprep.subr.bf16.mxu0 0
        %1954 = vmatpush1.bf16.msra.mxu0 0
        %1955 = vmatprep.subr.bf16.mxu0 0
        %1956 = vmatpush1.bf16.msra.mxu0 0
        %1957 = vmatprep.subr.bf16.mxu0 0
        %1958 = vmatpush1.bf16.msra.mxu0 0
        %1959 = vmatprep.subr.bf16.mxu0 0
        %1960 = vmatpush1.bf16.msra.mxu0 0
        %1961 = vmatprep.mubr.bf16.mxu0 0
        %1962 = vmatmul.mubr.bf16.gmra.mrb[0].mxu0 %v1841
        %v1963 = vpop.f32.mrb[0].mxu0
        %v1964 = vadd.f32 0.0, %v1963
        %v1965 = vpop.f32.mrb[0].mxu0
        %v1966 = vpop.f32.mrb[0].mxu0
        %v1967 = vadd.f32 0.0, %v1966
        %v1968 = vpop.f32.mrb[0].mxu0
        %1969 = vdwg.mxu0
        %1970 = vst [vmem:[#allocation4] sm:$0xff] %v1878
        %1971 = vst [vmem:[#allocation4 + $0x8] sm:$0xff] %v1880
        %1972 = vst [vmem:[#allocation4 + $0x10] sm:$0xff] %v1921
        %1973 = vst [vmem:[#allocation4 + $0x18] sm:$0xff] %v1923
        %1974 = vst.msk [vmem:[#allocation4 + $0x20] sm:$0xff] %vm677, %v1964
        %1975 = vst [vmem:[#allocation4 + $0x28] sm:$0xff] %v1882
        %1976 = vst [vmem:[#allocation4 + $0x30] sm:$0xff] %v1884
        %1977 = vst [vmem:[#allocation4 + $0x38] sm:$0xff] %v1925
        %1978 = vst [vmem:[#allocation4 + $0x40] sm:$0xff] %v1927
        %1979 = vst.msk [vmem:[#allocation4 + $0x48] sm:$0xff] %vm677, %v1967
        %v1980 = vld [vmem:[#allocation3] sm:$0xff]
        %v1981 = vld [vmem:[#allocation3 + $0x8] sm:$0xff]
        %v1982 = vld [vmem:[#allocation3 + $0x10] sm:$0xff]
        %v1983 = vld [vmem:[#allocation3 + $0x18] sm:$0xff]
        %v1984 = vld [vmem:[#allocation3 + $0x20] sm:$0xff]
        %v1985 = vld [vmem:[#allocation3 + $0x28] sm:$0xff]
        %v1986 = vld [vmem:[#allocation3 + $0x30] sm:$0xff]
        %v1987 = vld [vmem:[#allocation3 + $0x38] sm:$0xff]
        %v1988 = vld [vmem:[#allocation3 + $0x40] sm:$0xff]
        %v1989 = vld [vmem:[#allocation3 + $0x48] sm:$0xff]
        %v1990 = vsel %vm763, %v1980, 0.0
        %v1991 = vsel %vm764, %v1981, 0.0
        %v1992 = vsel %vm765, %v1982, 0.0
        %v1993 = vsel %vm766, %v1983, 0.0
        %v1994 = vsel %vm767, %v1984, 0.0
        %v1995 = vsel %vm763, %v1985, 0.0
        %v1996 = vsel %vm764, %v1986, 0.0
        %v1997 = vsel %vm765, %v1987, 0.0
        %v1998 = vsel %vm766, %v1988, 0.0
        %v1999 = vsel %vm767, %v1989, 0.0
        %v2000 = vpack.c.bf16 %v1995, %v1990
        %v2001 = vpack.c.bf16 %v1996, %v1991
        %v2002 = vpack.c.bf16 %v1997, %v1992
        %v2003 = vpack.c.bf16 %v1998, %v1993
        %v2004 = vpack.c.bf16 %v1999, %v1994
        %v2010 = vunpack.c.l.b16 %v2000
        %v2011 = vunpack.c.l.b16 %v2001
        %v2012 = vunpack.c.l.b16 %v2002
        %v2013 = vunpack.c.l.b16 %v2003
        %v2014 = vunpack.c.l.b16 %v2004
        %v2015 = vunpack.c.h.b16 %v2000
        %v2016 = vunpack.c.h.b16 %v2001
        %v2017 = vunpack.c.h.b16 %v2002
        %v2018 = vunpack.c.h.b16 %v2003
        %v2019 = vunpack.c.h.b16 %v2004
        %v2020 = vpack.c.b16 %v2011, %v2010
        %v2021 = vpack.c.b16 %v2013, %v2012
        %v2022 = vpack.c.b16 %v2014, %v2014
        %v2023 = vpack.c.b16 %v2016, %v2015
        %v2024 = vpack.c.b16 %v2018, %v2017
        %v2025 = vpack.c.b16 %v2019, %v2019
        %2026 = vrot.lane.b32.xlu0 %v2020, 8
        %v2027 = vpop.permute.xlu0 %2026
        %2028 = vrot.lane.b32.xlu0 %v2021, 8
        %v2029 = vpop.permute.xlu0 %2028
        %2030 = vrot.lane.b32.xlu0 %v2022, 8
        %v2031 = vpop.permute.xlu0 %2030
        %2032 = vrot.lane.b32.xlu0 %v2023, 8
        %v2033 = vpop.permute.xlu0 %2032
        %2034 = vrot.lane.b32.xlu0 %v2024, 8
        %v2035 = vpop.permute.xlu0 %2034
        %2036 = vrot.lane.b32.xlu0 %v2025, 8
        %v2037 = vpop.permute.xlu0 %2036
        %v2038 = vrot.slane %v2027, 4
        %v2039 = vrot.slane %v2029, 4
        %v2040 = vrot.slane %v2033, 4
        %v2041 = vrot.slane %v2035, 4
        %v2042 = vsel %vm690, %v2038, %v2027
        %v2043 = vsel %vm692, %v2038, %v2039
        %v2044 = vsel %vm690, %v2043, %v2029
        %v2045 = vsel %vm690, %v2039, %v2031
        %v2046 = vsel %vm690, %v2040, %v2033
        %v2047 = vsel %vm692, %v2040, %v2041
        %v2048 = vsel %vm690, %v2047, %v2035
        %v2049 = vsel %vm690, %v2041, %v2037
        %2056 = vst.msk [vmem:[#allocation2] sm:$0xff] %vm700, %v2042
        %2057 = vst [vmem:[#allocation2 + $0x8] sm:$0xff] %v2044
        %2058 = vst.msk [vmem:[#allocation2 + $0x10] sm:$0xf] %vm836, %v2045
        %2059 = vst.msk [vmem:[#allocation2 + $0x14] sm:$0xff] %vm700, %v2046
        %2060 = vst [vmem:[#allocation2 + $0x1c] sm:$0xff] %v2048
        %2061 = vst.msk [vmem:[#allocation2 + $0x24] sm:$0xf] %vm836, %v2049
        %s2062 = scalar_lea.vmem %s5, 48
        %v2063 = vld [vmem:[%s2062] sm:$0xf]
        %v2064 = vld [vmem:[%s2062 + $0x4] sm:$0xf]
        %v2065 = vld [vmem:[%s2062 + $0x8] sm:$0xf]
        %v2066 = vld [vmem:[%s2062 + $0xc] sm:$0xf]
        %v2067 = vld [vmem:[#allocation2] sm:$0xff]
        %v2068 = vld [vmem:[#allocation2 + $0x8] sm:$0xff]
        %v2069 = vld [vmem:[#allocation2 + $0x10] sm:$0xf]
        %v2070 = vld [vmem:[#allocation2 + $0x14] sm:$0xff]
        %v2071 = vld [vmem:[#allocation2 + $0x1c] sm:$0xff]
        %v2072 = vld [vmem:[#allocation2 + $0x24] sm:$0xf]
        %v2073 = vld [vmem:[#allocation2 + $0x28] sm:$0xff]
        %v2074 = vld [vmem:[#allocation2 + $0x30] sm:$0xff]
        %v2075 = vld [vmem:[#allocation2 + $0x38] sm:$0xf]
        %s2076 = scalar_lea.vmem %s5, 64
        %v2077 = vld [vmem:[%s2076] sm:$0xf]
        %v2078 = vld [vmem:[%s2076 + $0x4] sm:$0xf]
        %v2079 = vld [vmem:[%s2076 + $0x8] sm:$0xf]
        %v2080 = vld [vmem:[%s2076 + $0xc] sm:$0xf]
        %v2085 = vunpack.c.l.b16 %v2077
        %v2086 = vunpack.c.l.b16 %v2078
        %v2087 = vunpack.c.l.b16 %v2079
        %v2088 = vunpack.c.l.b16 %v2080
        %v2089 = vpack.c.b16 %v2086, %v2085
        %v2090 = vpack.c.b16 %v2088, %v2087
        %v2100 = vunpack.c.l.b16 %v2067
        %v2101 = vunpack.c.h.b16 %v2067
        %v2102 = vunpack.c.l.b16 %v2068
        %v2103 = vunpack.c.h.b16 %v2068
        %v2104 = vunpack.c.l.b16 %v2069
        %v2105 = vunpack.c.l.b16 %v2070
        %v2106 = vunpack.c.h.b16 %v2070
        %v2107 = vunpack.c.l.b16 %v2071
        %v2108 = vunpack.c.h.b16 %v2071
        %v2109 = vunpack.c.l.b16 %v2072
        %v2110 = vunpack.c.l.b16 %v2073
        %v2111 = vunpack.c.h.b16 %v2073
        %v2112 = vunpack.c.l.b16 %v2074
        %v2113 = vunpack.c.h.b16 %v2074
        %v2114 = vunpack.c.l.b16 %v2075
        %v2115 = vpack.c.b16 %v2105, %v2100
        %v2116 = vpack.c.b16 %v2106, %v2101
        %v2117 = vpack.c.b16 %v2107, %v2102
        %v2118 = vpack.c.b16 %v2108, %v2103
        %v2119 = vpack.c.b16 %v2109, %v2104
        %v2120 = vpack.c.b16 %v2110, %v2110
        %v2121 = vpack.c.b16 %v2111, %v2111
        %v2122 = vpack.c.b16 %v2112, %v2112
        %v2123 = vpack.c.b16 %v2113, %v2113
        %v2124 = vpack.c.b16 %v2114, %v2114
        %2125 = vrot.lane.b32.xlu0 %v2115, 120
        %v2126 = vpop.permute.xlu0 %2125
        %2127 = vrot.lane.b32.xlu0 %v2116, 120
        %v2128 = vpop.permute.xlu0 %2127
        %2129 = vrot.lane.b32.xlu0 %v2117, 120
        %v2130 = vpop.permute.xlu0 %2129
        %2131 = vrot.lane.b32.xlu0 %v2118, 120
        %v2132 = vpop.permute.xlu0 %2131
        %2133 = vrot.lane.b32.xlu0 %v2119, 120
        %v2134 = vpop.permute.xlu0 %2133
        %2135 = vrot.lane.b32.xlu0 %v2120, 120
        %v2136 = vpop.permute.xlu0 %2135
        %2137 = vrot.lane.b32.xlu0 %v2121, 120
        %v2138 = vpop.permute.xlu0 %2137
        %2139 = vrot.lane.b32.xlu0 %v2122, 120
        %v2140 = vpop.permute.xlu0 %2139
        %2141 = vrot.lane.b32.xlu0 %v2123, 120
        %v2142 = vpop.permute.xlu0 %2141
        %2143 = vrot.lane.b32.xlu0 %v2124, 120
        %v2144 = vpop.permute.xlu0 %2143
        %v2145 = vsel %vm923, %v2126, %v2128
        %v2146 = vsel %vm923, %v2128, %v2130
        %v2147 = vsel %vm923, %v2130, %v2132
        %v2148 = vsel %vm923, %v2132, %v2134
        %v2149 = vsel %vm923, %v2136, %v2138
        %v2150 = vsel %vm923, %v2138, %v2140
        %v2151 = vsel %vm923, %v2140, %v2142
        %v2152 = vsel %vm923, %v2142, %v2144
        %v2159 = vsel %vm937, %v2089, 0
        %v2162 = vsel %vm937, %v2090, 0
        %v2165 = vsel %vm944, %v2149, 0
        %v2168 = vsel %vm944, %v2150, 0
        %v2171 = vsel %vm944, %v2151, 0
        %v2174 = vsel %vm944, %v2152, 0
        %v2177 = vsel %vm944, %v2144, 0
        %2179 = vmatprep.subr.bf16.mxu0 %v2146
        %2180 = vmatpush1.bf16.msra.mxu0 %v2145
        %2181 = vmatprep.subr.bf16.mxu0 %v2168
        %2182 = vmatpush1.bf16.msra.mxu0 %v2165
        %2183 = vmatprep.subr.bf16.mxu0 0
        %2184 = vmatpush1.bf16.msra.mxu0 0
        %2185 = vmatprep.subr.bf16.mxu0 0
        %2186 = vmatpush1.bf16.msra.mxu0 0
        %2187 = vmatprep.subr.bf16.mxu0 0
        %2188 = vmatpush1.bf16.msra.mxu0 0
        %2189 = vmatprep.subr.bf16.mxu0 0
        %2190 = vmatpush1.bf16.msra.mxu0 0
        %2191 = vmatprep.subr.bf16.mxu0 0
        %2192 = vmatpush1.bf16.msra.mxu0 0
        %2193 = vmatprep.subr.bf16.mxu0 0
        %2194 = vmatpush1.bf16.msra.mxu0 0
        %2195 = vmatprep.subr.bf16.mxu0 0
        %2196 = vmatpush1.bf16.msra.mxu0 0
        %2197 = vmatprep.subr.bf16.mxu0 0
        %2198 = vmatpush1.bf16.msra.mxu0 0
        %2199 = vmatprep.subr.bf16.mxu0 0
        %2200 = vmatpush1.bf16.msra.mxu0 0
        %2201 = vmatprep.subr.bf16.mxu0 0
        %2202 = vmatpush1.bf16.msra.mxu0 0
        %2203 = vmatprep.subr.bf16.mxu0 0
        %2204 = vmatpush1.bf16.msra.mxu0 0
        %2205 = vmatprep.subr.bf16.mxu0 0
        %2206 = vmatpush1.bf16.msra.mxu0 0
        %2207 = vmatprep.subr.bf16.mxu0 0
        %2208 = vmatpush1.bf16.msra.mxu0 0
        %2209 = vmatprep.subr.bf16.mxu0 0
        %2210 = vmatpush1.bf16.msra.mxu0 0
        %2211 = vmatprep.mubr.bf16.mxu0 0
        %2212 = vmatmul.mubr.bf16.gmra.mrb[0].mxu0 %v2159
        %v2213 = vpop.f32.mrb[0].mxu0
        %v2214 = vadd.f32 0.0, %v2213
        %v2215 = vpop.f32.mrb[0].mxu0
        %v2216 = vadd.f32 0.0, %v2215
        %v2217 = vpop.f32.mrb[0].mxu0
        %v2218 = vadd.f32 0.0, %v2217
        %v2219 = vpop.f32.mrb[0].mxu0
        %v2220 = vadd.f32 0.0, %v2219
        %2221 = vmatprep.mubr.bf16.mxu0 0
        %2222 = vmatmul.mubr.bf16.gmra.mrb[0].mxu0 %v2162
        %v2223 = vpop.f32.mrb[0].mxu0
        %v2224 = vadd.f32 0.0, %v2223
        %v2225 = vpop.f32.mrb[0].mxu0
        %v2226 = vadd.f32 0.0, %v2225
        %v2227 = vpop.f32.mrb[0].mxu0
        %v2228 = vadd.f32 0.0, %v2227
        %v2229 = vpop.f32.mrb[0].mxu0
        %v2230 = vadd.f32 0.0, %v2229
        %2231 = vdwg.mxu0
        %2232 = vmatprep.subr.bf16.mxu0 %v2148
        %2233 = vmatpush1.bf16.msra.mxu0 %v2147
        %2234 = vmatprep.subr.bf16.mxu0 %v2174
        %2235 = vmatpush1.bf16.msra.mxu0 %v2171
        %2236 = vmatprep.subr.bf16.mxu0 0
        %2237 = vmatpush1.bf16.msra.mxu0 0
        %2238 = vmatprep.subr.bf16.mxu0 0
        %2239 = vmatpush1.bf16.msra.mxu0 0
        %2240 = vmatprep.subr.bf16.mxu0 0
        %2241 = vmatpush1.bf16.msra.mxu0 0
        %2242 = vmatprep.subr.bf16.mxu0 0
        %2243 = vmatpush1.bf16.msra.mxu0 0
        %2244 = vmatprep.subr.bf16.mxu0 0
        %2245 = vmatpush1.bf16.msra.mxu0 0
        %2246 = vmatprep.subr.bf16.mxu0 0
        %2247 = vmatpush1.bf16.msra.mxu0 0
        %2248 = vmatprep.subr.bf16.mxu0 0
        %2249 = vmatpush1.bf16.msra.mxu0 0
        %2250 = vmatprep.subr.bf16.mxu0 0
        %2251 = vmatpush1.bf16.msra.mxu0 0
        %2252 = vmatprep.subr.bf16.mxu0 0
        %2253 = vmatpush1.bf16.msra.mxu0 0
        %2254 = vmatprep.subr.bf16.mxu0 0
        %2255 = vmatpush1.bf16.msra.mxu0 0
        %2256 = vmatprep.subr.bf16.mxu0 0
        %2257 = vmatpush1.bf16.msra.mxu0 0
        %2258 = vmatprep.subr.bf16.mxu0 0
        %2259 = vmatpush1.bf16.msra.mxu0 0
        %2260 = vmatprep.subr.bf16.mxu0 0
        %2261 = vmatpush1.bf16.msra.mxu0 0
        %2262 = vmatprep.subr.bf16.mxu0 0
        %2263 = vmatpush1.bf16.msra.mxu0 0
        %2264 = vmatprep.mubr.bf16.mxu0 0
        %2265 = vmatmul.mubr.bf16.gmra.mrb[0].mxu0 %v2159
        %v2266 = vpop.f32.mrb[0].mxu0
        %v2267 = vadd.f32 0.0, %v2266
        %v2268 = vpop.f32.mrb[0].mxu0
        %v2269 = vadd.f32 0.0, %v2268
        %v2270 = vpop.f32.mrb[0].mxu0
        %v2271 = vadd.f32 0.0, %v2270
        %v2272 = vpop.f32.mrb[0].mxu0
        %v2273 = vadd.f32 0.0, %v2272
        %2274 = vmatprep.mubr.bf16.mxu0 0
        %2275 = vmatmul.mubr.bf16.gmra.mrb[0].mxu0 %v2162
        %v2276 = vpop.f32.mrb[0].mxu0
        %v2277 = vadd.f32 0.0, %v2276
        %v2278 = vpop.f32.mrb[0].mxu0
        %v2279 = vadd.f32 0.0, %v2278
        %v2280 = vpop.f32.mrb[0].mxu0
        %v2281 = vadd.f32 0.0, %v2280
        %v2282 = vpop.f32.mrb[0].mxu0
        %v2283 = vadd.f32 0.0, %v2282
        %2284 = vdwg.mxu0
        %2285 = vmatprep.subr.bf16.mxu0 0
        %2286 = vmatpush1.bf16.msra.mxu0 %v2134
        %2287 = vmatprep.subr.bf16.mxu0 0
        %2288 = vmatpush1.bf16.msra.mxu0 %v2177
        %2289 = vmatprep.subr.bf16.mxu0 0
        %2290 = vmatpush1.bf16.msra.mxu0 0
        %2291 = vmatprep.subr.bf16.mxu0 0
        %2292 = vmatpush1.bf16.msra.mxu0 0
        %2293 = vmatprep.subr.bf16.mxu0 0
        %2294 = vmatpush1.bf16.msra.mxu0 0
        %2295 = vmatprep.subr.bf16.mxu0 0
        %2296 = vmatpush1.bf16.msra.mxu0 0
        %2297 = vmatprep.subr.bf16.mxu0 0
        %2298 = vmatpush1.bf16.msra.mxu0 0
        %2299 = vmatprep.subr.bf16.mxu0 0
        %2300 = vmatpush1.bf16.msra.mxu0 0
        %2301 = vmatprep.subr.bf16.mxu0 0
        %2302 = vmatpush1.bf16.msra.mxu0 0
        %2303 = vmatprep.subr.bf16.mxu0 0
        %2304 = vmatpush1.bf16.msra.mxu0 0
        %2305 = vmatprep.subr.bf16.mxu0 0
        %2306 = vmatpush1.bf16.msra.mxu0 0
        %2307 = vmatprep.subr.bf16.mxu0 0
        %2308 = vmatpush1.bf16.msra.mxu0 0
        %2309 = vmatprep.subr.bf16.mxu0 0
        %2310 = vmatpush1.bf16.msra.mxu0 0
        %2311 = vmatprep.subr.bf16.mxu0 0
        %2312 = vmatpush1.bf16.msra.mxu0 0
        %2313 = vmatprep.subr.bf16.mxu0 0
        %2314 = vmatpush1.bf16.msra.mxu0 0
        %2315 = vmatprep.subr.bf16.mxu0 0
        %2316 = vmatpush1.bf16.msra.mxu0 0
        %2317 = vmatprep.mubr.bf16.mxu0 0
        %2318 = vmatmul.mubr.bf16.gmra.mrb[0].mxu0 %v2159
        %v2319 = vpop.f32.mrb[0].mxu0
        %v2320 = vadd.f32 0.0, %v2319
        %v2321 = vpop.f32.mrb[0].mxu0
        %v2322 = vpop.f32.mrb[0].mxu0
        %v2323 = vadd.f32 0.0, %v2322
        %v2324 = vpop.f32.mrb[0].mxu0
        %2325 = vmatprep.mubr.bf16.mxu0 0
        %2326 = vmatmul.mubr.bf16.gmra.mrb[0].mxu0 %v2162
        %v2327 = vpop.f32.mrb[0].mxu0
        %v2328 = vadd.f32 0.0, %v2327
        %v2329 = vpop.f32.mrb[0].mxu0
        %v2330 = vpop.f32.mrb[0].mxu0
        %v2331 = vadd.f32 0.0, %v2330
        %v2332 = vpop.f32.mrb[0].mxu0
        %2333 = vdwg.mxu0
        %v2338 = vunpack.c.l.b16 %v2063
        %v2339 = vunpack.c.l.b16 %v2064
        %v2340 = vunpack.c.l.b16 %v2065
        %v2341 = vunpack.c.l.b16 %v2066
        %v2342 = vpack.c.b16 %v2339, %v2338
        %v2343 = vpack.c.b16 %v2341, %v2340
        %2344 = vrot.lane.b32.xlu0 %v2115, 122
        %v2345 = vpop.permute.xlu0 %2344
        %2346 = vrot.lane.b32.xlu0 %v2116, 122
        %v2347 = vpop.permute.xlu0 %2346
        %2348 = vrot.lane.b32.xlu0 %v2117, 122
        %v2349 = vpop.permute.xlu0 %2348
        %2350 = vrot.lane.b32.xlu0 %v2118, 122
        %v2351 = vpop.permute.xlu0 %2350
        %2352 = vrot.lane.b32.xlu0 %v2119, 122
        %v2353 = vpop.permute.xlu0 %2352
        %2354 = vrot.lane.b32.xlu0 %v2120, 122
        %v2355 = vpop.permute.xlu0 %2354
        %2356 = vrot.lane.b32.xlu0 %v2121, 122
        %v2357 = vpop.permute.xlu0 %2356
        %2358 = vrot.lane.b32.xlu0 %v2122, 122
        %v2359 = vpop.permute.xlu0 %2358
        %2360 = vrot.lane.b32.xlu0 %v2123, 122
        %v2361 = vpop.permute.xlu0 %2360
        %2362 = vrot.lane.b32.xlu0 %v2124, 122
        %v2363 = vpop.permute.xlu0 %2362
        %vm2364 = vcmask 998400
        %v2365 = vsel %vm2364, %v2345, %v2347
        %v2366 = vsel %vm2364, %v2347, %v2349
        %v2367 = vsel %vm2364, %v2349, %v2351
        %v2368 = vsel %vm2364, %v2351, %v2353
        %v2369 = vsel %vm2364, %v2355, %v2357
        %v2370 = vsel %vm2364, %v2357, %v2359
        %v2371 = vsel %vm2364, %v2359, %v2361
        %v2372 = vsel %vm2364, %v2361, %v2363
        %v2379 = vsel %vm937, %v2342, 0
        %v2382 = vsel %vm937, %v2343, 0
        %v2385 = vsel %vm944, %v2369, 0
        %v2388 = vsel %vm944, %v2370, 0
        %v2391 = vsel %vm944, %v2371, 0
        %v2394 = vsel %vm944, %v2372, 0
        %v2397 = vsel %vm944, %v2363, 0
        %2399 = vmatprep.subr.bf16.mxu0 %v2366
        %2400 = vmatpush1.bf16.msra.mxu0 %v2365
        %2401 = vmatprep.subr.bf16.mxu0 %v2388
        %2402 = vmatpush1.bf16.msra.mxu0 %v2385
        %2403 = vmatprep.subr.bf16.mxu0 0
        %2404 = vmatpush1.bf16.msra.mxu0 0
        %2405 = vmatprep.subr.bf16.mxu0 0
        %2406 = vmatpush1.bf16.msra.mxu0 0
        %2407 = vmatprep.subr.bf16.mxu0 0
        %2408 = vmatpush1.bf16.msra.mxu0 0
        %2409 = vmatprep.subr.bf16.mxu0 0
        %2410 = vmatpush1.bf16.msra.mxu0 0
        %2411 = vmatprep.subr.bf16.mxu0 0
        %2412 = vmatpush1.bf16.msra.mxu0 0
        %2413 = vmatprep.subr.bf16.mxu0 0
        %2414 = vmatpush1.bf16.msra.mxu0 0
        %2415 = vmatprep.subr.bf16.mxu0 0
        %2416 = vmatpush1.bf16.msra.mxu0 0
        %2417 = vmatprep.subr.bf16.mxu0 0
        %2418 = vmatpush1.bf16.msra.mxu0 0
        %2419 = vmatprep.subr.bf16.mxu0 0
        %2420 = vmatpush1.bf16.msra.mxu0 0
        %2421 = vmatprep.subr.bf16.mxu0 0
        %2422 = vmatpush1.bf16.msra.mxu0 0
        %2423 = vmatprep.subr.bf16.mxu0 0
        %2424 = vmatpush1.bf16.msra.mxu0 0
        %2425 = vmatprep.subr.bf16.mxu0 0
        %2426 = vmatpush1.bf16.msra.mxu0 0
        %2427 = vmatprep.subr.bf16.mxu0 0
        %2428 = vmatpush1.bf16.msra.mxu0 0
        %2429 = vmatprep.subr.bf16.mxu0 0
        %2430 = vmatpush1.bf16.msra.mxu0 0
        %2431 = vmatprep.mubr.bf16.mxu0 0
        %2432 = vmatmul.mubr.bf16.gmra.mrb[0].mxu0 %v2379
        %v2433 = vpop.f32.mrb[0].mxu0
        %v2434 = vadd.f32 %v2214, %v2433
        %v2435 = vpop.f32.mrb[0].mxu0
        %v2436 = vadd.f32 %v2216, %v2435
        %v2437 = vpop.f32.mrb[0].mxu0
        %v2438 = vadd.f32 %v2218, %v2437
        %v2439 = vpop.f32.mrb[0].mxu0
        %v2440 = vadd.f32 %v2220, %v2439
        %2441 = vmatprep.mubr.bf16.mxu0 0
        %2442 = vmatmul.mubr.bf16.gmra.mrb[0].mxu0 %v2382
        %v2443 = vpop.f32.mrb[0].mxu0
        %v2444 = vadd.f32 %v2224, %v2443
        %v2445 = vpop.f32.mrb[0].mxu0
        %v2446 = vadd.f32 %v2226, %v2445
        %v2447 = vpop.f32.mrb[0].mxu0
        %v2448 = vadd.f32 %v2228, %v2447
        %v2449 = vpop.f32.mrb[0].mxu0
        %v2450 = vadd.f32 %v2230, %v2449
        %2451 = vdwg.mxu0
        %2452 = vmatprep.subr.bf16.mxu0 %v2368
        %2453 = vmatpush1.bf16.msra.mxu0 %v2367
        %2454 = vmatprep.subr.bf16.mxu0 %v2394
        %2455 = vmatpush1.bf16.msra.mxu0 %v2391
        %2456 = vmatprep.subr.bf16.mxu0 0
        %2457 = vmatpush1.bf16.msra.mxu0 0
        %2458 = vmatprep.subr.bf16.mxu0 0
        %2459 = vmatpush1.bf16.msra.mxu0 0
        %2460 = vmatprep.subr.bf16.mxu0 0
        %2461 = vmatpush1.bf16.msra.mxu0 0
        %2462 = vmatprep.subr.bf16.mxu0 0
        %2463 = vmatpush1.bf16.msra.mxu0 0
        %2464 = vmatprep.subr.bf16.mxu0 0
        %2465 = vmatpush1.bf16.msra.mxu0 0
        %2466 = vmatprep.subr.bf16.mxu0 0
        %2467 = vmatpush1.bf16.msra.mxu0 0
        %2468 = vmatprep.subr.bf16.mxu0 0
        %2469 = vmatpush1.bf16.msra.mxu0 0
        %2470 = vmatprep.subr.bf16.mxu0 0
        %2471 = vmatpush1.bf16.msra.mxu0 0
        %2472 = vmatprep.subr.bf16.mxu0 0
        %2473 = vmatpush1.bf16.msra.mxu0 0
        %2474 = vmatprep.subr.bf16.mxu0 0
        %2475 = vmatpush1.bf16.msra.mxu0 0
        %2476 = vmatprep.subr.bf16.mxu0 0
        %2477 = vmatpush1.bf16.msra.mxu0 0
        %2478 = vmatprep.subr.bf16.mxu0 0
        %2479 = vmatpush1.bf16.msra.mxu0 0
        %2480 = vmatprep.subr.bf16.mxu0 0
        %2481 = vmatpush1.bf16.msra.mxu0 0
        %2482 = vmatprep.subr.bf16.mxu0 0
        %2483 = vmatpush1.bf16.msra.mxu0 0
        %2484 = vmatprep.mubr.bf16.mxu0 0
        %2485 = vmatmul.mubr.bf16.gmra.mrb[0].mxu0 %v2379
        %v2486 = vpop.f32.mrb[0].mxu0
        %v2487 = vadd.f32 %v2267, %v2486
        %v2488 = vpop.f32.mrb[0].mxu0
        %v2489 = vadd.f32 %v2269, %v2488
        %v2490 = vpop.f32.mrb[0].mxu0
        %v2491 = vadd.f32 %v2271, %v2490
        %v2492 = vpop.f32.mrb[0].mxu0
        %v2493 = vadd.f32 %v2273, %v2492
        %2494 = vmatprep.mubr.bf16.mxu0 0
        %2495 = vmatmul.mubr.bf16.gmra.mrb[0].mxu0 %v2382
        %v2496 = vpop.f32.mrb[0].mxu0
        %v2497 = vadd.f32 %v2277, %v2496
        %v2498 = vpop.f32.mrb[0].mxu0
        %v2499 = vadd.f32 %v2279, %v2498
        %v2500 = vpop.f32.mrb[0].mxu0
        %v2501 = vadd.f32 %v2281, %v2500
        %v2502 = vpop.f32.mrb[0].mxu0
        %v2503 = vadd.f32 %v2283, %v2502
        %2504 = vdwg.mxu0
        %2505 = vmatprep.subr.bf16.mxu0 0
        %2506 = vmatpush1.bf16.msra.mxu0 %v2353
        %2507 = vmatprep.subr.bf16.mxu0 0
        %2508 = vmatpush1.bf16.msra.mxu0 %v2397
        %2509 = vmatprep.subr.bf16.mxu0 0
        %2510 = vmatpush1.bf16.msra.mxu0 0
        %2511 = vmatprep.subr.bf16.mxu0 0
        %2512 = vmatpush1.bf16.msra.mxu0 0
        %2513 = vmatprep.subr.bf16.mxu0 0
        %2514 = vmatpush1.bf16.msra.mxu0 0
        %2515 = vmatprep.subr.bf16.mxu0 0
        %2516 = vmatpush1.bf16.msra.mxu0 0
        %2517 = vmatprep.subr.bf16.mxu0 0
        %2518 = vmatpush1.bf16.msra.mxu0 0
        %2519 = vmatprep.subr.bf16.mxu0 0
        %2520 = vmatpush1.bf16.msra.mxu0 0
        %2521 = vmatprep.subr.bf16.mxu0 0
        %2522 = vmatpush1.bf16.msra.mxu0 0
        %2523 = vmatprep.subr.bf16.mxu0 0
        %2524 = vmatpush1.bf16.msra.mxu0 0
        %2525 = vmatprep.subr.bf16.mxu0 0
        %2526 = vmatpush1.bf16.msra.mxu0 0
        %2527 = vmatprep.subr.bf16.mxu0 0
        %2528 = vmatpush1.bf16.msra.mxu0 0
        %2529 = vmatprep.subr.bf16.mxu0 0
        %2530 = vmatpush1.bf16.msra.mxu0 0
        %2531 = vmatprep.subr.bf16.mxu0 0
        %2532 = vmatpush1.bf16.msra.mxu0 0
        %2533 = vmatprep.subr.bf16.mxu0 0
        %2534 = vmatpush1.bf16.msra.mxu0 0
        %2535 = vmatprep.subr.bf16.mxu0 0
        %2536 = vmatpush1.bf16.msra.mxu0 0
        %2537 = vmatprep.mubr.bf16.mxu0 0
        %2538 = vmatmul.mubr.bf16.gmra.mrb[0].mxu0 %v2379
        %v2539 = vpop.f32.mrb[0].mxu0
        %v2540 = vadd.f32 %v2320, %v2539
        %v2541 = vpop.f32.mrb[0].mxu0
        %v2542 = vpop.f32.mrb[0].mxu0
        %v2543 = vadd.f32 %v2323, %v2542
        %v2544 = vpop.f32.mrb[0].mxu0
        %2545 = vmatprep.mubr.bf16.mxu0 0
        %2546 = vmatmul.mubr.bf16.gmra.mrb[0].mxu0 %v2382
        %v2547 = vpop.f32.mrb[0].mxu0
        %v2548 = vadd.f32 %v2328, %v2547
        %v2549 = vpop.f32.mrb[0].mxu0
        %v2550 = vpop.f32.mrb[0].mxu0
        %v2551 = vadd.f32 %v2331, %v2550
        %v2552 = vpop.f32.mrb[0].mxu0
        %2553 = vdwg.mxu0
        %s2554 = scalar_lea.vmem %s5, 80
        %v2555 = vld [vmem:[%s2554] sm:$0xf]
        %v2556 = vld [vmem:[%s2554 + $0x4] sm:$0xf]
        %v2557 = vld [vmem:[%s2554 + $0x8] sm:$0xf]
        %v2558 = vld [vmem:[%s2554 + $0xc] sm:$0xf]
        %v2563 = vunpack.c.l.b16 %v2555
        %v2564 = vunpack.c.l.b16 %v2556
        %v2565 = vunpack.c.l.b16 %v2557
        %v2566 = vunpack.c.l.b16 %v2558
        %v2567 = vpack.c.b16 %v2564, %v2563
        %v2568 = vpack.c.b16 %v2566, %v2565
        %2569 = vrot.lane.b32.xlu0 %v2115, 118
        %v2570 = vpop.permute.xlu0 %2569
        %2571 = vrot.lane.b32.xlu0 %v2116, 118
        %v2572 = vpop.permute.xlu0 %2571
        %2573 = vrot.lane.b32.xlu0 %v2117, 118
        %v2574 = vpop.permute.xlu0 %2573
        %2575 = vrot.lane.b32.xlu0 %v2118, 118
        %v2576 = vpop.permute.xlu0 %2575
        %2577 = vrot.lane.b32.xlu0 %v2119, 118
        %v2578 = vpop.permute.xlu0 %2577
        %2579 = vrot.lane.b32.xlu0 %v2120, 118
        %v2580 = vpop.permute.xlu0 %2579
        %2581 = vrot.lane.b32.xlu0 %v2121, 118
        %v2582 = vpop.permute.xlu0 %2581
        %2583 = vrot.lane.b32.xlu0 %v2122, 118
        %v2584 = vpop.permute.xlu0 %2583
        %2585 = vrot.lane.b32.xlu0 %v2123, 118
        %v2586 = vpop.permute.xlu0 %2585
        %2587 = vrot.lane.b32.xlu0 %v2124, 118
        %v2588 = vpop.permute.xlu0 %2587
        %vm2589 = vcmask 965632
        %v2590 = vsel %vm2589, %v2570, %v2572
        %v2591 = vsel %vm2589, %v2572, %v2574
        %v2592 = vsel %vm2589, %v2574, %v2576
        %v2593 = vsel %vm2589, %v2576, %v2578
        %v2594 = vsel %vm2589, %v2580, %v2582
        %v2595 = vsel %vm2589, %v2582, %v2584
        %v2596 = vsel %vm2589, %v2584, %v2586
        %v2597 = vsel %vm2589, %v2586, %v2588
        %v2604 = vsel %vm937, %v2567, 0
        %v2607 = vsel %vm937, %v2568, 0
        %v2610 = vsel %vm944, %v2594, 0
        %v2613 = vsel %vm944, %v2595, 0
        %v2616 = vsel %vm944, %v2596, 0
        %v2619 = vsel %vm944, %v2597, 0
        %v2622 = vsel %vm944, %v2588, 0
        %2624 = vmatprep.subr.bf16.mxu0 %v2591
        %2625 = vmatpush1.bf16.msra.mxu0 %v2590
        %2626 = vmatprep.subr.bf16.mxu0 %v2613
        %2627 = vmatpush1.bf16.msra.mxu0 %v2610
        %2628 = vmatprep.subr.bf16.mxu0 0
        %2629 = vmatpush1.bf16.msra.mxu0 0
        %2630 = vmatprep.subr.bf16.mxu0 0
        %2631 = vmatpush1.bf16.msra.mxu0 0
        %2632 = vmatprep.subr.bf16.mxu0 0
        %2633 = vmatpush1.bf16.msra.mxu0 0
        %2634 = vmatprep.subr.bf16.mxu0 0
        %2635 = vmatpush1.bf16.msra.mxu0 0
        %2636 = vmatprep.subr.bf16.mxu0 0
        %2637 = vmatpush1.bf16.msra.mxu0 0
        %2638 = vmatprep.subr.bf16.mxu0 0
        %2639 = vmatpush1.bf16.msra.mxu0 0
        %2640 = vmatprep.subr.bf16.mxu0 0
        %2641 = vmatpush1.bf16.msra.mxu0 0
        %2642 = vmatprep.subr.bf16.mxu0 0
        %2643 = vmatpush1.bf16.msra.mxu0 0
        %2644 = vmatprep.subr.bf16.mxu0 0
        %2645 = vmatpush1.bf16.msra.mxu0 0
        %2646 = vmatprep.subr.bf16.mxu0 0
        %2647 = vmatpush1.bf16.msra.mxu0 0
        %2648 = vmatprep.subr.bf16.mxu0 0
        %2649 = vmatpush1.bf16.msra.mxu0 0
        %2650 = vmatprep.subr.bf16.mxu0 0
        %2651 = vmatpush1.bf16.msra.mxu0 0
        %2652 = vmatprep.subr.bf16.mxu0 0
        %2653 = vmatpush1.bf16.msra.mxu0 0
        %2654 = vmatprep.subr.bf16.mxu0 0
        %2655 = vmatpush1.bf16.msra.mxu0 0
        %2656 = vmatprep.mubr.bf16.mxu0 0
        %2657 = vmatmul.mubr.bf16.gmra.mrb[0].mxu0 %v2604
        %v2658 = vpop.f32.mrb[0].mxu0
        %v2659 = vadd.f32 0.0, %v2658
        %v2660 = vpop.f32.mrb[0].mxu0
        %v2661 = vadd.f32 0.0, %v2660
        %v2662 = vpop.f32.mrb[0].mxu0
        %v2663 = vadd.f32 0.0, %v2662
        %v2664 = vpop.f32.mrb[0].mxu0
        %v2665 = vadd.f32 0.0, %v2664
        %2666 = vmatprep.mubr.bf16.mxu0 0
        %2667 = vmatmul.mubr.bf16.gmra.mrb[0].mxu0 %v2607
        %v2668 = vpop.f32.mrb[0].mxu0
        %v2669 = vadd.f32 0.0, %v2668
        %v2670 = vpop.f32.mrb[0].mxu0
        %v2671 = vadd.f32 0.0, %v2670
        %v2672 = vpop.f32.mrb[0].mxu0
        %v2673 = vadd.f32 0.0, %v2672
        %v2674 = vpop.f32.mrb[0].mxu0
        %v2675 = vadd.f32 0.0, %v2674
        %2676 = vdwg.mxu0
        %2677 = vmatprep.subr.bf16.mxu0 %v2593
        %2678 = vmatpush1.bf16.msra.mxu0 %v2592
        %2679 = vmatprep.subr.bf16.mxu0 %v2619
        %2680 = vmatpush1.bf16.msra.mxu0 %v2616
        %2681 = vmatprep.subr.bf16.mxu0 0
        %2682 = vmatpush1.bf16.msra.mxu0 0
        %2683 = vmatprep.subr.bf16.mxu0 0
        %2684 = vmatpush1.bf16.msra.mxu0 0
        %2685 = vmatprep.subr.bf16.mxu0 0
        %2686 = vmatpush1.bf16.msra.mxu0 0
        %2687 = vmatprep.subr.bf16.mxu0 0
        %2688 = vmatpush1.bf16.msra.mxu0 0
        %2689 = vmatprep.subr.bf16.mxu0 0
        %2690 = vmatpush1.bf16.msra.mxu0 0
        %2691 = vmatprep.subr.bf16.mxu0 0
        %2692 = vmatpush1.bf16.msra.mxu0 0
        %2693 = vmatprep.subr.bf16.mxu0 0
        %2694 = vmatpush1.bf16.msra.mxu0 0
        %2695 = vmatprep.subr.bf16.mxu0 0
        %2696 = vmatpush1.bf16.msra.mxu0 0
        %2697 = vmatprep.subr.bf16.mxu0 0
        %2698 = vmatpush1.bf16.msra.mxu0 0
        %2699 = vmatprep.subr.bf16.mxu0 0
        %2700 = vmatpush1.bf16.msra.mxu0 0
        %2701 = vmatprep.subr.bf16.mxu0 0
        %2702 = vmatpush1.bf16.msra.mxu0 0
        %2703 = vmatprep.subr.bf16.mxu0 0
        %2704 = vmatpush1.bf16.msra.mxu0 0
        %2705 = vmatprep.subr.bf16.mxu0 0
        %2706 = vmatpush1.bf16.msra.mxu0 0
        %2707 = vmatprep.subr.bf16.mxu0 0
        %2708 = vmatpush1.bf16.msra.mxu0 0
        %2709 = vmatprep.mubr.bf16.mxu0 0
        %2710 = vmatmul.mubr.bf16.gmra.mrb[0].mxu0 %v2604
        %v2711 = vpop.f32.mrb[0].mxu0
        %v2712 = vadd.f32 0.0, %v2711
        %v2713 = vpop.f32.mrb[0].mxu0
        %v2714 = vadd.f32 0.0, %v2713
        %v2715 = vpop.f32.mrb[0].mxu0
        %v2716 = vadd.f32 0.0, %v2715
        %v2717 = vpop.f32.mrb[0].mxu0
        %v2718 = vadd.f32 0.0, %v2717
        %2719 = vmatprep.mubr.bf16.mxu0 0
        %2720 = vmatmul.mubr.bf16.gmra.mrb[0].mxu0 %v2607
        %v2721 = vpop.f32.mrb[0].mxu0
        %v2722 = vadd.f32 0.0, %v2721
        %v2723 = vpop.f32.mrb[0].mxu0
        %v2724 = vadd.f32 0.0, %v2723
        %v2725 = vpop.f32.mrb[0].mxu0
        %v2726 = vadd.f32 0.0, %v2725
        %v2727 = vpop.f32.mrb[0].mxu0
        %v2728 = vadd.f32 0.0, %v2727
        %2729 = vdwg.mxu0
        %2730 = vmatprep.subr.bf16.mxu0 0
        %2731 = vmatpush1.bf16.msra.mxu0 %v2578
        %2732 = vmatprep.subr.bf16.mxu0 0
        %2733 = vmatpush1.bf16.msra.mxu0 %v2622
        %2734 = vmatprep.subr.bf16.mxu0 0
        %2735 = vmatpush1.bf16.msra.mxu0 0
        %2736 = vmatprep.subr.bf16.mxu0 0
        %2737 = vmatpush1.bf16.msra.mxu0 0
        %2738 = vmatprep.subr.bf16.mxu0 0
        %2739 = vmatpush1.bf16.msra.mxu0 0
        %2740 = vmatprep.subr.bf16.mxu0 0
        %2741 = vmatpush1.bf16.msra.mxu0 0
        %2742 = vmatprep.subr.bf16.mxu0 0
        %2743 = vmatpush1.bf16.msra.mxu0 0
        %2744 = vmatprep.subr.bf16.mxu0 0
        %2745 = vmatpush1.bf16.msra.mxu0 0
        %2746 = vmatprep.subr.bf16.mxu0 0
        %2747 = vmatpush1.bf16.msra.mxu0 0
        %2748 = vmatprep.subr.bf16.mxu0 0
        %2749 = vmatpush1.bf16.msra.mxu0 0
        %2750 = vmatprep.subr.bf16.mxu0 0
        %2751 = vmatpush1.bf16.msra.mxu0 0
        %2752 = vmatprep.subr.bf16.mxu0 0
        %2753 = vmatpush1.bf16.msra.mxu0 0
        %2754 = vmatprep.subr.bf16.mxu0 0
        %2755 = vmatpush1.bf16.msra.mxu0 0
        %2756 = vmatprep.subr.bf16.mxu0 0
        %2757 = vmatpush1.bf16.msra.mxu0 0
        %2758 = vmatprep.subr.bf16.mxu0 0
        %2759 = vmatpush1.bf16.msra.mxu0 0
        %2760 = vmatprep.subr.bf16.mxu0 0
        %2761 = vmatpush1.bf16.msra.mxu0 0
        %2762 = vmatprep.mubr.bf16.mxu0 0
        %2763 = vmatmul.mubr.bf16.gmra.mrb[0].mxu0 %v2604
        %v2764 = vpop.f32.mrb[0].mxu0
        %v2765 = vadd.f32 0.0, %v2764
        %v2766 = vpop.f32.mrb[0].mxu0
        %v2767 = vpop.f32.mrb[0].mxu0
        %v2768 = vadd.f32 0.0, %v2767
        %v2769 = vpop.f32.mrb[0].mxu0
        %2770 = vmatprep.mubr.bf16.mxu0 0
        %2771 = vmatmul.mubr.bf16.gmra.mrb[0].mxu0 %v2607
        %v2772 = vpop.f32.mrb[0].mxu0
        %v2773 = vadd.f32 0.0, %v2772
        %v2774 = vpop.f32.mrb[0].mxu0
        %v2775 = vpop.f32.mrb[0].mxu0
        %v2776 = vadd.f32 0.0, %v2775
        %v2777 = vpop.f32.mrb[0].mxu0
        %2778 = vdwg.mxu0
        %v2779 = vadd.f32 %v2434, %v2659
        %v2780 = vadd.f32 %v2436, %v2661
        %v2781 = vadd.f32 %v2487, %v2712
        %v2782 = vadd.f32 %v2489, %v2714
        %v2783 = vadd.f32 %v2540, %v2765
        %v2784 = vadd.f32 %v2438, %v2663
        %v2785 = vadd.f32 %v2440, %v2665
        %v2786 = vadd.f32 %v2491, %v2716
        %v2787 = vadd.f32 %v2493, %v2718
        %v2788 = vadd.f32 %v2543, %v2768
        %v2789 = vadd.f32 %v2444, %v2669
        %v2790 = vadd.f32 %v2446, %v2671
        %v2791 = vadd.f32 %v2497, %v2722
        %v2792 = vadd.f32 %v2499, %v2724
        %v2793 = vadd.f32 %v2548, %v2773
        %v2794 = vadd.f32 %v2448, %v2673
        %v2795 = vadd.f32 %v2450, %v2675
        %v2796 = vadd.f32 %v2501, %v2726
        %v2797 = vadd.f32 %v2503, %v2728
        %v2798 = vadd.f32 %v2551, %v2776
        %v2799 = vtanh.pop %v2779
        %v2800 = vtanh.pop %v2780
        %v2801 = vtanh.pop %v2781
        %v2802 = vtanh.pop %v2782
        %v2803 = vtanh.pop %v2783
        %v2804 = vtanh.pop %v2784
        %v2805 = vtanh.pop %v2785
        %v2806 = vtanh.pop %v2786
        %v2807 = vtanh.pop %v2787
        %v2808 = vtanh.pop %v2788
        %v2809 = vxor.u32 %v2789, 2147483648
        %v2810 = vxor.u32 %v2790, 2147483648
        %v2811 = vxor.u32 %v2791, 2147483648
        %v2812 = vxor.u32 %v2792, 2147483648
        %v2813 = vxor.u32 %v2793, 2147483648
        %v2814 = vxor.u32 %v2794, 2147483648
        %v2815 = vxor.u32 %v2795, 2147483648
        %v2816 = vxor.u32 %v2796, 2147483648
        %v2817 = vxor.u32 %v2797, 2147483648
        %v2818 = vxor.u32 %v2798, 2147483648
        %v2819 = vmul.f32 %v2809, 1.442695
        %v2820 = vpow.pop %v2819
        %v2821 = vmul.f32 %v2810, 1.442695
        %v2822 = vpow.pop %v2821
        %v2823 = vmul.f32 %v2811, 1.442695
        %v2824 = vpow.pop %v2823
        %v2825 = vmul.f32 %v2812, 1.442695
        %v2826 = vpow.pop %v2825
        %v2827 = vmul.f32 %v2813, 1.442695
        %v2828 = vpow.pop %v2827
        %v2829 = vmul.f32 %v2814, 1.442695
        %v2830 = vpow.pop %v2829
        %v2831 = vmul.f32 %v2815, 1.442695
        %v2832 = vpow.pop %v2831
        %v2833 = vmul.f32 %v2816, 1.442695
        %v2834 = vpow.pop %v2833
        %v2835 = vmul.f32 %v2817, 1.442695
        %v2836 = vpow.pop %v2835
        %v2837 = vmul.f32 %v2818, 1.442695
        %v2838 = vpow.pop %v2837
        %v2839 = vadd.f32 %v2820, 1.0
        %v2840 = vadd.f32 %v2822, 1.0
        %v2841 = vadd.f32 %v2824, 1.0
        %v2842 = vadd.f32 %v2826, 1.0
        %v2843 = vadd.f32 %v2828, 1.0
        %v2844 = vadd.f32 %v2830, 1.0
        %v2845 = vadd.f32 %v2832, 1.0
        %v2846 = vadd.f32 %v2834, 1.0
        %v2847 = vadd.f32 %v2836, 1.0
        %v2848 = vadd.f32 %v2838, 1.0
        %v2849 = vrcp.pop %v2839
        %v2850 = vmul.f32 1.0, %v2849
        %v2851 = vrcp.pop %v2840
        %v2852 = vmul.f32 1.0, %v2851
        %v2853 = vrcp.pop %v2841
        %v2854 = vmul.f32 1.0, %v2853
        %v2855 = vrcp.pop %v2842
        %v2856 = vmul.f32 1.0, %v2855
        %v2857 = vrcp.pop %v2843
        %v2858 = vmul.f32 1.0, %v2857
        %v2859 = vrcp.pop %v2844
        %v2860 = vmul.f32 1.0, %v2859
        %v2861 = vrcp.pop %v2845
        %v2862 = vmul.f32 1.0, %v2861
        %v2863 = vrcp.pop %v2846
        %v2864 = vmul.f32 1.0, %v2863
        %v2865 = vrcp.pop %v2847
        %v2866 = vmul.f32 1.0, %v2865
        %v2867 = vrcp.pop %v2848
        %v2868 = vmul.f32 1.0, %v2867
        %v2869 = vmul.f32 %v2799, %v2850
        %v2870 = vmul.f32 %v2800, %v2852
        %v2871 = vmul.f32 %v2801, %v2854
        %v2872 = vmul.f32 %v2802, %v2856
        %v2873 = vmul.f32 %v2803, %v2858
        %v2874 = vmul.f32 %v2804, %v2860
        %v2875 = vmul.f32 %v2805, %v2862
        %v2876 = vmul.f32 %v2806, %v2864
        %v2877 = vmul.f32 %v2807, %v2866
        %v2878 = vmul.f32 %v2808, %v2868
        %v2879 = vpack.c.bf16 %v2874, %v2869
        %v2880 = vpack.c.bf16 %v2875, %v2870
        %v2881 = vpack.c.bf16 %v2876, %v2871
        %v2882 = vpack.c.bf16 %v2877, %v2872
        %v2883 = vpack.c.bf16 %v2878, %v2873
        %v2884 = vld [vmem:[#allocation3] sm:$0xff]
        %v2885 = vld [vmem:[#allocation3 + $0x8] sm:$0xff]
        %v2886 = vld [vmem:[#allocation3 + $0x10] sm:$0xff]
        %v2887 = vld [vmem:[#allocation3 + $0x18] sm:$0xff]
        %v2888 = vld [vmem:[#allocation3 + $0x20] sm:$0xff]
        %v2889 = vld [vmem:[#allocation3 + $0x28] sm:$0xff]
        %v2890 = vld [vmem:[#allocation3 + $0x30] sm:$0xff]
        %v2891 = vld [vmem:[#allocation3 + $0x38] sm:$0xff]
        %v2892 = vld [vmem:[#allocation3 + $0x40] sm:$0xff]
        %v2893 = vld [vmem:[#allocation3 + $0x48] sm:$0xff]
        %s2894 = scalar_lea.vmem %s6, 8
        %v2895 = vld [vmem:[%s2894] sm:$0xf]
        %v2896 = vld [vmem:[%s2894 + $0x4] sm:$0xf]
        %v2899 = vunpack.c.l.b16 %v2895
        %v2900 = vunpack.c.l.b16 %v2896
        %v2901 = vpack.c.b16 %v2900, %v2899
        %v2903 = vsel %vm1682, %v2901, 0
        %2905 = vmatprep.subr.bf16.mxu0 %v2880
        %2906 = vmatpush1.bf16.msra.mxu0 %v2879
        %2907 = vmatprep.subr.bf16.mxu0 0
        %2908 = vmatpush1.bf16.msra.mxu0 0
        %2909 = vmatprep.subr.bf16.mxu0 0
        %2910 = vmatpush1.bf16.msra.mxu0 0
        %2911 = vmatprep.subr.bf16.mxu0 0
        %2912 = vmatpush1.bf16.msra.mxu0 0
        %2913 = vmatprep.subr.bf16.mxu0 0
        %2914 = vmatpush1.bf16.msra.mxu0 0
        %2915 = vmatprep.subr.bf16.mxu0 0
        %2916 = vmatpush1.bf16.msra.mxu0 0
        %2917 = vmatprep.subr.bf16.mxu0 0
        %2918 = vmatpush1.bf16.msra.mxu0 0
        %2919 = vmatprep.subr.bf16.mxu0 0
        %2920 = vmatpush1.bf16.msra.mxu0 0
        %2921 = vmatprep.subr.bf16.mxu0 0
        %2922 = vmatpush1.bf16.msra.mxu0 0
        %2923 = vmatprep.subr.bf16.mxu0 0
        %2924 = vmatpush1.bf16.msra.mxu0 0
        %2925 = vmatprep.subr.bf16.mxu0 0
        %2926 = vmatpush1.bf16.msra.mxu0 0
        %2927 = vmatprep.subr.bf16.mxu0 0
        %2928 = vmatpush1.bf16.msra.mxu0 0
        %2929 = vmatprep.subr.bf16.mxu0 0
        %2930 = vmatpush1.bf16.msra.mxu0 0
        %2931 = vmatprep.subr.bf16.mxu0 0
        %2932 = vmatpush1.bf16.msra.mxu0 0
        %2933 = vmatprep.subr.bf16.mxu0 0
        %2934 = vmatpush1.bf16.msra.mxu0 0
        %2935 = vmatprep.subr.bf16.mxu0 0
        %2936 = vmatpush1.bf16.msra.mxu0 0
        %2937 = vmatprep.mubr.bf16.mxu0 0
        %2938 = vmatmul.mubr.bf16.gmra.mrb[0].mxu0 %v2903
        %v2939 = vpop.f32.mrb[0].mxu0
        %v2940 = vadd.f32 0.0, %v2939
        %v2941 = vpop.f32.mrb[0].mxu0
        %v2942 = vadd.f32 0.0, %v2941
        %v2943 = vpop.f32.mrb[0].mxu0
        %v2944 = vadd.f32 0.0, %v2943
        %v2945 = vpop.f32.mrb[0].mxu0
        %v2946 = vadd.f32 0.0, %v2945
        %2947 = vdwg.mxu0
        %2948 = vmatprep.subr.bf16.mxu0 %v2882
        %2949 = vmatpush1.bf16.msra.mxu0 %v2881
        %2950 = vmatprep.subr.bf16.mxu0 0
        %2951 = vmatpush1.bf16.msra.mxu0 0
        %2952 = vmatprep.subr.bf16.mxu0 0
        %2953 = vmatpush1.bf16.msra.mxu0 0
        %2954 = vmatprep.subr.bf16.mxu0 0
        %2955 = vmatpush1.bf16.msra.mxu0 0
        %2956 = vmatprep.subr.bf16.mxu0 0
        %2957 = vmatpush1.bf16.msra.mxu0 0
        %2958 = vmatprep.subr.bf16.mxu0 0
        %2959 = vmatpush1.bf16.msra.mxu0 0
        %2960 = vmatprep.subr.bf16.mxu0 0
        %2961 = vmatpush1.bf16.msra.mxu0 0
        %2962 = vmatprep.subr.bf16.mxu0 0
        %2963 = vmatpush1.bf16.msra.mxu0 0
        %2964 = vmatprep.subr.bf16.mxu0 0
        %2965 = vmatpush1.bf16.msra.mxu0 0
        %2966 = vmatprep.subr.bf16.mxu0 0
        %2967 = vmatpush1.bf16.msra.mxu0 0
        %2968 = vmatprep.subr.bf16.mxu0 0
        %2969 = vmatpush1.bf16.msra.mxu0 0
        %2970 = vmatprep.subr.bf16.mxu0 0
        %2971 = vmatpush1.bf16.msra.mxu0 0
        %2972 = vmatprep.subr.bf16.mxu0 0
        %2973 = vmatpush1.bf16.msra.mxu0 0
        %2974 = vmatprep.subr.bf16.mxu0 0
        %2975 = vmatpush1.bf16.msra.mxu0 0
        %2976 = vmatprep.subr.bf16.mxu0 0
        %2977 = vmatpush1.bf16.msra.mxu0 0
        %2978 = vmatprep.subr.bf16.mxu0 0
        %2979 = vmatpush1.bf16.msra.mxu0 0
        %2980 = vmatprep.mubr.bf16.mxu0 0
        %2981 = vmatmul.mubr.bf16.gmra.mrb[0].mxu0 %v2903
        %v2982 = vpop.f32.mrb[0].mxu0
        %v2983 = vadd.f32 0.0, %v2982
        %v2984 = vpop.f32.mrb[0].mxu0
        %v2985 = vadd.f32 0.0, %v2984
        %v2986 = vpop.f32.mrb[0].mxu0
        %v2987 = vadd.f32 0.0, %v2986
        %v2988 = vpop.f32.mrb[0].mxu0
        %v2989 = vadd.f32 0.0, %v2988
        %2990 = vdwg.mxu0
        %2991 = vmatprep.subr.bf16.mxu0 0
        %2992 = vmatpush1.bf16.msra.mxu0 %v2883
        %2993 = vmatprep.subr.bf16.mxu0 0
        %2994 = vmatpush1.bf16.msra.mxu0 0
        %2995 = vmatprep.subr.bf16.mxu0 0
        %2996 = vmatpush1.bf16.msra.mxu0 0
        %2997 = vmatprep.subr.bf16.mxu0 0
        %2998 = vmatpush1.bf16.msra.mxu0 0
        %2999 = vmatprep.subr.bf16.mxu0 0
        %3000 = vmatpush1.bf16.msra.mxu0 0
        %3001 = vmatprep.subr.bf16.mxu0 0
        %3002 = vmatpush1.bf16.msra.mxu0 0
        %3003 = vmatprep.subr.bf16.mxu0 0
        %3004 = vmatpush1.bf16.msra.mxu0 0
        %3005 = vmatprep.subr.bf16.mxu0 0
        %3006 = vmatpush1.bf16.msra.mxu0 0
        %3007 = vmatprep.subr.bf16.mxu0 0
        %3008 = vmatpush1.bf16.msra.mxu0 0
        %3009 = vmatprep.subr.bf16.mxu0 0
        %3010 = vmatpush1.bf16.msra.mxu0 0
        %3011 = vmatprep.subr.bf16.mxu0 0
        %3012 = vmatpush1.bf16.msra.mxu0 0
        %3013 = vmatprep.subr.bf16.mxu0 0
        %3014 = vmatpush1.bf16.msra.mxu0 0
        %3015 = vmatprep.subr.bf16.mxu0 0
        %3016 = vmatpush1.bf16.msra.mxu0 0
        %3017 = vmatprep.subr.bf16.mxu0 0
        %3018 = vmatpush1.bf16.msra.mxu0 0
        %3019 = vmatprep.subr.bf16.mxu0 0
        %3020 = vmatpush1.bf16.msra.mxu0 0
        %3021 = vmatprep.subr.bf16.mxu0 0
        %3022 = vmatpush1.bf16.msra.mxu0 0
        %3023 = vmatprep.mubr.bf16.mxu0 0
        %3024 = vmatmul.mubr.bf16.gmra.mrb[0].mxu0 %v2903
        %v3025 = vpop.f32.mrb[0].mxu0
        %v3026 = vadd.f32 0.0, %v3025
        %v3027 = vpop.f32.mrb[0].mxu0
        %v3028 = vpop.f32.mrb[0].mxu0
        %v3029 = vadd.f32 0.0, %v3028
        %v3030 = vpop.f32.mrb[0].mxu0
        %3031 = vdwg.mxu0
        %v3032 = vadd.f32 %v2884, %v2940
        %v3033 = vadd.f32 %v2885, %v2942
        %v3034 = vadd.f32 %v2886, %v2983
        %v3035 = vadd.f32 %v2887, %v2985
        %v3036 = vadd.f32 %v2888, %v3026
        %v3037 = vadd.f32 %v2889, %v2944
        %v3038 = vadd.f32 %v2890, %v2946
        %v3039 = vadd.f32 %v2891, %v2987
        %v3040 = vadd.f32 %v2892, %v2989
        %v3041 = vadd.f32 %v2893, %v3029
        %3042 = vst [vmem:[#allocation3] sm:$0xff] %v3032
        %3043 = vst [vmem:[#allocation3 + $0x8] sm:$0xff] %v3033
        %3044 = vst [vmem:[#allocation3 + $0x10] sm:$0xff] %v3034
        %3045 = vst [vmem:[#allocation3 + $0x18] sm:$0xff] %v3035
        %3046 = vst.msk [vmem:[#allocation3 + $0x20] sm:$0xff] %vm677, %v3036
        %3047 = vst [vmem:[#allocation3 + $0x28] sm:$0xff] %v3037
        %3048 = vst [vmem:[#allocation3 + $0x30] sm:$0xff] %v3038
        %3049 = vst [vmem:[#allocation3 + $0x38] sm:$0xff] %v3039
        %3050 = vst [vmem:[#allocation3 + $0x40] sm:$0xff] %v3040
        %3051 = vst.msk [vmem:[#allocation3 + $0x48] sm:$0xff] %vm677, %v3041
        %s3052 = scalar_lea.vmem %s7, 8
        %v3053 = vld [vmem:[%s3052] sm:$0xf]
        %v3054 = vld [vmem:[%s3052 + $0x4] sm:$0xf]
        %v3057 = vunpack.c.l.b16 %v3053
        %v3058 = vunpack.c.l.b16 %v3054
        %v3059 = vpack.c.b16 %v3058, %v3057
        %v3061 = vsel %vm1682, %v3059, 0
        %3063 = vmatprep.subr.bf16.mxu0 %v2880
        %3064 = vmatpush1.bf16.msra.mxu0 %v2879
        %3065 = vmatprep.subr.bf16.mxu0 0
        %3066 = vmatpush1.bf16.msra.mxu0 0
        %3067 = vmatprep.subr.bf16.mxu0 0
        %3068 = vmatpush1.bf16.msra.mxu0 0
        %3069 = vmatprep.subr.bf16.mxu0 0
        %3070 = vmatpush1.bf16.msra.mxu0 0
        %3071 = vmatprep.subr.bf16.mxu0 0
        %3072 = vmatpush1.bf16.msra.mxu0 0
        %3073 = vmatprep.subr.bf16.mxu0 0
        %3074 = vmatpush1.bf16.msra.mxu0 0
        %3075 = vmatprep.subr.bf16.mxu0 0
        %3076 = vmatpush1.bf16.msra.mxu0 0
        %3077 = vmatprep.subr.bf16.mxu0 0
        %3078 = vmatpush1.bf16.msra.mxu0 0
        %3079 = vmatprep.subr.bf16.mxu0 0
        %3080 = vmatpush1.bf16.msra.mxu0 0
        %3081 = vmatprep.subr.bf16.mxu0 0
        %3082 = vmatpush1.bf16.msra.mxu0 0
        %3083 = vmatprep.subr.bf16.mxu0 0
        %3084 = vmatpush1.bf16.msra.mxu0 0
        %3085 = vmatprep.subr.bf16.mxu0 0
        %3086 = vmatpush1.bf16.msra.mxu0 0
        %3087 = vmatprep.subr.bf16.mxu0 0
        %3088 = vmatpush1.bf16.msra.mxu0 0
        %3089 = vmatprep.subr.bf16.mxu0 0
        %3090 = vmatpush1.bf16.msra.mxu0 0
        %3091 = vmatprep.subr.bf16.mxu0 0
        %3092 = vmatpush1.bf16.msra.mxu0 0
        %3093 = vmatprep.subr.bf16.mxu0 0
        %3094 = vmatpush1.bf16.msra.mxu0 0
        %3095 = vmatprep.mubr.bf16.mxu0 0
        %3096 = vmatmul.mubr.bf16.gmra.mrb[0].mxu0 %v3061
        %v3097 = vpop.f32.mrb[0].mxu0
        %v3098 = vadd.f32 0.0, %v3097
        %v3099 = vpop.f32.mrb[0].mxu0
        %v3100 = vadd.f32 0.0, %v3099
        %v3101 = vpop.f32.mrb[0].mxu0
        %v3102 = vadd.f32 0.0, %v3101
        %v3103 = vpop.f32.mrb[0].mxu0
        %v3104 = vadd.f32 0.0, %v3103
        %3105 = vdwg.mxu0
        %3106 = vmatprep.subr.bf16.mxu0 %v2882
        %3107 = vmatpush1.bf16.msra.mxu0 %v2881
        %3108 = vmatprep.subr.bf16.mxu0 0
        %3109 = vmatpush1.bf16.msra.mxu0 0
        %3110 = vmatprep.subr.bf16.mxu0 0
        %3111 = vmatpush1.bf16.msra.mxu0 0
        %3112 = vmatprep.subr.bf16.mxu0 0
        %3113 = vmatpush1.bf16.msra.mxu0 0
        %3114 = vmatprep.subr.bf16.mxu0 0
        %3115 = vmatpush1.bf16.msra.mxu0 0
        %3116 = vmatprep.subr.bf16.mxu0 0
        %3117 = vmatpush1.bf16.msra.mxu0 0
        %3118 = vmatprep.subr.bf16.mxu0 0
        %3119 = vmatpush1.bf16.msra.mxu0 0
        %3120 = vmatprep.subr.bf16.mxu0 0
        %3121 = vmatpush1.bf16.msra.mxu0 0
        %3122 = vmatprep.subr.bf16.mxu0 0
        %3123 = vmatpush1.bf16.msra.mxu0 0
        %3124 = vmatprep.subr.bf16.mxu0 0
        %3125 = vmatpush1.bf16.msra.mxu0 0
        %3126 = vmatprep.subr.bf16.mxu0 0
        %3127 = vmatpush1.bf16.msra.mxu0 0
        %3128 = vmatprep.subr.bf16.mxu0 0
        %3129 = vmatpush1.bf16.msra.mxu0 0
        %3130 = vmatprep.subr.bf16.mxu0 0
        %3131 = vmatpush1.bf16.msra.mxu0 0
        %3132 = vmatprep.subr.bf16.mxu0 0
        %3133 = vmatpush1.bf16.msra.mxu0 0
        %3134 = vmatprep.subr.bf16.mxu0 0
        %3135 = vmatpush1.bf16.msra.mxu0 0
        %3136 = vmatprep.subr.bf16.mxu0 0
        %3137 = vmatpush1.bf16.msra.mxu0 0
        %3138 = vmatprep.mubr.bf16.mxu0 0
        %3139 = vmatmul.mubr.bf16.gmra.mrb[0].mxu0 %v3061
        %v3140 = vpop.f32.mrb[0].mxu0
        %v3141 = vadd.f32 0.0, %v3140
        %v3142 = vpop.f32.mrb[0].mxu0
        %v3143 = vadd.f32 0.0, %v3142
        %v3144 = vpop.f32.mrb[0].mxu0
        %v3145 = vadd.f32 0.0, %v3144
        %v3146 = vpop.f32.mrb[0].mxu0
        %v3147 = vadd.f32 0.0, %v3146
        %3148 = vdwg.mxu0
        %3149 = vmatprep.subr.bf16.mxu0 0
        %3150 = vmatpush1.bf16.msra.mxu0 %v2883
        %3151 = vmatprep.subr.bf16.mxu0 0
        %3152 = vmatpush1.bf16.msra.mxu0 0
        %3153 = vmatprep.subr.bf16.mxu0 0
        %3154 = vmatpush1.bf16.msra.mxu0 0
        %3155 = vmatprep.subr.bf16.mxu0 0
        %3156 = vmatpush1.bf16.msra.mxu0 0
        %3157 = vmatprep.subr.bf16.mxu0 0
        %3158 = vmatpush1.bf16.msra.mxu0 0
        %3159 = vmatprep.subr.bf16.mxu0 0
        %3160 = vmatpush1.bf16.msra.mxu0 0
        %3161 = vmatprep.subr.bf16.mxu0 0
        %3162 = vmatpush1.bf16.msra.mxu0 0
        %3163 = vmatprep.subr.bf16.mxu0 0
        %3164 = vmatpush1.bf16.msra.mxu0 0
        %3165 = vmatprep.subr.bf16.mxu0 0
        %3166 = vmatpush1.bf16.msra.mxu0 0
        %3167 = vmatprep.subr.bf16.mxu0 0
        %3168 = vmatpush1.bf16.msra.mxu0 0
        %3169 = vmatprep.subr.bf16.mxu0 0
        %3170 = vmatpush1.bf16.msra.mxu0 0
        %3171 = vmatprep.subr.bf16.mxu0 0
        %3172 = vmatpush1.bf16.msra.mxu0 0
        %3173 = vmatprep.subr.bf16.mxu0 0
        %3174 = vmatpush1.bf16.msra.mxu0 0
        %3175 = vmatprep.subr.bf16.mxu0 0
        %3176 = vmatpush1.bf16.msra.mxu0 0
        %3177 = vmatprep.subr.bf16.mxu0 0
        %3178 = vmatpush1.bf16.msra.mxu0 0
        %3179 = vmatprep.subr.bf16.mxu0 0
        %3180 = vmatpush1.bf16.msra.mxu0 0
        %3181 = vmatprep.mubr.bf16.mxu0 0
        %3182 = vmatmul.mubr.bf16.gmra.mrb[0].mxu0 %v3061
        %v3183 = vpop.f32.mrb[0].mxu0
        %v3184 = vadd.f32 0.0, %v3183
        %v3185 = vpop.f32.mrb[0].mxu0
        %v3186 = vpop.f32.mrb[0].mxu0
        %v3187 = vadd.f32 0.0, %v3186
        %v3188 = vpop.f32.mrb[0].mxu0
        %3189 = vdwg.mxu0
        %v3190 = vld [vmem:[#allocation4] sm:$0xff]
        %v3191 = vld [vmem:[#allocation4 + $0x8] sm:$0xff]
        %v3192 = vld [vmem:[#allocation4 + $0x10] sm:$0xff]
        %v3193 = vld [vmem:[#allocation4 + $0x18] sm:$0xff]
        %v3194 = vld [vmem:[#allocation4 + $0x20] sm:$0xff]
        %v3195 = vld [vmem:[#allocation4 + $0x28] sm:$0xff]
        %v3196 = vld [vmem:[#allocation4 + $0x30] sm:$0xff]
        %v3197 = vld [vmem:[#allocation4 + $0x38] sm:$0xff]
        %v3198 = vld [vmem:[#allocation4 + $0x40] sm:$0xff]
        %v3199 = vld [vmem:[#allocation4 + $0x48] sm:$0xff]
        %v3200 = vadd.f32 %v3190, %v3098
        %v3201 = vadd.f32 %v3191, %v3100
        %v3202 = vadd.f32 %v3192, %v3141
        %v3203 = vadd.f32 %v3193, %v3143
        %v3204 = vadd.f32 %v3194, %v3184
        %v3205 = vadd.f32 %v3195, %v3102
        %v3206 = vadd.f32 %v3196, %v3104
        %v3207 = vadd.f32 %v3197, %v3145
        %v3208 = vadd.f32 %v3198, %v3147
        %v3209 = vadd.f32 %v3199, %v3187
        %3210 = vst [vmem:[#allocation4] sm:$0xff] %v3200
        %3211 = vst [vmem:[#allocation4 + $0x8] sm:$0xff] %v3201
        %3212 = vst [vmem:[#allocation4 + $0x10] sm:$0xff] %v3202
        %3213 = vst [vmem:[#allocation4 + $0x18] sm:$0xff] %v3203
        %3214 = vst.msk [vmem:[#allocation4 + $0x20] sm:$0xff] %vm677, %v3204
        %3215 = vst [vmem:[#allocation4 + $0x28] sm:$0xff] %v3205
        %3216 = vst [vmem:[#allocation4 + $0x30] sm:$0xff] %v3206
        %3217 = vst [vmem:[#allocation4 + $0x38] sm:$0xff] %v3207
        %3218 = vst [vmem:[#allocation4 + $0x40] sm:$0xff] %v3208
        %3219 = vst.msk [vmem:[#allocation4 + $0x48] sm:$0xff] %vm677, %v3209
        %v3220 = vld [vmem:[#allocation3] sm:$0xff]
        %v3221 = vld [vmem:[#allocation3 + $0x8] sm:$0xff]
        %v3222 = vld [vmem:[#allocation3 + $0x10] sm:$0xff]
        %v3223 = vld [vmem:[#allocation3 + $0x18] sm:$0xff]
        %v3224 = vld [vmem:[#allocation3 + $0x20] sm:$0xff]
        %v3225 = vld [vmem:[#allocation3 + $0x28] sm:$0xff]
        %v3226 = vld [vmem:[#allocation3 + $0x30] sm:$0xff]
        %v3227 = vld [vmem:[#allocation3 + $0x38] sm:$0xff]
        %v3228 = vld [vmem:[#allocation3 + $0x40] sm:$0xff]
        %v3229 = vld [vmem:[#allocation3 + $0x48] sm:$0xff]
        %v3230 = vsel %vm763, %v3220, 0.0
        %v3231 = vsel %vm764, %v3221, 0.0
        %v3232 = vsel %vm765, %v3222, 0.0
        %v3233 = vsel %vm766, %v3223, 0.0
        %v3234 = vsel %vm767, %v3224, 0.0
        %v3235 = vsel %vm763, %v3225, 0.0
        %v3236 = vsel %vm764, %v3226, 0.0
        %v3237 = vsel %vm765, %v3227, 0.0
        %v3238 = vsel %vm766, %v3228, 0.0
        %v3239 = vsel %vm767, %v3229, 0.0
        %v3240 = vpack.c.bf16 %v3235, %v3230
        %v3241 = vpack.c.bf16 %v3236, %v3231
        %v3242 = vpack.c.bf16 %v3237, %v3232
        %v3243 = vpack.c.bf16 %v3238, %v3233
        %v3244 = vpack.c.bf16 %v3239, %v3234
        %v3250 = vunpack.c.l.b16 %v3240
        %v3251 = vunpack.c.l.b16 %v3241
        %v3252 = vunpack.c.l.b16 %v3242
        %v3253 = vunpack.c.l.b16 %v3243
        %v3254 = vunpack.c.l.b16 %v3244
        %v3255 = vunpack.c.h.b16 %v3240
        %v3256 = vunpack.c.h.b16 %v3241
        %v3257 = vunpack.c.h.b16 %v3242
        %v3258 = vunpack.c.h.b16 %v3243
        %v3259 = vunpack.c.h.b16 %v3244
        %v3260 = vpack.c.b16 %v3251, %v3250
        %v3261 = vpack.c.b16 %v3253, %v3252
        %v3262 = vpack.c.b16 %v3254, %v3254
        %v3263 = vpack.c.b16 %v3256, %v3255
        %v3264 = vpack.c.b16 %v3258, %v3257
        %v3265 = vpack.c.b16 %v3259, %v3259
        %3266 = vrot.lane.b32.xlu0 %v3260, 8
        %v3267 = vpop.permute.xlu0 %3266
        %3268 = vrot.lane.b32.xlu0 %v3261, 8
        %v3269 = vpop.permute.xlu0 %3268
        %3270 = vrot.lane.b32.xlu0 %v3262, 8
        %v3271 = vpop.permute.xlu0 %3270
        %3272 = vrot.lane.b32.xlu0 %v3263, 8
        %v3273 = vpop.permute.xlu0 %3272
        %3274 = vrot.lane.b32.xlu0 %v3264, 8
        %v3275 = vpop.permute.xlu0 %3274
        %3276 = vrot.lane.b32.xlu0 %v3265, 8
        %v3277 = vpop.permute.xlu0 %3276
        %v3278 = vrot.slane %v3267, 4
        %v3279 = vrot.slane %v3269, 4
        %v3280 = vrot.slane %v3273, 4
        %v3281 = vrot.slane %v3275, 4
        %v3282 = vsel %vm690, %v3278, %v3267
        %v3283 = vsel %vm692, %v3278, %v3279
        %v3284 = vsel %vm690, %v3283, %v3269
        %v3285 = vsel %vm690, %v3279, %v3271
        %v3286 = vsel %vm690, %v3280, %v3273
        %v3287 = vsel %vm692, %v3280, %v3281
        %v3288 = vsel %vm690, %v3287, %v3275
        %v3289 = vsel %vm690, %v3281, %v3277
        %3296 = vst.msk [vmem:[#allocation2] sm:$0xff] %vm700, %v3282
        %3297 = vst [vmem:[#allocation2 + $0x8] sm:$0xff] %v3284
        %3298 = vst.msk [vmem:[#allocation2 + $0x10] sm:$0xf] %vm836, %v3285
        %3299 = vst.msk [vmem:[#allocation2 + $0x14] sm:$0xff] %vm700, %v3286
        %3300 = vst [vmem:[#allocation2 + $0x1c] sm:$0xff] %v3288
        %3301 = vst.msk [vmem:[#allocation2 + $0x24] sm:$0xf] %vm836, %v3289
        %s3302 = scalar_lea.vmem %s5, 96
        %v3303 = vld [vmem:[%s3302] sm:$0xf]
        %v3304 = vld [vmem:[%s3302 + $0x4] sm:$0xf]
        %v3305 = vld [vmem:[%s3302 + $0x8] sm:$0xf]
        %v3306 = vld [vmem:[%s3302 + $0xc] sm:$0xf]
        %v3307 = vld [vmem:[#allocation2] sm:$0xff]
        %v3308 = vld [vmem:[#allocation2 + $0x8] sm:$0xff]
        %v3309 = vld [vmem:[#allocation2 + $0x10] sm:$0xf]
        %v3310 = vld [vmem:[#allocation2 + $0x14] sm:$0xff]
        %v3311 = vld [vmem:[#allocation2 + $0x1c] sm:$0xff]
        %v3312 = vld [vmem:[#allocation2 + $0x24] sm:$0xf]
        %v3313 = vld [vmem:[#allocation2 + $0x28] sm:$0xff]
        %v3314 = vld [vmem:[#allocation2 + $0x30] sm:$0xff]
        %v3315 = vld [vmem:[#allocation2 + $0x38] sm:$0xf]
        %s3316 = scalar_lea.vmem %s5, 112
        %v3317 = vld [vmem:[%s3316] sm:$0xf]
        %v3318 = vld [vmem:[%s3316 + $0x4] sm:$0xf]
        %v3319 = vld [vmem:[%s3316 + $0x8] sm:$0xf]
        %v3320 = vld [vmem:[%s3316 + $0xc] sm:$0xf]
        %v3325 = vunpack.c.l.b16 %v3317
        %v3326 = vunpack.c.l.b16 %v3318
        %v3327 = vunpack.c.l.b16 %v3319
        %v3328 = vunpack.c.l.b16 %v3320
        %v3329 = vpack.c.b16 %v3326, %v3325
        %v3330 = vpack.c.b16 %v3328, %v3327
        %v3340 = vunpack.c.l.b16 %v3307
        %v3341 = vunpack.c.h.b16 %v3307
        %v3342 = vunpack.c.l.b16 %v3308
        %v3343 = vunpack.c.h.b16 %v3308
        %v3344 = vunpack.c.l.b16 %v3309
        %v3345 = vunpack.c.l.b16 %v3310
        %v3346 = vunpack.c.h.b16 %v3310
        %v3347 = vunpack.c.l.b16 %v3311
        %v3348 = vunpack.c.h.b16 %v3311
        %v3349 = vunpack.c.l.b16 %v3312
        %v3350 = vunpack.c.l.b16 %v3313
        %v3351 = vunpack.c.h.b16 %v3313
        %v3352 = vunpack.c.l.b16 %v3314
        %v3353 = vunpack.c.h.b16 %v3314
        %v3354 = vunpack.c.l.b16 %v3315
        %v3355 = vpack.c.b16 %v3345, %v3340
        %v3356 = vpack.c.b16 %v3346, %v3341
        %v3357 = vpack.c.b16 %v3347, %v3342
        %v3358 = vpack.c.b16 %v3348, %v3343
        %v3359 = vpack.c.b16 %v3349, %v3344
        %v3360 = vpack.c.b16 %v3350, %v3350
        %v3361 = vpack.c.b16 %v3351, %v3351
        %v3362 = vpack.c.b16 %v3352, %v3352
        %v3363 = vpack.c.b16 %v3353, %v3353
        %v3364 = vpack.c.b16 %v3354, %v3354
        %3365 = vrot.lane.b32.xlu0 %v3355, 120
        %v3366 = vpop.permute.xlu0 %3365
        %3367 = vrot.lane.b32.xlu0 %v3356, 120
        %v3368 = vpop.permute.xlu0 %3367
        %3369 = vrot.lane.b32.xlu0 %v3357, 120
        %v3370 = vpop.permute.xlu0 %3369
        %3371 = vrot.lane.b32.xlu0 %v3358, 120
        %v3372 = vpop.permute.xlu0 %3371
        %3373 = vrot.lane.b32.xlu0 %v3359, 120
        %v3374 = vpop.permute.xlu0 %3373
        %3375 = vrot.lane.b32.xlu0 %v3360, 120
        %v3376 = vpop.permute.xlu0 %3375
        %3377 = vrot.lane.b32.xlu0 %v3361, 120
        %v3378 = vpop.permute.xlu0 %3377
        %3379 = vrot.lane.b32.xlu0 %v3362, 120
        %v3380 = vpop.permute.xlu0 %3379
        %3381 = vrot.lane.b32.xlu0 %v3363, 120
        %v3382 = vpop.permute.xlu0 %3381
        %3383 = vrot.lane.b32.xlu0 %v3364, 120
        %v3384 = vpop.permute.xlu0 %3383
        %v3385 = vsel %vm923, %v3366, %v3368
        %v3386 = vsel %vm923, %v3368, %v3370
        %v3387 = vsel %vm923, %v3370, %v3372
        %v3388 = vsel %vm923, %v3372, %v3374
        %v3389 = vsel %vm923, %v3376, %v3378
        %v3390 = vsel %vm923, %v3378, %v3380
        %v3391 = vsel %vm923, %v3380, %v3382
        %v3392 = vsel %vm923, %v3382, %v3384
        %v3399 = vsel %vm937, %v3329, 0
        %v3402 = vsel %vm937, %v3330, 0
        %v3405 = vsel %vm944, %v3389, 0
        %v3408 = vsel %vm944, %v3390, 0
        %v3411 = vsel %vm944, %v3391, 0
        %v3414 = vsel %vm944, %v3392, 0
        %v3417 = vsel %vm944, %v3384, 0
        %3419 = vmatprep.subr.bf16.mxu0 %v3386
        %3420 = vmatpush1.bf16.msra.mxu0 %v3385
        %3421 = vmatprep.subr.bf16.mxu0 %v3408
        %3422 = vmatpush1.bf16.msra.mxu0 %v3405
        %3423 = vmatprep.subr.bf16.mxu0 0
        %3424 = vmatpush1.bf16.msra.mxu0 0
        %3425 = vmatprep.subr.bf16.mxu0 0
        %3426 = vmatpush1.bf16.msra.mxu0 0
        %3427 = vmatprep.subr.bf16.mxu0 0
        %3428 = vmatpush1.bf16.msra.mxu0 0
        %3429 = vmatprep.subr.bf16.mxu0 0
        %3430 = vmatpush1.bf16.msra.mxu0 0
        %3431 = vmatprep.subr.bf16.mxu0 0
        %3432 = vmatpush1.bf16.msra.mxu0 0
        %3433 = vmatprep.subr.bf16.mxu0 0
        %3434 = vmatpush1.bf16.msra.mxu0 0
        %3435 = vmatprep.subr.bf16.mxu0 0
        %3436 = vmatpush1.bf16.msra.mxu0 0
        %3437 = vmatprep.subr.bf16.mxu0 0
        %3438 = vmatpush1.bf16.msra.mxu0 0
        %3439 = vmatprep.subr.bf16.mxu0 0
        %3440 = vmatpush1.bf16.msra.mxu0 0
        %3441 = vmatprep.subr.bf16.mxu0 0
        %3442 = vmatpush1.bf16.msra.mxu0 0
        %3443 = vmatprep.subr.bf16.mxu0 0
        %3444 = vmatpush1.bf16.msra.mxu0 0
        %3445 = vmatprep.subr.bf16.mxu0 0
        %3446 = vmatpush1.bf16.msra.mxu0 0
        %3447 = vmatprep.subr.bf16.mxu0 0
        %3448 = vmatpush1.bf16.msra.mxu0 0
        %3449 = vmatprep.subr.bf16.mxu0 0
        %3450 = vmatpush1.bf16.msra.mxu0 0
        %3451 = vmatprep.mubr.bf16.mxu0 0
        %3452 = vmatmul.mubr.bf16.gmra.mrb[0].mxu0 %v3399
        %v3453 = vpop.f32.mrb[0].mxu0
        %v3454 = vadd.f32 0.0, %v3453
        %v3455 = vpop.f32.mrb[0].mxu0
        %v3456 = vadd.f32 0.0, %v3455
        %v3457 = vpop.f32.mrb[0].mxu0
        %v3458 = vadd.f32 0.0, %v3457
        %v3459 = vpop.f32.mrb[0].mxu0
        %v3460 = vadd.f32 0.0, %v3459
        %3461 = vmatprep.mubr.bf16.mxu0 0
        %3462 = vmatmul.mubr.bf16.gmra.mrb[0].mxu0 %v3402
        %v3463 = vpop.f32.mrb[0].mxu0
        %v3464 = vadd.f32 0.0, %v3463
        %v3465 = vpop.f32.mrb[0].mxu0
        %v3466 = vadd.f32 0.0, %v3465
        %v3467 = vpop.f32.mrb[0].mxu0
        %v3468 = vadd.f32 0.0, %v3467
        %v3469 = vpop.f32.mrb[0].mxu0
        %v3470 = vadd.f32 0.0, %v3469
        %3471 = vdwg.mxu0
        %3472 = vmatprep.subr.bf16.mxu0 %v3388
        %3473 = vmatpush1.bf16.msra.mxu0 %v3387
        %3474 = vmatprep.subr.bf16.mxu0 %v3414
        %3475 = vmatpush1.bf16.msra.mxu0 %v3411
        %3476 = vmatprep.subr.bf16.mxu0 0
        %3477 = vmatpush1.bf16.msra.mxu0 0
        %3478 = vmatprep.subr.bf16.mxu0 0
        %3479 = vmatpush1.bf16.msra.mxu0 0
        %3480 = vmatprep.subr.bf16.mxu0 0
        %3481 = vmatpush1.bf16.msra.mxu0 0
        %3482 = vmatprep.subr.bf16.mxu0 0
        %3483 = vmatpush1.bf16.msra.mxu0 0
        %3484 = vmatprep.subr.bf16.mxu0 0
        %3485 = vmatpush1.bf16.msra.mxu0 0
        %3486 = vmatprep.subr.bf16.mxu0 0
        %3487 = vmatpush1.bf16.msra.mxu0 0
        %3488 = vmatprep.subr.bf16.mxu0 0
        %3489 = vmatpush1.bf16.msra.mxu0 0
        %3490 = vmatprep.subr.bf16.mxu0 0
        %3491 = vmatpush1.bf16.msra.mxu0 0
        %3492 = vmatprep.subr.bf16.mxu0 0
        %3493 = vmatpush1.bf16.msra.mxu0 0
        %3494 = vmatprep.subr.bf16.mxu0 0
        %3495 = vmatpush1.bf16.msra.mxu0 0
        %3496 = vmatprep.subr.bf16.mxu0 0
        %3497 = vmatpush1.bf16.msra.mxu0 0
        %3498 = vmatprep.subr.bf16.mxu0 0
        %3499 = vmatpush1.bf16.msra.mxu0 0
        %3500 = vmatprep.subr.bf16.mxu0 0
        %3501 = vmatpush1.bf16.msra.mxu0 0
        %3502 = vmatprep.subr.bf16.mxu0 0
        %3503 = vmatpush1.bf16.msra.mxu0 0
        %3504 = vmatprep.mubr.bf16.mxu0 0
        %3505 = vmatmul.mubr.bf16.gmra.mrb[0].mxu0 %v3399
        %v3506 = vpop.f32.mrb[0].mxu0
        %v3507 = vadd.f32 0.0, %v3506
        %v3508 = vpop.f32.mrb[0].mxu0
        %v3509 = vadd.f32 0.0, %v3508
        %v3510 = vpop.f32.mrb[0].mxu0
        %v3511 = vadd.f32 0.0, %v3510
        %v3512 = vpop.f32.mrb[0].mxu0
        %v3513 = vadd.f32 0.0, %v3512
        %3514 = vmatprep.mubr.bf16.mxu0 0
        %3515 = vmatmul.mubr.bf16.gmra.mrb[0].mxu0 %v3402
        %v3516 = vpop.f32.mrb[0].mxu0
        %v3517 = vadd.f32 0.0, %v3516
        %v3518 = vpop.f32.mrb[0].mxu0
        %v3519 = vadd.f32 0.0, %v3518
        %v3520 = vpop.f32.mrb[0].mxu0
        %v3521 = vadd.f32 0.0, %v3520
        %v3522 = vpop.f32.mrb[0].mxu0
        %v3523 = vadd.f32 0.0, %v3522
        %3524 = vdwg.mxu0
        %3525 = vmatprep.subr.bf16.mxu0 0
        %3526 = vmatpush1.bf16.msra.mxu0 %v3374
        %3527 = vmatprep.subr.bf16.mxu0 0
        %3528 = vmatpush1.bf16.msra.mxu0 %v3417
        %3529 = vmatprep.subr.bf16.mxu0 0
        %3530 = vmatpush1.bf16.msra.mxu0 0
        %3531 = vmatprep.subr.bf16.mxu0 0
        %3532 = vmatpush1.bf16.msra.mxu0 0
        %3533 = vmatprep.subr.bf16.mxu0 0
        %3534 = vmatpush1.bf16.msra.mxu0 0
        %3535 = vmatprep.subr.bf16.mxu0 0
        %3536 = vmatpush1.bf16.msra.mxu0 0
        %3537 = vmatprep.subr.bf16.mxu0 0
        %3538 = vmatpush1.bf16.msra.mxu0 0
        %3539 = vmatprep.subr.bf16.mxu0 0
        %3540 = vmatpush1.bf16.msra.mxu0 0
        %3541 = vmatprep.subr.bf16.mxu0 0
        %3542 = vmatpush1.bf16.msra.mxu0 0
        %3543 = vmatprep.subr.bf16.mxu0 0
        %3544 = vmatpush1.bf16.msra.mxu0 0
        %3545 = vmatprep.subr.bf16.mxu0 0
        %3546 = vmatpush1.bf16.msra.mxu0 0
        %3547 = vmatprep.subr.bf16.mxu0 0
        %3548 = vmatpush1.bf16.msra.mxu0 0
        %3549 = vmatprep.subr.bf16.mxu0 0
        %3550 = vmatpush1.bf16.msra.mxu0 0
        %3551 = vmatprep.subr.bf16.mxu0 0
        %3552 = vmatpush1.bf16.msra.mxu0 0
        %3553 = vmatprep.subr.bf16.mxu0 0
        %3554 = vmatpush1.bf16.msra.mxu0 0
        %3555 = vmatprep.subr.bf16.mxu0 0
        %3556 = vmatpush1.bf16.msra.mxu0 0
        %3557 = vmatprep.mubr.bf16.mxu0 0
        %3558 = vmatmul.mubr.bf16.gmra.mrb[0].mxu0 %v3399
        %v3559 = vpop.f32.mrb[0].mxu0
        %v3560 = vadd.f32 0.0, %v3559
        %v3561 = vpop.f32.mrb[0].mxu0
        %v3562 = vpop.f32.mrb[0].mxu0
        %v3563 = vadd.f32 0.0, %v3562
        %v3564 = vpop.f32.mrb[0].mxu0
        %3565 = vmatprep.mubr.bf16.mxu0 0
        %3566 = vmatmul.mubr.bf16.gmra.mrb[0].mxu0 %v3402
        %v3567 = vpop.f32.mrb[0].mxu0
        %v3568 = vadd.f32 0.0, %v3567
        %v3569 = vpop.f32.mrb[0].mxu0
        %v3570 = vpop.f32.mrb[0].mxu0
        %v3571 = vadd.f32 0.0, %v3570
        %v3572 = vpop.f32.mrb[0].mxu0
        %3573 = vdwg.mxu0
        %v3578 = vunpack.c.l.b16 %v3303
        %v3579 = vunpack.c.l.b16 %v3304
        %v3580 = vunpack.c.l.b16 %v3305
        %v3581 = vunpack.c.l.b16 %v3306
        %v3582 = vpack.c.b16 %v3579, %v3578
        %v3583 = vpack.c.b16 %v3581, %v3580
        %3584 = vrot.lane.b32.xlu0 %v3355, 124
        %v3585 = vpop.permute.xlu0 %3584
        %3586 = vrot.lane.b32.xlu0 %v3356, 124
        %v3587 = vpop.permute.xlu0 %3586
        %3588 = vrot.lane.b32.xlu0 %v3357, 124
        %v3589 = vpop.permute.xlu0 %3588
        %3590 = vrot.lane.b32.xlu0 %v3358, 124
        %v3591 = vpop.permute.xlu0 %3590
        %3592 = vrot.lane.b32.xlu0 %v3359, 124
        %v3593 = vpop.permute.xlu0 %3592
        %3594 = vrot.lane.b32.xlu0 %v3360, 124
        %v3595 = vpop.permute.xlu0 %3594
        %3596 = vrot.lane.b32.xlu0 %v3361, 124
        %v3597 = vpop.permute.xlu0 %3596
        %3598 = vrot.lane.b32.xlu0 %v3362, 124
        %v3599 = vpop.permute.xlu0 %3598
        %3600 = vrot.lane.b32.xlu0 %v3363, 124
        %v3601 = vpop.permute.xlu0 %3600
        %3602 = vrot.lane.b32.xlu0 %v3364, 124
        %v3603 = vpop.permute.xlu0 %3602
        %vm3604 = vcmask 1014784
        %v3605 = vsel %vm3604, %v3585, %v3587
        %v3606 = vsel %vm3604, %v3587, %v3589
        %v3607 = vsel %vm3604, %v3589, %v3591
        %v3608 = vsel %vm3604, %v3591, %v3593
        %v3609 = vsel %vm3604, %v3595, %v3597
        %v3610 = vsel %vm3604, %v3597, %v3599
        %v3611 = vsel %vm3604, %v3599, %v3601
        %v3612 = vsel %vm3604, %v3601, %v3603
        %v3619 = vsel %vm937, %v3582, 0
        %v3622 = vsel %vm937, %v3583, 0
        %v3625 = vsel %vm944, %v3609, 0
        %v3628 = vsel %vm944, %v3610, 0
        %v3631 = vsel %vm944, %v3611, 0
        %v3634 = vsel %vm944, %v3612, 0
        %v3637 = vsel %vm944, %v3603, 0
        %3639 = vmatprep.subr.bf16.mxu0 %v3606
        %3640 = vmatpush1.bf16.msra.mxu0 %v3605
        %3641 = vmatprep.subr.bf16.mxu0 %v3628
        %3642 = vmatpush1.bf16.msra.mxu0 %v3625
        %3643 = vmatprep.subr.bf16.mxu0 0
        %3644 = vmatpush1.bf16.msra.mxu0 0
        %3645 = vmatprep.subr.bf16.mxu0 0
        %3646 = vmatpush1.bf16.msra.mxu0 0
        %3647 = vmatprep.subr.bf16.mxu0 0
        %3648 = vmatpush1.bf16.msra.mxu0 0
        %3649 = vmatprep.subr.bf16.mxu0 0
        %3650 = vmatpush1.bf16.msra.mxu0 0
        %3651 = vmatprep.subr.bf16.mxu0 0
        %3652 = vmatpush1.bf16.msra.mxu0 0
        %3653 = vmatprep.subr.bf16.mxu0 0
        %3654 = vmatpush1.bf16.msra.mxu0 0
        %3655 = vmatprep.subr.bf16.mxu0 0
        %3656 = vmatpush1.bf16.msra.mxu0 0
        %3657 = vmatprep.subr.bf16.mxu0 0
        %3658 = vmatpush1.bf16.msra.mxu0 0
        %3659 = vmatprep.subr.bf16.mxu0 0
        %3660 = vmatpush1.bf16.msra.mxu0 0
        %3661 = vmatprep.subr.bf16.mxu0 0
        %3662 = vmatpush1.bf16.msra.mxu0 0
        %3663 = vmatprep.subr.bf16.mxu0 0
        %3664 = vmatpush1.bf16.msra.mxu0 0
        %3665 = vmatprep.subr.bf16.mxu0 0
        %3666 = vmatpush1.bf16.msra.mxu0 0
        %3667 = vmatprep.subr.bf16.mxu0 0
        %3668 = vmatpush1.bf16.msra.mxu0 0
        %3669 = vmatprep.subr.bf16.mxu0 0
        %3670 = vmatpush1.bf16.msra.mxu0 0
        %3671 = vmatprep.mubr.bf16.mxu0 0
        %3672 = vmatmul.mubr.bf16.gmra.mrb[0].mxu0 %v3619
        %v3673 = vpop.f32.mrb[0].mxu0
        %v3674 = vadd.f32 %v3454, %v3673
        %v3675 = vpop.f32.mrb[0].mxu0
        %v3676 = vadd.f32 %v3456, %v3675
        %v3677 = vpop.f32.mrb[0].mxu0
        %v3678 = vadd.f32 %v3458, %v3677
        %v3679 = vpop.f32.mrb[0].mxu0
        %v3680 = vadd.f32 %v3460, %v3679
        %3681 = vmatprep.mubr.bf16.mxu0 0
        %3682 = vmatmul.mubr.bf16.gmra.mrb[0].mxu0 %v3622
        %v3683 = vpop.f32.mrb[0].mxu0
        %v3684 = vadd.f32 %v3464, %v3683
        %v3685 = vpop.f32.mrb[0].mxu0
        %v3686 = vadd.f32 %v3466, %v3685
        %v3687 = vpop.f32.mrb[0].mxu0
        %v3688 = vadd.f32 %v3468, %v3687
        %v3689 = vpop.f32.mrb[0].mxu0
        %v3690 = vadd.f32 %v3470, %v3689
        %3691 = vdwg.mxu0
        %3692 = vmatprep.subr.bf16.mxu0 %v3608
        %3693 = vmatpush1.bf16.msra.mxu0 %v3607
        %3694 = vmatprep.subr.bf16.mxu0 %v3634
        %3695 = vmatpush1.bf16.msra.mxu0 %v3631
        %3696 = vmatprep.subr.bf16.mxu0 0
        %3697 = vmatpush1.bf16.msra.mxu0 0
        %3698 = vmatprep.subr.bf16.mxu0 0
        %3699 = vmatpush1.bf16.msra.mxu0 0
        %3700 = vmatprep.subr.bf16.mxu0 0
        %3701 = vmatpush1.bf16.msra.mxu0 0
        %3702 = vmatprep.subr.bf16.mxu0 0
        %3703 = vmatpush1.bf16.msra.mxu0 0
        %3704 = vmatprep.subr.bf16.mxu0 0
        %3705 = vmatpush1.bf16.msra.mxu0 0
        %3706 = vmatprep.subr.bf16.mxu0 0
        %3707 = vmatpush1.bf16.msra.mxu0 0
        %3708 = vmatprep.subr.bf16.mxu0 0
        %3709 = vmatpush1.bf16.msra.mxu0 0
        %3710 = vmatprep.subr.bf16.mxu0 0
        %3711 = vmatpush1.bf16.msra.mxu0 0
        %3712 = vmatprep.subr.bf16.mxu0 0
        %3713 = vmatpush1.bf16.msra.mxu0 0
        %3714 = vmatprep.subr.bf16.mxu0 0
        %3715 = vmatpush1.bf16.msra.mxu0 0
        %3716 = vmatprep.subr.bf16.mxu0 0
        %3717 = vmatpush1.bf16.msra.mxu0 0
        %3718 = vmatprep.subr.bf16.mxu0 0
        %3719 = vmatpush1.bf16.msra.mxu0 0
        %3720 = vmatprep.subr.bf16.mxu0 0
        %3721 = vmatpush1.bf16.msra.mxu0 0
        %3722 = vmatprep.subr.bf16.mxu0 0
        %3723 = vmatpush1.bf16.msra.mxu0 0
        %3724 = vmatprep.mubr.bf16.mxu0 0
        %3725 = vmatmul.mubr.bf16.gmra.mrb[0].mxu0 %v3619
        %v3726 = vpop.f32.mrb[0].mxu0
        %v3727 = vadd.f32 %v3507, %v3726
        %v3728 = vpop.f32.mrb[0].mxu0
        %v3729 = vadd.f32 %v3509, %v3728
        %v3730 = vpop.f32.mrb[0].mxu0
        %v3731 = vadd.f32 %v3511, %v3730
        %v3732 = vpop.f32.mrb[0].mxu0
        %v3733 = vadd.f32 %v3513, %v3732
        %3734 = vmatprep.mubr.bf16.mxu0 0
        %3735 = vmatmul.mubr.bf16.gmra.mrb[0].mxu0 %v3622
        %v3736 = vpop.f32.mrb[0].mxu0
        %v3737 = vadd.f32 %v3517, %v3736
        %v3738 = vpop.f32.mrb[0].mxu0
        %v3739 = vadd.f32 %v3519, %v3738
        %v3740 = vpop.f32.mrb[0].mxu0
        %v3741 = vadd.f32 %v3521, %v3740
        %v3742 = vpop.f32.mrb[0].mxu0
        %v3743 = vadd.f32 %v3523, %v3742
        %3744 = vdwg.mxu0
        %3745 = vmatprep.subr.bf16.mxu0 0
        %3746 = vmatpush1.bf16.msra.mxu0 %v3593
        %3747 = vmatprep.subr.bf16.mxu0 0
        %3748 = vmatpush1.bf16.msra.mxu0 %v3637
        %3749 = vmatprep.subr.bf16.mxu0 0
        %3750 = vmatpush1.bf16.msra.mxu0 0
        %3751 = vmatprep.subr.bf16.mxu0 0
        %3752 = vmatpush1.bf16.msra.mxu0 0
        %3753 = vmatprep.subr.bf16.mxu0 0
        %3754 = vmatpush1.bf16.msra.mxu0 0
        %3755 = vmatprep.subr.bf16.mxu0 0
        %3756 = vmatpush1.bf16.msra.mxu0 0
        %3757 = vmatprep.subr.bf16.mxu0 0
        %3758 = vmatpush1.bf16.msra.mxu0 0
        %3759 = vmatprep.subr.bf16.mxu0 0
        %3760 = vmatpush1.bf16.msra.mxu0 0
        %3761 = vmatprep.subr.bf16.mxu0 0
        %3762 = vmatpush1.bf16.msra.mxu0 0
        %3763 = vmatprep.subr.bf16.mxu0 0
        %3764 = vmatpush1.bf16.msra.mxu0 0
        %3765 = vmatprep.subr.bf16.mxu0 0
        %3766 = vmatpush1.bf16.msra.mxu0 0
        %3767 = vmatprep.subr.bf16.mxu0 0
        %3768 = vmatpush1.bf16.msra.mxu0 0
        %3769 = vmatprep.subr.bf16.mxu0 0
        %3770 = vmatpush1.bf16.msra.mxu0 0
        %3771 = vmatprep.subr.bf16.mxu0 0
        %3772 = vmatpush1.bf16.msra.mxu0 0
        %3773 = vmatprep.subr.bf16.mxu0 0
        %3774 = vmatpush1.bf16.msra.mxu0 0
        %3775 = vmatprep.subr.bf16.mxu0 0
        %3776 = vmatpush1.bf16.msra.mxu0 0
        %3777 = vmatprep.mubr.bf16.mxu0 0
        %3778 = vmatmul.mubr.bf16.gmra.mrb[0].mxu0 %v3619
        %v3779 = vpop.f32.mrb[0].mxu0
        %v3780 = vadd.f32 %v3560, %v3779
        %v3781 = vpop.f32.mrb[0].mxu0
        %v3782 = vpop.f32.mrb[0].mxu0
        %v3783 = vadd.f32 %v3563, %v3782
        %v3784 = vpop.f32.mrb[0].mxu0
        %3785 = vmatprep.mubr.bf16.mxu0 0
        %3786 = vmatmul.mubr.bf16.gmra.mrb[0].mxu0 %v3622
        %v3787 = vpop.f32.mrb[0].mxu0
        %v3788 = vadd.f32 %v3568, %v3787
        %v3789 = vpop.f32.mrb[0].mxu0
        %v3790 = vpop.f32.mrb[0].mxu0
        %v3791 = vadd.f32 %v3571, %v3790
        %v3792 = vpop.f32.mrb[0].mxu0
        %3793 = vdwg.mxu0
        %s3794 = scalar_lea.vmem %s5, 128
        %v3795 = vld [vmem:[%s3794] sm:$0xf]
        %v3796 = vld [vmem:[%s3794 + $0x4] sm:$0xf]
        %v3797 = vld [vmem:[%s3794 + $0x8] sm:$0xf]
        %v3798 = vld [vmem:[%s3794 + $0xc] sm:$0xf]
        %v3803 = vunpack.c.l.b16 %v3795
        %v3804 = vunpack.c.l.b16 %v3796
        %v3805 = vunpack.c.l.b16 %v3797
        %v3806 = vunpack.c.l.b16 %v3798
        %v3807 = vpack.c.b16 %v3804, %v3803
        %v3808 = vpack.c.b16 %v3806, %v3805
        %3809 = vrot.lane.b32.xlu0 %v3355, 116
        %v3810 = vpop.permute.xlu0 %3809
        %3811 = vrot.lane.b32.xlu0 %v3356, 116
        %v3812 = vpop.permute.xlu0 %3811
        %3813 = vrot.lane.b32.xlu0 %v3357, 116
        %v3814 = vpop.permute.xlu0 %3813
        %3815 = vrot.lane.b32.xlu0 %v3358, 116
        %v3816 = vpop.permute.xlu0 %3815
        %3817 = vrot.lane.b32.xlu0 %v3359, 116
        %v3818 = vpop.permute.xlu0 %3817
        %3819 = vrot.lane.b32.xlu0 %v3360, 116
        %v3820 = vpop.permute.xlu0 %3819
        %3821 = vrot.lane.b32.xlu0 %v3361, 116
        %v3822 = vpop.permute.xlu0 %3821
        %3823 = vrot.lane.b32.xlu0 %v3362, 116
        %v3824 = vpop.permute.xlu0 %3823
        %3825 = vrot.lane.b32.xlu0 %v3363, 116
        %v3826 = vpop.permute.xlu0 %3825
        %3827 = vrot.lane.b32.xlu0 %v3364, 116
        %v3828 = vpop.permute.xlu0 %3827
        %vm3829 = vcmask 949248
        %v3830 = vsel %vm3829, %v3810, %v3812
        %v3831 = vsel %vm3829, %v3812, %v3814
        %v3832 = vsel %vm3829, %v3814, %v3816
        %v3833 = vsel %vm3829, %v3816, %v3818
        %v3834 = vsel %vm3829, %v3820, %v3822
        %v3835 = vsel %vm3829, %v3822, %v3824
        %v3836 = vsel %vm3829, %v3824, %v3826
        %v3837 = vsel %vm3829, %v3826, %v3828
        %v3844 = vsel %vm937, %v3807, 0
        %v3847 = vsel %vm937, %v3808, 0
        %v3850 = vsel %vm944, %v3834, 0
        %v3853 = vsel %vm944, %v3835, 0
        %v3856 = vsel %vm944, %v3836, 0
        %v3859 = vsel %vm944, %v3837, 0
        %v3862 = vsel %vm944, %v3828, 0
        %3864 = vmatprep.subr.bf16.mxu0 %v3831
        %3865 = vmatpush1.bf16.msra.mxu0 %v3830
        %3866 = vmatprep.subr.bf16.mxu0 %v3853
        %3867 = vmatpush1.bf16.msra.mxu0 %v3850
        %3868 = vmatprep.subr.bf16.mxu0 0
        %3869 = vmatpush1.bf16.msra.mxu0 0
        %3870 = vmatprep.subr.bf16.mxu0 0
        %3871 = vmatpush1.bf16.msra.mxu0 0
        %3872 = vmatprep.subr.bf16.mxu0 0
        %3873 = vmatpush1.bf16.msra.mxu0 0
        %3874 = vmatprep.subr.bf16.mxu0 0
        %3875 = vmatpush1.bf16.msra.mxu0 0
        %3876 = vmatprep.subr.bf16.mxu0 0
        %3877 = vmatpush1.bf16.msra.mxu0 0
        %3878 = vmatprep.subr.bf16.mxu0 0
        %3879 = vmatpush1.bf16.msra.mxu0 0
        %3880 = vmatprep.subr.bf16.mxu0 0
        %3881 = vmatpush1.bf16.msra.mxu0 0
        %3882 = vmatprep.subr.bf16.mxu0 0
        %3883 = vmatpush1.bf16.msra.mxu0 0
        %3884 = vmatprep.subr.bf16.mxu0 0
        %3885 = vmatpush1.bf16.msra.mxu0 0
        %3886 = vmatprep.subr.bf16.mxu0 0
        %3887 = vmatpush1.bf16.msra.mxu0 0
        %3888 = vmatprep.subr.bf16.mxu0 0
        %3889 = vmatpush1.bf16.msra.mxu0 0
        %3890 = vmatprep.subr.bf16.mxu0 0
        %3891 = vmatpush1.bf16.msra.mxu0 0
        %3892 = vmatprep.subr.bf16.mxu0 0
        %3893 = vmatpush1.bf16.msra.mxu0 0
        %3894 = vmatprep.subr.bf16.mxu0 0
        %3895 = vmatpush1.bf16.msra.mxu0 0
        %3896 = vmatprep.mubr.bf16.mxu0 0
        %3897 = vmatmul.mubr.bf16.gmra.mrb[0].mxu0 %v3844
        %v3898 = vpop.f32.mrb[0].mxu0
        %v3899 = vadd.f32 0.0, %v3898
        %v3900 = vpop.f32.mrb[0].mxu0
        %v3901 = vadd.f32 0.0, %v3900
        %v3902 = vpop.f32.mrb[0].mxu0
        %v3903 = vadd.f32 0.0, %v3902
        %v3904 = vpop.f32.mrb[0].mxu0
        %v3905 = vadd.f32 0.0, %v3904
        %3906 = vmatprep.mubr.bf16.mxu0 0
        %3907 = vmatmul.mubr.bf16.gmra.mrb[0].mxu0 %v3847
        %v3908 = vpop.f32.mrb[0].mxu0
        %v3909 = vadd.f32 0.0, %v3908
        %v3910 = vpop.f32.mrb[0].mxu0
        %v3911 = vadd.f32 0.0, %v3910
        %v3912 = vpop.f32.mrb[0].mxu0
        %v3913 = vadd.f32 0.0, %v3912
        %v3914 = vpop.f32.mrb[0].mxu0
        %v3915 = vadd.f32 0.0, %v3914
        %3916 = vdwg.mxu0
        %3917 = vmatprep.subr.bf16.mxu0 %v3833
        %3918 = vmatpush1.bf16.msra.mxu0 %v3832
        %3919 = vmatprep.subr.bf16.mxu0 %v3859
        %3920 = vmatpush1.bf16.msra.mxu0 %v3856
        %3921 = vmatprep.subr.bf16.mxu0 0
        %3922 = vmatpush1.bf16.msra.mxu0 0
        %3923 = vmatprep.subr.bf16.mxu0 0
        %3924 = vmatpush1.bf16.msra.mxu0 0
        %3925 = vmatprep.subr.bf16.mxu0 0
        %3926 = vmatpush1.bf16.msra.mxu0 0
        %3927 = vmatprep.subr.bf16.mxu0 0
        %3928 = vmatpush1.bf16.msra.mxu0 0
        %3929 = vmatprep.subr.bf16.mxu0 0
        %3930 = vmatpush1.bf16.msra.mxu0 0
        %3931 = vmatprep.subr.bf16.mxu0 0
        %3932 = vmatpush1.bf16.msra.mxu0 0
        %3933 = vmatprep.subr.bf16.mxu0 0
        %3934 = vmatpush1.bf16.msra.mxu0 0
        %3935 = vmatprep.subr.bf16.mxu0 0
        %3936 = vmatpush1.bf16.msra.mxu0 0
        %3937 = vmatprep.subr.bf16.mxu0 0
        %3938 = vmatpush1.bf16.msra.mxu0 0
        %3939 = vmatprep.subr.bf16.mxu0 0
        %3940 = vmatpush1.bf16.msra.mxu0 0
        %3941 = vmatprep.subr.bf16.mxu0 0
        %3942 = vmatpush1.bf16.msra.mxu0 0
        %3943 = vmatprep.subr.bf16.mxu0 0
        %3944 = vmatpush1.bf16.msra.mxu0 0
        %3945 = vmatprep.subr.bf16.mxu0 0
        %3946 = vmatpush1.bf16.msra.mxu0 0
        %3947 = vmatprep.subr.bf16.mxu0 0
        %3948 = vmatpush1.bf16.msra.mxu0 0
        %3949 = vmatprep.mubr.bf16.mxu0 0
        %3950 = vmatmul.mubr.bf16.gmra.mrb[0].mxu0 %v3844
        %v3951 = vpop.f32.mrb[0].mxu0
        %v3952 = vadd.f32 0.0, %v3951
        %v3953 = vpop.f32.mrb[0].mxu0
        %v3954 = vadd.f32 0.0, %v3953
        %v3955 = vpop.f32.mrb[0].mxu0
        %v3956 = vadd.f32 0.0, %v3955
        %v3957 = vpop.f32.mrb[0].mxu0
        %v3958 = vadd.f32 0.0, %v3957
        %3959 = vmatprep.mubr.bf16.mxu0 0
        %3960 = vmatmul.mubr.bf16.gmra.mrb[0].mxu0 %v3847
        %v3961 = vpop.f32.mrb[0].mxu0
        %v3962 = vadd.f32 0.0, %v3961
        %v3963 = vpop.f32.mrb[0].mxu0
        %v3964 = vadd.f32 0.0, %v3963
        %v3965 = vpop.f32.mrb[0].mxu0
        %v3966 = vadd.f32 0.0, %v3965
        %v3967 = vpop.f32.mrb[0].mxu0
        %v3968 = vadd.f32 0.0, %v3967
        %3969 = vdwg.mxu0
        %3970 = vmatprep.subr.bf16.mxu0 0
        %3971 = vmatpush1.bf16.msra.mxu0 %v3818
        %3972 = vmatprep.subr.bf16.mxu0 0
        %3973 = vmatpush1.bf16.msra.mxu0 %v3862
        %3974 = vmatprep.subr.bf16.mxu0 0
        %3975 = vmatpush1.bf16.msra.mxu0 0
        %3976 = vmatprep.subr.bf16.mxu0 0
        %3977 = vmatpush1.bf16.msra.mxu0 0
        %3978 = vmatprep.subr.bf16.mxu0 0
        %3979 = vmatpush1.bf16.msra.mxu0 0
        %3980 = vmatprep.subr.bf16.mxu0 0
        %3981 = vmatpush1.bf16.msra.mxu0 0
        %3982 = vmatprep.subr.bf16.mxu0 0
        %3983 = vmatpush1.bf16.msra.mxu0 0
        %3984 = vmatprep.subr.bf16.mxu0 0
        %3985 = vmatpush1.bf16.msra.mxu0 0
        %3986 = vmatprep.subr.bf16.mxu0 0
        %3987 = vmatpush1.bf16.msra.mxu0 0
        %3988 = vmatprep.subr.bf16.mxu0 0
        %3989 = vmatpush1.bf16.msra.mxu0 0
        %3990 = vmatprep.subr.bf16.mxu0 0
        %3991 = vmatpush1.bf16.msra.mxu0 0
        %3992 = vmatprep.subr.bf16.mxu0 0
        %3993 = vmatpush1.bf16.msra.mxu0 0
        %3994 = vmatprep.subr.bf16.mxu0 0
        %3995 = vmatpush1.bf16.msra.mxu0 0
        %3996 = vmatprep.subr.bf16.mxu0 0
        %3997 = vmatpush1.bf16.msra.mxu0 0
        %3998 = vmatprep.subr.bf16.mxu0 0
        %3999 = vmatpush1.bf16.msra.mxu0 0
        %4000 = vmatprep.subr.bf16.mxu0 0
        %4001 = vmatpush1.bf16.msra.mxu0 0
        %4002 = vmatprep.mubr.bf16.mxu0 0
        %4003 = vmatmul.mubr.bf16.gmra.mrb[0].mxu0 %v3844
        %v4004 = vpop.f32.mrb[0].mxu0
        %v4005 = vadd.f32 0.0, %v4004
        %v4006 = vpop.f32.mrb[0].mxu0
        %v4007 = vpop.f32.mrb[0].mxu0
        %v4008 = vadd.f32 0.0, %v4007
        %v4009 = vpop.f32.mrb[0].mxu0
        %4010 = vmatprep.mubr.bf16.mxu0 0
        %4011 = vmatmul.mubr.bf16.gmra.mrb[0].mxu0 %v3847
        %v4012 = vpop.f32.mrb[0].mxu0
        %v4013 = vadd.f32 0.0, %v4012
        %v4014 = vpop.f32.mrb[0].mxu0
        %v4015 = vpop.f32.mrb[0].mxu0
        %v4016 = vadd.f32 0.0, %v4015
        %v4017 = vpop.f32.mrb[0].mxu0
        %4018 = vdwg.mxu0
        %v4019 = vadd.f32 %v3674, %v3899
        %v4020 = vadd.f32 %v3676, %v3901
        %v4021 = vadd.f32 %v3727, %v3952
        %v4022 = vadd.f32 %v3729, %v3954
        %v4023 = vadd.f32 %v3780, %v4005
        %v4024 = vadd.f32 %v3678, %v3903
        %v4025 = vadd.f32 %v3680, %v3905
        %v4026 = vadd.f32 %v3731, %v3956
        %v4027 = vadd.f32 %v3733, %v3958
        %v4028 = vadd.f32 %v3783, %v4008
        %v4029 = vadd.f32 %v3684, %v3909
        %v4030 = vadd.f32 %v3686, %v3911
        %v4031 = vadd.f32 %v3737, %v3962
        %v4032 = vadd.f32 %v3739, %v3964
        %v4033 = vadd.f32 %v3788, %v4013
        %v4034 = vadd.f32 %v3688, %v3913
        %v4035 = vadd.f32 %v3690, %v3915
        %v4036 = vadd.f32 %v3741, %v3966
        %v4037 = vadd.f32 %v3743, %v3968
        %v4038 = vadd.f32 %v3791, %v4016
        %v4039 = vtanh.pop %v4019
        %v4040 = vtanh.pop %v4020
        %v4041 = vtanh.pop %v4021
        %v4042 = vtanh.pop %v4022
        %v4043 = vtanh.pop %v4023
        %v4044 = vtanh.pop %v4024
        %v4045 = vtanh.pop %v4025
        %v4046 = vtanh.pop %v4026
        %v4047 = vtanh.pop %v4027
        %v4048 = vtanh.pop %v4028
        %v4049 = vxor.u32 %v4029, 2147483648
        %v4050 = vxor.u32 %v4030, 2147483648
        %v4051 = vxor.u32 %v4031, 2147483648
        %v4052 = vxor.u32 %v4032, 2147483648
        %v4053 = vxor.u32 %v4033, 2147483648
        %v4054 = vxor.u32 %v4034, 2147483648
        %v4055 = vxor.u32 %v4035, 2147483648
        %v4056 = vxor.u32 %v4036, 2147483648
        %v4057 = vxor.u32 %v4037, 2147483648
        %v4058 = vxor.u32 %v4038, 2147483648
        %v4059 = vmul.f32 %v4049, 1.442695
        %v4060 = vpow.pop %v4059
        %v4061 = vmul.f32 %v4050, 1.442695
        %v4062 = vpow.pop %v4061
        %v4063 = vmul.f32 %v4051, 1.442695
        %v4064 = vpow.pop %v4063
        %v4065 = vmul.f32 %v4052, 1.442695
        %v4066 = vpow.pop %v4065
        %v4067 = vmul.f32 %v4053, 1.442695
        %v4068 = vpow.pop %v4067
        %v4069 = vmul.f32 %v4054, 1.442695
        %v4070 = vpow.pop %v4069
        %v4071 = vmul.f32 %v4055, 1.442695
        %v4072 = vpow.pop %v4071
        %v4073 = vmul.f32 %v4056, 1.442695
        %v4074 = vpow.pop %v4073
        %v4075 = vmul.f32 %v4057, 1.442695
        %v4076 = vpow.pop %v4075
        %v4077 = vmul.f32 %v4058, 1.442695
        %v4078 = vpow.pop %v4077
        %v4079 = vadd.f32 %v4060, 1.0
        %v4080 = vadd.f32 %v4062, 1.0
        %v4081 = vadd.f32 %v4064, 1.0
        %v4082 = vadd.f32 %v4066, 1.0
        %v4083 = vadd.f32 %v4068, 1.0
        %v4084 = vadd.f32 %v4070, 1.0
        %v4085 = vadd.f32 %v4072, 1.0
        %v4086 = vadd.f32 %v4074, 1.0
        %v4087 = vadd.f32 %v4076, 1.0
        %v4088 = vadd.f32 %v4078, 1.0
        %v4089 = vrcp.pop %v4079
        %v4090 = vmul.f32 1.0, %v4089
        %v4091 = vrcp.pop %v4080
        %v4092 = vmul.f32 1.0, %v4091
        %v4093 = vrcp.pop %v4081
        %v4094 = vmul.f32 1.0, %v4093
        %v4095 = vrcp.pop %v4082
        %v4096 = vmul.f32 1.0, %v4095
        %v4097 = vrcp.pop %v4083
        %v4098 = vmul.f32 1.0, %v4097
        %v4099 = vrcp.pop %v4084
        %v4100 = vmul.f32 1.0, %v4099
        %v4101 = vrcp.pop %v4085
        %v4102 = vmul.f32 1.0, %v4101
        %v4103 = vrcp.pop %v4086
        %v4104 = vmul.f32 1.0, %v4103
        %v4105 = vrcp.pop %v4087
        %v4106 = vmul.f32 1.0, %v4105
        %v4107 = vrcp.pop %v4088
        %v4108 = vmul.f32 1.0, %v4107
        %v4109 = vmul.f32 %v4039, %v4090
        %v4110 = vmul.f32 %v4040, %v4092
        %v4111 = vmul.f32 %v4041, %v4094
        %v4112 = vmul.f32 %v4042, %v4096
        %v4113 = vmul.f32 %v4043, %v4098
        %v4114 = vmul.f32 %v4044, %v4100
        %v4115 = vmul.f32 %v4045, %v4102
        %v4116 = vmul.f32 %v4046, %v4104
        %v4117 = vmul.f32 %v4047, %v4106
        %v4118 = vmul.f32 %v4048, %v4108
        %v4119 = vpack.c.bf16 %v4114, %v4109
        %v4120 = vpack.c.bf16 %v4115, %v4110
        %v4121 = vpack.c.bf16 %v4116, %v4111
        %v4122 = vpack.c.bf16 %v4117, %v4112
        %v4123 = vpack.c.bf16 %v4118, %v4113
        %v4124 = vld [vmem:[#allocation3] sm:$0xff]
        %v4125 = vld [vmem:[#allocation3 + $0x8] sm:$0xff]
        %v4126 = vld [vmem:[#allocation3 + $0x10] sm:$0xff]
        %v4127 = vld [vmem:[#allocation3 + $0x18] sm:$0xff]
        %v4128 = vld [vmem:[#allocation3 + $0x20] sm:$0xff]
        %v4129 = vld [vmem:[#allocation3 + $0x28] sm:$0xff]
        %v4130 = vld [vmem:[#allocation3 + $0x30] sm:$0xff]
        %v4131 = vld [vmem:[#allocation3 + $0x38] sm:$0xff]
        %v4132 = vld [vmem:[#allocation3 + $0x40] sm:$0xff]
        %v4133 = vld [vmem:[#allocation3 + $0x48] sm:$0xff]
        %s4134 = scalar_lea.vmem %s6, 16
        %v4135 = vld [vmem:[%s4134] sm:$0xf]
        %v4136 = vld [vmem:[%s4134 + $0x4] sm:$0xf]
        %v4139 = vunpack.c.l.b16 %v4135
        %v4140 = vunpack.c.l.b16 %v4136
        %v4141 = vpack.c.b16 %v4140, %v4139
        %v4143 = vsel %vm1682, %v4141, 0
        %4145 = vmatprep.subr.bf16.mxu0 %v4120
        %4146 = vmatpush1.bf16.msra.mxu0 %v4119
        %4147 = vmatprep.subr.bf16.mxu0 0
        %4148 = vmatpush1.bf16.msra.mxu0 0
        %4149 = vmatprep.subr.bf16.mxu0 0
        %4150 = vmatpush1.bf16.msra.mxu0 0
        %4151 = vmatprep.subr.bf16.mxu0 0
        %4152 = vmatpush1.bf16.msra.mxu0 0
        %4153 = vmatprep.subr.bf16.mxu0 0
        %4154 = vmatpush1.bf16.msra.mxu0 0
        %4155 = vmatprep.subr.bf16.mxu0 0
        %4156 = vmatpush1.bf16.msra.mxu0 0
        %4157 = vmatprep.subr.bf16.mxu0 0
        %4158 = vmatpush1.bf16.msra.mxu0 0
        %4159 = vmatprep.subr.bf16.mxu0 0
        %4160 = vmatpush1.bf16.msra.mxu0 0
        %4161 = vmatprep.subr.bf16.mxu0 0
        %4162 = vmatpush1.bf16.msra.mxu0 0
        %4163 = vmatprep.subr.bf16.mxu0 0
        %4164 = vmatpush1.bf16.msra.mxu0 0
        %4165 = vmatprep.subr.bf16.mxu0 0
        %4166 = vmatpush1.bf16.msra.mxu0 0
        %4167 = vmatprep.subr.bf16.mxu0 0
        %4168 = vmatpush1.bf16.msra.mxu0 0
        %4169 = vmatprep.subr.bf16.mxu0 0
        %4170 = vmatpush1.bf16.msra.mxu0 0
        %4171 = vmatprep.subr.bf16.mxu0 0
        %4172 = vmatpush1.bf16.msra.mxu0 0
        %4173 = vmatprep.subr.bf16.mxu0 0
        %4174 = vmatpush1.bf16.msra.mxu0 0
        %4175 = vmatprep.subr.bf16.mxu0 0
        %4176 = vmatpush1.bf16.msra.mxu0 0
        %4177 = vmatprep.mubr.bf16.mxu0 0
        %4178 = vmatmul.mubr.bf16.gmra.mrb[0].mxu0 %v4143
        %v4179 = vpop.f32.mrb[0].mxu0
        %v4180 = vadd.f32 0.0, %v4179
        %v4181 = vpop.f32.mrb[0].mxu0
        %v4182 = vadd.f32 0.0, %v4181
        %v4183 = vpop.f32.mrb[0].mxu0
        %v4184 = vadd.f32 0.0, %v4183
        %v4185 = vpop.f32.mrb[0].mxu0
        %v4186 = vadd.f32 0.0, %v4185
        %4187 = vdwg.mxu0
        %4188 = vmatprep.subr.bf16.mxu0 %v4122
        %4189 = vmatpush1.bf16.msra.mxu0 %v4121
        %4190 = vmatprep.subr.bf16.mxu0 0
        %4191 = vmatpush1.bf16.msra.mxu0 0
        %4192 = vmatprep.subr.bf16.mxu0 0
        %4193 = vmatpush1.bf16.msra.mxu0 0
        %4194 = vmatprep.subr.bf16.mxu0 0
        %4195 = vmatpush1.bf16.msra.mxu0 0
        %4196 = vmatprep.subr.bf16.mxu0 0
        %4197 = vmatpush1.bf16.msra.mxu0 0
        %4198 = vmatprep.subr.bf16.mxu0 0
        %4199 = vmatpush1.bf16.msra.mxu0 0
        %4200 = vmatprep.subr.bf16.mxu0 0
        %4201 = vmatpush1.bf16.msra.mxu0 0
        %4202 = vmatprep.subr.bf16.mxu0 0
        %4203 = vmatpush1.bf16.msra.mxu0 0
        %4204 = vmatprep.subr.bf16.mxu0 0
        %4205 = vmatpush1.bf16.msra.mxu0 0
        %4206 = vmatprep.subr.bf16.mxu0 0
        %4207 = vmatpush1.bf16.msra.mxu0 0
        %4208 = vmatprep.subr.bf16.mxu0 0
        %4209 = vmatpush1.bf16.msra.mxu0 0
        %4210 = vmatprep.subr.bf16.mxu0 0
        %4211 = vmatpush1.bf16.msra.mxu0 0
        %4212 = vmatprep.subr.bf16.mxu0 0
        %4213 = vmatpush1.bf16.msra.mxu0 0
        %4214 = vmatprep.subr.bf16.mxu0 0
        %4215 = vmatpush1.bf16.msra.mxu0 0
        %4216 = vmatprep.subr.bf16.mxu0 0
        %4217 = vmatpush1.bf16.msra.mxu0 0
        %4218 = vmatprep.subr.bf16.mxu0 0
        %4219 = vmatpush1.bf16.msra.mxu0 0
        %4220 = vmatprep.mubr.bf16.mxu0 0
        %4221 = vmatmul.mubr.bf16.gmra.mrb[0].mxu0 %v4143
        %v4222 = vpop.f32.mrb[0].mxu0
        %v4223 = vadd.f32 0.0, %v4222
        %v4224 = vpop.f32.mrb[0].mxu0
        %v4225 = vadd.f32 0.0, %v4224
        %v4226 = vpop.f32.mrb[0].mxu0
        %v4227 = vadd.f32 0.0, %v4226
        %v4228 = vpop.f32.mrb[0].mxu0
        %v4229 = vadd.f32 0.0, %v4228
        %4230 = vdwg.mxu0
        %4231 = vmatprep.subr.bf16.mxu0 0
        %4232 = vmatpush1.bf16.msra.mxu0 %v4123
        %4233 = vmatprep.subr.bf16.mxu0 0
        %4234 = vmatpush1.bf16.msra.mxu0 0
        %4235 = vmatprep.subr.bf16.mxu0 0
        %4236 = vmatpush1.bf16.msra.mxu0 0
        %4237 = vmatprep.subr.bf16.mxu0 0
        %4238 = vmatpush1.bf16.msra.mxu0 0
        %4239 = vmatprep.subr.bf16.mxu0 0
        %4240 = vmatpush1.bf16.msra.mxu0 0
        %4241 = vmatprep.subr.bf16.mxu0 0
        %4242 = vmatpush1.bf16.msra.mxu0 0
        %4243 = vmatprep.subr.bf16.mxu0 0
        %4244 = vmatpush1.bf16.msra.mxu0 0
        %4245 = vmatprep.subr.bf16.mxu0 0
        %4246 = vmatpush1.bf16.msra.mxu0 0
        %4247 = vmatprep.subr.bf16.mxu0 0
        %4248 = vmatpush1.bf16.msra.mxu0 0
        %4249 = vmatprep.subr.bf16.mxu0 0
        %4250 = vmatpush1.bf16.msra.mxu0 0
        %4251 = vmatprep.subr.bf16.mxu0 0
        %4252 = vmatpush1.bf16.msra.mxu0 0
        %4253 = vmatprep.subr.bf16.mxu0 0
        %4254 = vmatpush1.bf16.msra.mxu0 0
        %4255 = vmatprep.subr.bf16.mxu0 0
        %4256 = vmatpush1.bf16.msra.mxu0 0
        %4257 = vmatprep.subr.bf16.mxu0 0
        %4258 = vmatpush1.bf16.msra.mxu0 0
        %4259 = vmatprep.subr.bf16.mxu0 0
        %4260 = vmatpush1.bf16.msra.mxu0 0
        %4261 = vmatprep.subr.bf16.mxu0 0
        %4262 = vmatpush1.bf16.msra.mxu0 0
        %4263 = vmatprep.mubr.bf16.mxu0 0
        %4264 = vmatmul.mubr.bf16.gmra.mrb[0].mxu0 %v4143
        %v4265 = vpop.f32.mrb[0].mxu0
        %v4266 = vadd.f32 0.0, %v4265
        %v4267 = vpop.f32.mrb[0].mxu0
        %v4268 = vpop.f32.mrb[0].mxu0
        %v4269 = vadd.f32 0.0, %v4268
        %v4270 = vpop.f32.mrb[0].mxu0
        %4271 = vdwg.mxu0
        %v4272 = vadd.f32 %v4124, %v4180
        %v4273 = vadd.f32 %v4125, %v4182
        %v4274 = vadd.f32 %v4126, %v4223
        %v4275 = vadd.f32 %v4127, %v4225
        %v4276 = vadd.f32 %v4128, %v4266
        %v4277 = vadd.f32 %v4129, %v4184
        %v4278 = vadd.f32 %v4130, %v4186
        %v4279 = vadd.f32 %v4131, %v4227
        %v4280 = vadd.f32 %v4132, %v4229
        %v4281 = vadd.f32 %v4133, %v4269
        %4282 = vst [vmem:[#allocation3] sm:$0xff] %v4272
        %4283 = vst [vmem:[#allocation3 + $0x8] sm:$0xff] %v4273
        %4284 = vst [vmem:[#allocation3 + $0x10] sm:$0xff] %v4274
        %4285 = vst [vmem:[#allocation3 + $0x18] sm:$0xff] %v4275
        %4286 = vst.msk [vmem:[#allocation3 + $0x20] sm:$0xff] %vm677, %v4276
        %4287 = vst [vmem:[#allocation3 + $0x28] sm:$0xff] %v4277
        %4288 = vst [vmem:[#allocation3 + $0x30] sm:$0xff] %v4278
        %4289 = vst [vmem:[#allocation3 + $0x38] sm:$0xff] %v4279
        %4290 = vst [vmem:[#allocation3 + $0x40] sm:$0xff] %v4280
        %4291 = vst.msk [vmem:[#allocation3 + $0x48] sm:$0xff] %vm677, %v4281
        %s4292 = scalar_lea.vmem %s7, 16
        %v4293 = vld [vmem:[%s4292] sm:$0xf]
        %v4294 = vld [vmem:[%s4292 + $0x4] sm:$0xf]
        %v4297 = vunpack.c.l.b16 %v4293
        %v4298 = vunpack.c.l.b16 %v4294
        %v4299 = vpack.c.b16 %v4298, %v4297
        %v4301 = vsel %vm1682, %v4299, 0
        %4303 = vmatprep.subr.bf16.mxu0 %v4120
        %4304 = vmatpush1.bf16.msra.mxu0 %v4119
        %4305 = vmatprep.subr.bf16.mxu0 0
        %4306 = vmatpush1.bf16.msra.mxu0 0
        %4307 = vmatprep.subr.bf16.mxu0 0
        %4308 = vmatpush1.bf16.msra.mxu0 0
        %4309 = vmatprep.subr.bf16.mxu0 0
        %4310 = vmatpush1.bf16.msra.mxu0 0
        %4311 = vmatprep.subr.bf16.mxu0 0
        %4312 = vmatpush1.bf16.msra.mxu0 0
        %4313 = vmatprep.subr.bf16.mxu0 0
        %4314 = vmatpush1.bf16.msra.mxu0 0
        %4315 = vmatprep.subr.bf16.mxu0 0
        %4316 = vmatpush1.bf16.msra.mxu0 0
        %4317 = vmatprep.subr.bf16.mxu0 0
        %4318 = vmatpush1.bf16.msra.mxu0 0
        %4319 = vmatprep.subr.bf16.mxu0 0
        %4320 = vmatpush1.bf16.msra.mxu0 0
        %4321 = vmatprep.subr.bf16.mxu0 0
        %4322 = vmatpush1.bf16.msra.mxu0 0
        %4323 = vmatprep.subr.bf16.mxu0 0
        %4324 = vmatpush1.bf16.msra.mxu0 0
        %4325 = vmatprep.subr.bf16.mxu0 0
        %4326 = vmatpush1.bf16.msra.mxu0 0
        %4327 = vmatprep.subr.bf16.mxu0 0
        %4328 = vmatpush1.bf16.msra.mxu0 0
        %4329 = vmatprep.subr.bf16.mxu0 0
        %4330 = vmatpush1.bf16.msra.mxu0 0
        %4331 = vmatprep.subr.bf16.mxu0 0
        %4332 = vmatpush1.bf16.msra.mxu0 0
        %4333 = vmatprep.subr.bf16.mxu0 0
        %4334 = vmatpush1.bf16.msra.mxu0 0
        %4335 = vmatprep.mubr.bf16.mxu0 0
        %4336 = vmatmul.mubr.bf16.gmra.mrb[0].mxu0 %v4301
        %v4337 = vpop.f32.mrb[0].mxu0
        %v4338 = vadd.f32 0.0, %v4337
        %v4339 = vpop.f32.mrb[0].mxu0
        %v4340 = vadd.f32 0.0, %v4339
        %v4341 = vpop.f32.mrb[0].mxu0
        %v4342 = vadd.f32 0.0, %v4341
        %v4343 = vpop.f32.mrb[0].mxu0
        %v4344 = vadd.f32 0.0, %v4343
        %4345 = vdwg.mxu0
        %4346 = vmatprep.subr.bf16.mxu0 %v4122
        %4347 = vmatpush1.bf16.msra.mxu0 %v4121
        %4348 = vmatprep.subr.bf16.mxu0 0
        %4349 = vmatpush1.bf16.msra.mxu0 0
        %4350 = vmatprep.subr.bf16.mxu0 0
        %4351 = vmatpush1.bf16.msra.mxu0 0
        %4352 = vmatprep.subr.bf16.mxu0 0
        %4353 = vmatpush1.bf16.msra.mxu0 0
        %4354 = vmatprep.subr.bf16.mxu0 0
        %4355 = vmatpush1.bf16.msra.mxu0 0
        %4356 = vmatprep.subr.bf16.mxu0 0
        %4357 = vmatpush1.bf16.msra.mxu0 0
        %4358 = vmatprep.subr.bf16.mxu0 0
        %4359 = vmatpush1.bf16.msra.mxu0 0
        %4360 = vmatprep.subr.bf16.mxu0 0
        %4361 = vmatpush1.bf16.msra.mxu0 0
        %4362 = vmatprep.subr.bf16.mxu0 0
        %4363 = vmatpush1.bf16.msra.mxu0 0
        %4364 = vmatprep.subr.bf16.mxu0 0
        %4365 = vmatpush1.bf16.msra.mxu0 0
        %4366 = vmatprep.subr.bf16.mxu0 0
        %4367 = vmatpush1.bf16.msra.mxu0 0
        %4368 = vmatprep.subr.bf16.mxu0 0
        %4369 = vmatpush1.bf16.msra.mxu0 0
        %4370 = vmatprep.subr.bf16.mxu0 0
        %4371 = vmatpush1.bf16.msra.mxu0 0
        %4372 = vmatprep.subr.bf16.mxu0 0
        %4373 = vmatpush1.bf16.msra.mxu0 0
        %4374 = vmatprep.subr.bf16.mxu0 0
        %4375 = vmatpush1.bf16.msra.mxu0 0
        %4376 = vmatprep.subr.bf16.mxu0 0
        %4377 = vmatpush1.bf16.msra.mxu0 0
        %4378 = vmatprep.mubr.bf16.mxu0 0
        %4379 = vmatmul.mubr.bf16.gmra.mrb[0].mxu0 %v4301
        %v4380 = vpop.f32.mrb[0].mxu0
        %v4381 = vadd.f32 0.0, %v4380
        %v4382 = vpop.f32.mrb[0].mxu0
        %v4383 = vadd.f32 0.0, %v4382
        %v4384 = vpop.f32.mrb[0].mxu0
        %v4385 = vadd.f32 0.0, %v4384
        %v4386 = vpop.f32.mrb[0].mxu0
        %v4387 = vadd.f32 0.0, %v4386
        %4388 = vdwg.mxu0
        %4389 = vmatprep.subr.bf16.mxu0 0
        %4390 = vmatpush1.bf16.msra.mxu0 %v4123
        %4391 = vmatprep.subr.bf16.mxu0 0
        %4392 = vmatpush1.bf16.msra.mxu0 0
        %4393 = vmatprep.subr.bf16.mxu0 0
        %4394 = vmatpush1.bf16.msra.mxu0 0
        %4395 = vmatprep.subr.bf16.mxu0 0
        %4396 = vmatpush1.bf16.msra.mxu0 0
        %4397 = vmatprep.subr.bf16.mxu0 0
        %4398 = vmatpush1.bf16.msra.mxu0 0
        %4399 = vmatprep.subr.bf16.mxu0 0
        %4400 = vmatpush1.bf16.msra.mxu0 0
        %4401 = vmatprep.subr.bf16.mxu0 0
        %4402 = vmatpush1.bf16.msra.mxu0 0
        %4403 = vmatprep.subr.bf16.mxu0 0
        %4404 = vmatpush1.bf16.msra.mxu0 0
        %4405 = vmatprep.subr.bf16.mxu0 0
        %4406 = vmatpush1.bf16.msra.mxu0 0
        %4407 = vmatprep.subr.bf16.mxu0 0
        %4408 = vmatpush1.bf16.msra.mxu0 0
        %4409 = vmatprep.subr.bf16.mxu0 0
        %4410 = vmatpush1.bf16.msra.mxu0 0
        %4411 = vmatprep.subr.bf16.mxu0 0
        %4412 = vmatpush1.bf16.msra.mxu0 0
        %4413 = vmatprep.subr.bf16.mxu0 0
        %4414 = vmatpush1.bf16.msra.mxu0 0
        %4415 = vmatprep.subr.bf16.mxu0 0
        %4416 = vmatpush1.bf16.msra.mxu0 0
        %4417 = vmatprep.subr.bf16.mxu0 0
        %4418 = vmatpush1.bf16.msra.mxu0 0
        %4419 = vmatprep.subr.bf16.mxu0 0
        %4420 = vmatpush1.bf16.msra.mxu0 0
        %4421 = vmatprep.mubr.bf16.mxu0 0
        %4422 = vmatmul.mubr.bf16.gmra.mrb[0].mxu0 %v4301
        %v4423 = vpop.f32.mrb[0].mxu0
        %v4424 = vadd.f32 0.0, %v4423
        %v4425 = vpop.f32.mrb[0].mxu0
        %v4426 = vpop.f32.mrb[0].mxu0
        %v4427 = vadd.f32 0.0, %v4426
        %v4428 = vpop.f32.mrb[0].mxu0
        %4429 = vdwg.mxu0
        %v4430 = vld [vmem:[#allocation4] sm:$0xff]
        %v4431 = vld [vmem:[#allocation4 + $0x8] sm:$0xff]
        %v4432 = vld [vmem:[#allocation4 + $0x10] sm:$0xff]
        %v4433 = vld [vmem:[#allocation4 + $0x18] sm:$0xff]
        %v4434 = vld [vmem:[#allocation4 + $0x20] sm:$0xff]
        %v4435 = vld [vmem:[#allocation4 + $0x28] sm:$0xff]
        %v4436 = vld [vmem:[#allocation4 + $0x30] sm:$0xff]
        %v4437 = vld [vmem:[#allocation4 + $0x38] sm:$0xff]
        %v4438 = vld [vmem:[#allocation4 + $0x40] sm:$0xff]
        %v4439 = vld [vmem:[#allocation4 + $0x48] sm:$0xff]
        %v4440 = vadd.f32 %v4430, %v4338
        %v4441 = vadd.f32 %v4431, %v4340
        %v4442 = vadd.f32 %v4432, %v4381
        %v4443 = vadd.f32 %v4433, %v4383
        %v4444 = vadd.f32 %v4434, %v4424
        %v4445 = vadd.f32 %v4435, %v4342
        %v4446 = vadd.f32 %v4436, %v4344
        %v4447 = vadd.f32 %v4437, %v4385
        %v4448 = vadd.f32 %v4438, %v4387
        %v4449 = vadd.f32 %v4439, %v4427
        %4450 = vst [vmem:[#allocation4] sm:$0xff] %v4440
        %4451 = vst [vmem:[#allocation4 + $0x8] sm:$0xff] %v4441
        %4452 = vst [vmem:[#allocation4 + $0x10] sm:$0xff] %v4442
        %4453 = vst [vmem:[#allocation4 + $0x18] sm:$0xff] %v4443
        %4454 = vst.msk [vmem:[#allocation4 + $0x20] sm:$0xff] %vm677, %v4444
        %4455 = vst [vmem:[#allocation4 + $0x28] sm:$0xff] %v4445
        %4456 = vst [vmem:[#allocation4 + $0x30] sm:$0xff] %v4446
        %4457 = vst [vmem:[#allocation4 + $0x38] sm:$0xff] %v4447
        %4458 = vst [vmem:[#allocation4 + $0x40] sm:$0xff] %v4448
        %4459 = vst.msk [vmem:[#allocation4 + $0x48] sm:$0xff] %vm677, %v4449
        %v4460 = vld [vmem:[#allocation3] sm:$0xff]
        %v4461 = vld [vmem:[#allocation3 + $0x8] sm:$0xff]
        %v4462 = vld [vmem:[#allocation3 + $0x10] sm:$0xff]
        %v4463 = vld [vmem:[#allocation3 + $0x18] sm:$0xff]
        %v4464 = vld [vmem:[#allocation3 + $0x20] sm:$0xff]
        %v4465 = vld [vmem:[#allocation3 + $0x28] sm:$0xff]
        %v4466 = vld [vmem:[#allocation3 + $0x30] sm:$0xff]
        %v4467 = vld [vmem:[#allocation3 + $0x38] sm:$0xff]
        %v4468 = vld [vmem:[#allocation3 + $0x40] sm:$0xff]
        %v4469 = vld [vmem:[#allocation3 + $0x48] sm:$0xff]
        %v4470 = vsel %vm763, %v4460, 0.0
        %v4471 = vsel %vm764, %v4461, 0.0
        %v4472 = vsel %vm765, %v4462, 0.0
        %v4473 = vsel %vm766, %v4463, 0.0
        %v4474 = vsel %vm767, %v4464, 0.0
        %v4475 = vsel %vm763, %v4465, 0.0
        %v4476 = vsel %vm764, %v4466, 0.0
        %v4477 = vsel %vm765, %v4467, 0.0
        %v4478 = vsel %vm766, %v4468, 0.0
        %v4479 = vsel %vm767, %v4469, 0.0
        %v4480 = vpack.c.bf16 %v4475, %v4470
        %v4481 = vpack.c.bf16 %v4476, %v4471
        %v4482 = vpack.c.bf16 %v4477, %v4472
        %v4483 = vpack.c.bf16 %v4478, %v4473
        %v4484 = vpack.c.bf16 %v4479, %v4474
        %v4490 = vunpack.c.l.b16 %v4480
        %v4491 = vunpack.c.l.b16 %v4481
        %v4492 = vunpack.c.l.b16 %v4482
        %v4493 = vunpack.c.l.b16 %v4483
        %v4494 = vunpack.c.l.b16 %v4484
        %v4495 = vunpack.c.h.b16 %v4480
        %v4496 = vunpack.c.h.b16 %v4481
        %v4497 = vunpack.c.h.b16 %v4482
        %v4498 = vunpack.c.h.b16 %v4483
        %v4499 = vunpack.c.h.b16 %v4484
        %v4500 = vpack.c.b16 %v4491, %v4490
        %v4501 = vpack.c.b16 %v4493, %v4492
        %v4502 = vpack.c.b16 %v4494, %v4494
        %v4503 = vpack.c.b16 %v4496, %v4495
        %v4504 = vpack.c.b16 %v4498, %v4497
        %v4505 = vpack.c.b16 %v4499, %v4499
        %4506 = vrot.lane.b32.xlu0 %v4500, 8
        %v4507 = vpop.permute.xlu0 %4506
        %4508 = vrot.lane.b32.xlu0 %v4501, 8
        %v4509 = vpop.permute.xlu0 %4508
        %4510 = vrot.lane.b32.xlu0 %v4502, 8
        %v4511 = vpop.permute.xlu0 %4510
        %4512 = vrot.lane.b32.xlu0 %v4503, 8
        %v4513 = vpop.permute.xlu0 %4512
        %4514 = vrot.lane.b32.xlu0 %v4504, 8
        %v4515 = vpop.permute.xlu0 %4514
        %4516 = vrot.lane.b32.xlu0 %v4505, 8
        %v4517 = vpop.permute.xlu0 %4516
        %v4518 = vrot.slane %v4507, 4
        %v4519 = vrot.slane %v4509, 4
        %v4520 = vrot.slane %v4513, 4
        %v4521 = vrot.slane %v4515, 4
        %v4522 = vsel %vm690, %v4518, %v4507
        %v4523 = vsel %vm692, %v4518, %v4519
        %v4524 = vsel %vm690, %v4523, %v4509
        %v4525 = vsel %vm690, %v4519, %v4511
        %v4526 = vsel %vm690, %v4520, %v4513
        %v4527 = vsel %vm692, %v4520, %v4521
        %v4528 = vsel %vm690, %v4527, %v4515
        %v4529 = vsel %vm690, %v4521, %v4517
        %4536 = vst.msk [vmem:[#allocation2] sm:$0xff] %vm700, %v4522
        %4537 = vst [vmem:[#allocation2 + $0x8] sm:$0xff] %v4524
        %4538 = vst.msk [vmem:[#allocation2 + $0x10] sm:$0xf] %vm836, %v4525
        %4539 = vst.msk [vmem:[#allocation2 + $0x14] sm:$0xff] %vm700, %v4526
        %4540 = vst [vmem:[#allocation2 + $0x1c] sm:$0xff] %v4528
        %4541 = vst.msk [vmem:[#allocation2 + $0x24] sm:$0xf] %vm836, %v4529
        %s4542 = scalar_lea.vmem %s5, 144
        %v4543 = vld [vmem:[%s4542] sm:$0xf]
        %v4544 = vld [vmem:[%s4542 + $0x4] sm:$0xf]
        %v4545 = vld [vmem:[%s4542 + $0x8] sm:$0xf]
        %v4546 = vld [vmem:[%s4542 + $0xc] sm:$0xf]
        %v4547 = vld [vmem:[#allocation2] sm:$0xff]
        %v4548 = vld [vmem:[#allocation2 + $0x8] sm:$0xff]
        %v4549 = vld [vmem:[#allocation2 + $0x10] sm:$0xf]
        %v4550 = vld [vmem:[#allocation2 + $0x14] sm:$0xff]
        %v4551 = vld [vmem:[#allocation2 + $0x1c] sm:$0xff]
        %v4552 = vld [vmem:[#allocation2 + $0x24] sm:$0xf]
        %v4553 = vld [vmem:[#allocation2 + $0x28] sm:$0xff]
        %v4554 = vld [vmem:[#allocation2 + $0x30] sm:$0xff]
        %v4555 = vld [vmem:[#allocation2 + $0x38] sm:$0xf]
        %s4556 = scalar_lea.vmem %s5, 160
        %v4557 = vld [vmem:[%s4556] sm:$0xf]
        %v4558 = vld [vmem:[%s4556 + $0x4] sm:$0xf]
        %v4559 = vld [vmem:[%s4556 + $0x8] sm:$0xf]
        %v4560 = vld [vmem:[%s4556 + $0xc] sm:$0xf]
        %v4565 = vunpack.c.l.b16 %v4557
        %v4566 = vunpack.c.l.b16 %v4558
        %v4567 = vunpack.c.l.b16 %v4559
        %v4568 = vunpack.c.l.b16 %v4560
        %v4569 = vpack.c.b16 %v4566, %v4565
        %v4570 = vpack.c.b16 %v4568, %v4567
        %v4580 = vunpack.c.l.b16 %v4547
        %v4581 = vunpack.c.h.b16 %v4547
        %v4582 = vunpack.c.l.b16 %v4548
        %v4583 = vunpack.c.h.b16 %v4548
        %v4584 = vunpack.c.l.b16 %v4549
        %v4585 = vunpack.c.l.b16 %v4550
        %v4586 = vunpack.c.h.b16 %v4550
        %v4587 = vunpack.c.l.b16 %v4551
        %v4588 = vunpack.c.h.b16 %v4551
        %v4589 = vunpack.c.l.b16 %v4552
        %v4590 = vunpack.c.l.b16 %v4553
        %v4591 = vunpack.c.h.b16 %v4553
        %v4592 = vunpack.c.l.b16 %v4554
        %v4593 = vunpack.c.h.b16 %v4554
        %v4594 = vunpack.c.l.b16 %v4555
        %v4595 = vpack.c.b16 %v4585, %v4580
        %v4596 = vpack.c.b16 %v4586, %v4581
        %v4597 = vpack.c.b16 %v4587, %v4582
        %v4598 = vpack.c.b16 %v4588, %v4583
        %v4599 = vpack.c.b16 %v4589, %v4584
        %v4600 = vpack.c.b16 %v4590, %v4590
        %v4601 = vpack.c.b16 %v4591, %v4591
        %v4602 = vpack.c.b16 %v4592, %v4592
        %v4603 = vpack.c.b16 %v4593, %v4593
        %v4604 = vpack.c.b16 %v4594, %v4594
        %4605 = vrot.lane.b32.xlu0 %v4595, 120
        %v4606 = vpop.permute.xlu0 %4605
        %4607 = vrot.lane.b32.xlu0 %v4596, 120
        %v4608 = vpop.permute.xlu0 %4607
        %4609 = vrot.lane.b32.xlu0 %v4597, 120
        %v4610 = vpop.permute.xlu0 %4609
        %4611 = vrot.lane.b32.xlu0 %v4598, 120
        %v4612 = vpop.permute.xlu0 %4611
        %4613 = vrot.lane.b32.xlu0 %v4599, 120
        %v4614 = vpop.permute.xlu0 %4613
        %4615 = vrot.lane.b32.xlu0 %v4600, 120
        %v4616 = vpop.permute.xlu0 %4615
        %4617 = vrot.lane.b32.xlu0 %v4601, 120
        %v4618 = vpop.permute.xlu0 %4617
        %4619 = vrot.lane.b32.xlu0 %v4602, 120
        %v4620 = vpop.permute.xlu0 %4619
        %4621 = vrot.lane.b32.xlu0 %v4603, 120
        %v4622 = vpop.permute.xlu0 %4621
        %4623 = vrot.lane.b32.xlu0 %v4604, 120
        %v4624 = vpop.permute.xlu0 %4623
        %v4625 = vsel %vm923, %v4606, %v4608
        %v4626 = vsel %vm923, %v4608, %v4610
        %v4627 = vsel %vm923, %v4610, %v4612
        %v4628 = vsel %vm923, %v4612, %v4614
        %v4629 = vsel %vm923, %v4616, %v4618
        %v4630 = vsel %vm923, %v4618, %v4620
        %v4631 = vsel %vm923, %v4620, %v4622
        %v4632 = vsel %vm923, %v4622, %v4624
        %v4639 = vsel %vm937, %v4569, 0
        %v4642 = vsel %vm937, %v4570, 0
        %v4645 = vsel %vm944, %v4629, 0
        %v4648 = vsel %vm944, %v4630, 0
        %v4651 = vsel %vm944, %v4631, 0
        %v4654 = vsel %vm944, %v4632, 0
        %v4657 = vsel %vm944, %v4624, 0
        %4659 = vmatprep.subr.bf16.mxu0 %v4626
        %4660 = vmatpush1.bf16.msra.mxu0 %v4625
        %4661 = vmatprep.subr.bf16.mxu0 %v4648
        %4662 = vmatpush1.bf16.msra.mxu0 %v4645
        %4663 = vmatprep.subr.bf16.mxu0 0
        %4664 = vmatpush1.bf16.msra.mxu0 0
        %4665 = vmatprep.subr.bf16.mxu0 0
        %4666 = vmatpush1.bf16.msra.mxu0 0
        %4667 = vmatprep.subr.bf16.mxu0 0
        %4668 = vmatpush1.bf16.msra.mxu0 0
        %4669 = vmatprep.subr.bf16.mxu0 0
        %4670 = vmatpush1.bf16.msra.mxu0 0
        %4671 = vmatprep.subr.bf16.mxu0 0
        %4672 = vmatpush1.bf16.msra.mxu0 0
        %4673 = vmatprep.subr.bf16.mxu0 0
        %4674 = vmatpush1.bf16.msra.mxu0 0
        %4675 = vmatprep.subr.bf16.mxu0 0
        %4676 = vmatpush1.bf16.msra.mxu0 0
        %4677 = vmatprep.subr.bf16.mxu0 0
        %4678 = vmatpush1.bf16.msra.mxu0 0
        %4679 = vmatprep.subr.bf16.mxu0 0
        %4680 = vmatpush1.bf16.msra.mxu0 0
        %4681 = vmatprep.subr.bf16.mxu0 0
        %4682 = vmatpush1.bf16.msra.mxu0 0
        %4683 = vmatprep.subr.bf16.mxu0 0
        %4684 = vmatpush1.bf16.msra.mxu0 0
        %4685 = vmatprep.subr.bf16.mxu0 0
        %4686 = vmatpush1.bf16.msra.mxu0 0
        %4687 = vmatprep.subr.bf16.mxu0 0
        %4688 = vmatpush1.bf16.msra.mxu0 0
        %4689 = vmatprep.subr.bf16.mxu0 0
        %4690 = vmatpush1.bf16.msra.mxu0 0
        %4691 = vmatprep.mubr.bf16.mxu0 0
        %4692 = vmatmul.mubr.bf16.gmra.mrb[0].mxu0 %v4639
        %v4693 = vpop.f32.mrb[0].mxu0
        %v4694 = vadd.f32 0.0, %v4693
        %v4695 = vpop.f32.mrb[0].mxu0
        %v4696 = vadd.f32 0.0, %v4695
        %v4697 = vpop.f32.mrb[0].mxu0
        %v4698 = vadd.f32 0.0, %v4697
        %v4699 = vpop.f32.mrb[0].mxu0
        %v4700 = vadd.f32 0.0, %v4699
        %4701 = vmatprep.mubr.bf16.mxu0 0
        %4702 = vmatmul.mubr.bf16.gmra.mrb[0].mxu0 %v4642
        %v4703 = vpop.f32.mrb[0].mxu0
        %v4704 = vadd.f32 0.0, %v4703
        %v4705 = vpop.f32.mrb[0].mxu0
        %v4706 = vadd.f32 0.0, %v4705
        %v4707 = vpop.f32.mrb[0].mxu0
        %v4708 = vadd.f32 0.0, %v4707
        %v4709 = vpop.f32.mrb[0].mxu0
        %v4710 = vadd.f32 0.0, %v4709
        %4711 = vdwg.mxu0
        %4712 = vmatprep.subr.bf16.mxu0 %v4628
        %4713 = vmatpush1.bf16.msra.mxu0 %v4627
        %4714 = vmatprep.subr.bf16.mxu0 %v4654
        %4715 = vmatpush1.bf16.msra.mxu0 %v4651
        %4716 = vmatprep.subr.bf16.mxu0 0
        %4717 = vmatpush1.bf16.msra.mxu0 0
        %4718 = vmatprep.subr.bf16.mxu0 0
        %4719 = vmatpush1.bf16.msra.mxu0 0
        %4720 = vmatprep.subr.bf16.mxu0 0
        %4721 = vmatpush1.bf16.msra.mxu0 0
        %4722 = vmatprep.subr.bf16.mxu0 0
        %4723 = vmatpush1.bf16.msra.mxu0 0
        %4724 = vmatprep.subr.bf16.mxu0 0
        %4725 = vmatpush1.bf16.msra.mxu0 0
        %4726 = vmatprep.subr.bf16.mxu0 0
        %4727 = vmatpush1.bf16.msra.mxu0 0
        %4728 = vmatprep.subr.bf16.mxu0 0
        %4729 = vmatpush1.bf16.msra.mxu0 0
        %4730 = vmatprep.subr.bf16.mxu0 0
        %4731 = vmatpush1.bf16.msra.mxu0 0
        %4732 = vmatprep.subr.bf16.mxu0 0
        %4733 = vmatpush1.bf16.msra.mxu0 0
        %4734 = vmatprep.subr.bf16.mxu0 0
        %4735 = vmatpush1.bf16.msra.mxu0 0
        %4736 = vmatprep.subr.bf16.mxu0 0
        %4737 = vmatpush1.bf16.msra.mxu0 0
        %4738 = vmatprep.subr.bf16.mxu0 0
        %4739 = vmatpush1.bf16.msra.mxu0 0
        %4740 = vmatprep.subr.bf16.mxu0 0
        %4741 = vmatpush1.bf16.msra.mxu0 0
        %4742 = vmatprep.subr.bf16.mxu0 0
        %4743 = vmatpush1.bf16.msra.mxu0 0
        %4744 = vmatprep.mubr.bf16.mxu0 0
        %4745 = vmatmul.mubr.bf16.gmra.mrb[0].mxu0 %v4639
        %v4746 = vpop.f32.mrb[0].mxu0
        %v4747 = vadd.f32 0.0, %v4746
        %v4748 = vpop.f32.mrb[0].mxu0
        %v4749 = vadd.f32 0.0, %v4748
        %v4750 = vpop.f32.mrb[0].mxu0
        %v4751 = vadd.f32 0.0, %v4750
        %v4752 = vpop.f32.mrb[0].mxu0
        %v4753 = vadd.f32 0.0, %v4752
        %4754 = vmatprep.mubr.bf16.mxu0 0
        %4755 = vmatmul.mubr.bf16.gmra.mrb[0].mxu0 %v4642
        %v4756 = vpop.f32.mrb[0].mxu0
        %v4757 = vadd.f32 0.0, %v4756
        %v4758 = vpop.f32.mrb[0].mxu0
        %v4759 = vadd.f32 0.0, %v4758
        %v4760 = vpop.f32.mrb[0].mxu0
        %v4761 = vadd.f32 0.0, %v4760
        %v4762 = vpop.f32.mrb[0].mxu0
        %v4763 = vadd.f32 0.0, %v4762
        %4764 = vdwg.mxu0
        %4765 = vmatprep.subr.bf16.mxu0 0
        %4766 = vmatpush1.bf16.msra.mxu0 %v4614
        %4767 = vmatprep.subr.bf16.mxu0 0
        %4768 = vmatpush1.bf16.msra.mxu0 %v4657
        %4769 = vmatprep.subr.bf16.mxu0 0
        %4770 = vmatpush1.bf16.msra.mxu0 0
        %4771 = vmatprep.subr.bf16.mxu0 0
        %4772 = vmatpush1.bf16.msra.mxu0 0
        %4773 = vmatprep.subr.bf16.mxu0 0
        %4774 = vmatpush1.bf16.msra.mxu0 0
        %4775 = vmatprep.subr.bf16.mxu0 0
        %4776 = vmatpush1.bf16.msra.mxu0 0
        %4777 = vmatprep.subr.bf16.mxu0 0
        %4778 = vmatpush1.bf16.msra.mxu0 0
        %4779 = vmatprep.subr.bf16.mxu0 0
        %4780 = vmatpush1.bf16.msra.mxu0 0
        %4781 = vmatprep.subr.bf16.mxu0 0
        %4782 = vmatpush1.bf16.msra.mxu0 0
        %4783 = vmatprep.subr.bf16.mxu0 0
        %4784 = vmatpush1.bf16.msra.mxu0 0
        %4785 = vmatprep.subr.bf16.mxu0 0
        %4786 = vmatpush1.bf16.msra.mxu0 0
        %4787 = vmatprep.subr.bf16.mxu0 0
        %4788 = vmatpush1.bf16.msra.mxu0 0
        %4789 = vmatprep.subr.bf16.mxu0 0
        %4790 = vmatpush1.bf16.msra.mxu0 0
        %4791 = vmatprep.subr.bf16.mxu0 0
        %4792 = vmatpush1.bf16.msra.mxu0 0
        %4793 = vmatprep.subr.bf16.mxu0 0
        %4794 = vmatpush1.bf16.msra.mxu0 0
        %4795 = vmatprep.subr.bf16.mxu0 0
        %4796 = vmatpush1.bf16.msra.mxu0 0
        %4797 = vmatprep.mubr.bf16.mxu0 0
        %4798 = vmatmul.mubr.bf16.gmra.mrb[0].mxu0 %v4639
        %v4799 = vpop.f32.mrb[0].mxu0
        %v4800 = vadd.f32 0.0, %v4799
        %v4801 = vpop.f32.mrb[0].mxu0
        %v4802 = vpop.f32.mrb[0].mxu0
        %v4803 = vadd.f32 0.0, %v4802
        %v4804 = vpop.f32.mrb[0].mxu0
        %4805 = vmatprep.mubr.bf16.mxu0 0
        %4806 = vmatmul.mubr.bf16.gmra.mrb[0].mxu0 %v4642
        %v4807 = vpop.f32.mrb[0].mxu0
        %v4808 = vadd.f32 0.0, %v4807
        %v4809 = vpop.f32.mrb[0].mxu0
        %v4810 = vpop.f32.mrb[0].mxu0
        %v4811 = vadd.f32 0.0, %v4810
        %v4812 = vpop.f32.mrb[0].mxu0
        %4813 = vdwg.mxu0
        %v4818 = vunpack.c.l.b16 %v4543
        %v4819 = vunpack.c.l.b16 %v4544
        %v4820 = vunpack.c.l.b16 %v4545
        %v4821 = vunpack.c.l.b16 %v4546
        %v4822 = vpack.c.b16 %v4819, %v4818
        %v4823 = vpack.c.b16 %v4821, %v4820
        %v4830 = vsel %vm937, %v4822, 0
        %v4833 = vsel %vm937, %v4823, 0
        %v4836 = vsel %vm944, %v4600, 0
        %v4839 = vsel %vm944, %v4601, 0
        %v4842 = vsel %vm944, %v4602, 0
        %v4845 = vsel %vm944, %v4603, 0
        %v4848 = vsel %vm944, %v4604, 0
        %4850 = vmatprep.subr.bf16.mxu0 %v4596
        %4851 = vmatpush1.bf16.msra.mxu0 %v4595
        %4852 = vmatprep.subr.bf16.mxu0 %v4839
        %4853 = vmatpush1.bf16.msra.mxu0 %v4836
        %4854 = vmatprep.subr.bf16.mxu0 0
        %4855 = vmatpush1.bf16.msra.mxu0 0
        %4856 = vmatprep.subr.bf16.mxu0 0
        %4857 = vmatpush1.bf16.msra.mxu0 0
        %4858 = vmatprep.subr.bf16.mxu0 0
        %4859 = vmatpush1.bf16.msra.mxu0 0
        %4860 = vmatprep.subr.bf16.mxu0 0
        %4861 = vmatpush1.bf16.msra.mxu0 0
        %4862 = vmatprep.subr.bf16.mxu0 0
        %4863 = vmatpush1.bf16.msra.mxu0 0
        %4864 = vmatprep.subr.bf16.mxu0 0
        %4865 = vmatpush1.bf16.msra.mxu0 0
        %4866 = vmatprep.subr.bf16.mxu0 0
        %4867 = vmatpush1.bf16.msra.mxu0 0
        %4868 = vmatprep.subr.bf16.mxu0 0
        %4869 = vmatpush1.bf16.msra.mxu0 0
        %4870 = vmatprep.subr.bf16.mxu0 0
        %4871 = vmatpush1.bf16.msra.mxu0 0
        %4872 = vmatprep.subr.bf16.mxu0 0
        %4873 = vmatpush1.bf16.msra.mxu0 0
        %4874 = vmatprep.subr.bf16.mxu0 0
        %4875 = vmatpush1.bf16.msra.mxu0 0
        %4876 = vmatprep.subr.bf16.mxu0 0
        %4877 = vmatpush1.bf16.msra.mxu0 0
        %4878 = vmatprep.subr.bf16.mxu0 0
        %4879 = vmatpush1.bf16.msra.mxu0 0
        %4880 = vmatprep.subr.bf16.mxu0 0
        %4881 = vmatpush1.bf16.msra.mxu0 0
        %4882 = vmatprep.mubr.bf16.mxu0 0
        %4883 = vmatmul.mubr.bf16.gmra.mrb[0].mxu0 %v4830
        %v4884 = vpop.f32.mrb[0].mxu0
        %v4885 = vadd.f32 %v4694, %v4884
        %v4886 = vpop.f32.mrb[0].mxu0
        %v4887 = vadd.f32 %v4696, %v4886
        %v4888 = vpop.f32.mrb[0].mxu0
        %v4889 = vadd.f32 %v4698, %v4888
        %v4890 = vpop.f32.mrb[0].mxu0
        %v4891 = vadd.f32 %v4700, %v4890
        %4892 = vmatprep.mubr.bf16.mxu0 0
        %4893 = vmatmul.mubr.bf16.gmra.mrb[0].mxu0 %v4833
        %v4894 = vpop.f32.mrb[0].mxu0
        %v4895 = vadd.f32 %v4704, %v4894
        %v4896 = vpop.f32.mrb[0].mxu0
        %v4897 = vadd.f32 %v4706, %v4896
        %v4898 = vpop.f32.mrb[0].mxu0
        %v4899 = vadd.f32 %v4708, %v4898
        %v4900 = vpop.f32.mrb[0].mxu0
        %v4901 = vadd.f32 %v4710, %v4900
        %4902 = vdwg.mxu0
        %4903 = vmatprep.subr.bf16.mxu0 %v4598
        %4904 = vmatpush1.bf16.msra.mxu0 %v4597
        %4905 = vmatprep.subr.bf16.mxu0 %v4845
        %4906 = vmatpush1.bf16.msra.mxu0 %v4842
        %4907 = vmatprep.subr.bf16.mxu0 0
        %4908 = vmatpush1.bf16.msra.mxu0 0
        %4909 = vmatprep.subr.bf16.mxu0 0
        %4910 = vmatpush1.bf16.msra.mxu0 0
        %4911 = vmatprep.subr.bf16.mxu0 0
        %4912 = vmatpush1.bf16.msra.mxu0 0
        %4913 = vmatprep.subr.bf16.mxu0 0
        %4914 = vmatpush1.bf16.msra.mxu0 0
        %4915 = vmatprep.subr.bf16.mxu0 0
        %4916 = vmatpush1.bf16.msra.mxu0 0
        %4917 = vmatprep.subr.bf16.mxu0 0
        %4918 = vmatpush1.bf16.msra.mxu0 0
        %4919 = vmatprep.subr.bf16.mxu0 0
        %4920 = vmatpush1.bf16.msra.mxu0 0
        %4921 = vmatprep.subr.bf16.mxu0 0
        %4922 = vmatpush1.bf16.msra.mxu0 0
        %4923 = vmatprep.subr.bf16.mxu0 0
        %4924 = vmatpush1.bf16.msra.mxu0 0
        %4925 = vmatprep.subr.bf16.mxu0 0
        %4926 = vmatpush1.bf16.msra.mxu0 0
        %4927 = vmatprep.subr.bf16.mxu0 0
        %4928 = vmatpush1.bf16.msra.mxu0 0
        %4929 = vmatprep.subr.bf16.mxu0 0
        %4930 = vmatpush1.bf16.msra.mxu0 0
        %4931 = vmatprep.subr.bf16.mxu0 0
        %4932 = vmatpush1.bf16.msra.mxu0 0
        %4933 = vmatprep.subr.bf16.mxu0 0
        %4934 = vmatpush1.bf16.msra.mxu0 0
        %4935 = vmatprep.mubr.bf16.mxu0 0
        %4936 = vmatmul.mubr.bf16.gmra.mrb[0].mxu0 %v4830
        %v4937 = vpop.f32.mrb[0].mxu0
        %v4938 = vadd.f32 %v4747, %v4937
        %v4939 = vpop.f32.mrb[0].mxu0
        %v4940 = vadd.f32 %v4749, %v4939
        %v4941 = vpop.f32.mrb[0].mxu0
        %v4942 = vadd.f32 %v4751, %v4941
        %v4943 = vpop.f32.mrb[0].mxu0
        %v4944 = vadd.f32 %v4753, %v4943
        %4945 = vmatprep.mubr.bf16.mxu0 0
        %4946 = vmatmul.mubr.bf16.gmra.mrb[0].mxu0 %v4833
        %v4947 = vpop.f32.mrb[0].mxu0
        %v4948 = vadd.f32 %v4757, %v4947
        %v4949 = vpop.f32.mrb[0].mxu0
        %v4950 = vadd.f32 %v4759, %v4949
        %v4951 = vpop.f32.mrb[0].mxu0
        %v4952 = vadd.f32 %v4761, %v4951
        %v4953 = vpop.f32.mrb[0].mxu0
        %v4954 = vadd.f32 %v4763, %v4953
        %4955 = vdwg.mxu0
        %4956 = vmatprep.subr.bf16.mxu0 0
        %4957 = vmatpush1.bf16.msra.mxu0 %v4599
        %4958 = vmatprep.subr.bf16.mxu0 0
        %4959 = vmatpush1.bf16.msra.mxu0 %v4848
        %4960 = vmatprep.subr.bf16.mxu0 0
        %4961 = vmatpush1.bf16.msra.mxu0 0
        %4962 = vmatprep.subr.bf16.mxu0 0
        %4963 = vmatpush1.bf16.msra.mxu0 0
        %4964 = vmatprep.subr.bf16.mxu0 0
        %4965 = vmatpush1.bf16.msra.mxu0 0
        %4966 = vmatprep.subr.bf16.mxu0 0
        %4967 = vmatpush1.bf16.msra.mxu0 0
        %4968 = vmatprep.subr.bf16.mxu0 0
        %4969 = vmatpush1.bf16.msra.mxu0 0
        %4970 = vmatprep.subr.bf16.mxu0 0
        %4971 = vmatpush1.bf16.msra.mxu0 0
        %4972 = vmatprep.subr.bf16.mxu0 0
        %4973 = vmatpush1.bf16.msra.mxu0 0
        %4974 = vmatprep.subr.bf16.mxu0 0
        %4975 = vmatpush1.bf16.msra.mxu0 0
        %4976 = vmatprep.subr.bf16.mxu0 0
        %4977 = vmatpush1.bf16.msra.mxu0 0
        %4978 = vmatprep.subr.bf16.mxu0 0
        %4979 = vmatpush1.bf16.msra.mxu0 0
        %4980 = vmatprep.subr.bf16.mxu0 0
        %4981 = vmatpush1.bf16.msra.mxu0 0
        %4982 = vmatprep.subr.bf16.mxu0 0
        %4983 = vmatpush1.bf16.msra.mxu0 0
        %4984 = vmatprep.subr.bf16.mxu0 0
        %4985 = vmatpush1.bf16.msra.mxu0 0
        %4986 = vmatprep.subr.bf16.mxu0 0
        %4987 = vmatpush1.bf16.msra.mxu0 0
        %4988 = vmatprep.mubr.bf16.mxu0 0
        %4989 = vmatmul.mubr.bf16.gmra.mrb[0].mxu0 %v4830
        %v4990 = vpop.f32.mrb[0].mxu0
        %v4991 = vadd.f32 %v4800, %v4990
        %v4992 = vpop.f32.mrb[0].mxu0
        %v4993 = vpop.f32.mrb[0].mxu0
        %v4994 = vadd.f32 %v4803, %v4993
        %v4995 = vpop.f32.mrb[0].mxu0
        %4996 = vmatprep.mubr.bf16.mxu0 0
        %4997 = vmatmul.mubr.bf16.gmra.mrb[0].mxu0 %v4833
        %v4998 = vpop.f32.mrb[0].mxu0
        %v4999 = vadd.f32 %v4808, %v4998
        %v5000 = vpop.f32.mrb[0].mxu0
        %v5001 = vpop.f32.mrb[0].mxu0
        %v5002 = vadd.f32 %v4811, %v5001
        %v5003 = vpop.f32.mrb[0].mxu0
        %5004 = vdwg.mxu0
        %s5005 = scalar_lea.vmem %s5, 176
        %v5006 = vld [vmem:[%s5005] sm:$0xf]
        %v5007 = vld [vmem:[%s5005 + $0x4] sm:$0xf]
        %v5008 = vld [vmem:[%s5005 + $0x8] sm:$0xf]
        %v5009 = vld [vmem:[%s5005 + $0xc] sm:$0xf]
        %v5014 = vunpack.c.l.b16 %v5006
        %v5015 = vunpack.c.l.b16 %v5007
        %v5016 = vunpack.c.l.b16 %v5008
        %v5017 = vunpack.c.l.b16 %v5009
        %v5018 = vpack.c.b16 %v5015, %v5014
        %v5019 = vpack.c.b16 %v5017, %v5016
        %5020 = vrot.lane.b32.xlu0 %v4595, 112
        %v5021 = vpop.permute.xlu0 %5020
        %5022 = vrot.lane.b32.xlu0 %v4596, 112
        %v5023 = vpop.permute.xlu0 %5022
        %5024 = vrot.lane.b32.xlu0 %v4597, 112
        %v5025 = vpop.permute.xlu0 %5024
        %5026 = vrot.lane.b32.xlu0 %v4598, 112
        %v5027 = vpop.permute.xlu0 %5026
        %5028 = vrot.lane.b32.xlu0 %v4599, 112
        %v5029 = vpop.permute.xlu0 %5028
        %5030 = vrot.lane.b32.xlu0 %v4600, 112
        %v5031 = vpop.permute.xlu0 %5030
        %5032 = vrot.lane.b32.xlu0 %v4601, 112
        %v5033 = vpop.permute.xlu0 %5032
        %5034 = vrot.lane.b32.xlu0 %v4602, 112
        %v5035 = vpop.permute.xlu0 %5034
        %5036 = vrot.lane.b32.xlu0 %v4603, 112
        %v5037 = vpop.permute.xlu0 %5036
        %5038 = vrot.lane.b32.xlu0 %v4604, 112
        %v5039 = vpop.permute.xlu0 %5038
        %vm5040 = vcmask 916480
        %v5041 = vsel %vm5040, %v5021, %v5023
        %v5042 = vsel %vm5040, %v5023, %v5025
        %v5043 = vsel %vm5040, %v5025, %v5027
        %v5044 = vsel %vm5040, %v5027, %v5029
        %v5045 = vsel %vm5040, %v5031, %v5033
        %v5046 = vsel %vm5040, %v5033, %v5035
        %v5047 = vsel %vm5040, %v5035, %v5037
        %v5048 = vsel %vm5040, %v5037, %v5039
        %v5055 = vsel %vm937, %v5018, 0
        %v5058 = vsel %vm937, %v5019, 0
        %v5061 = vsel %vm944, %v5045, 0
        %v5064 = vsel %vm944, %v5046, 0
        %v5067 = vsel %vm944, %v5047, 0
        %v5070 = vsel %vm944, %v5048, 0
        %v5073 = vsel %vm944, %v5039, 0
        %5075 = vmatprep.subr.bf16.mxu0 %v5042
        %5076 = vmatpush1.bf16.msra.mxu0 %v5041
        %5077 = vmatprep.subr.bf16.mxu0 %v5064
        %5078 = vmatpush1.bf16.msra.mxu0 %v5061
        %5079 = vmatprep.subr.bf16.mxu0 0
        %5080 = vmatpush1.bf16.msra.mxu0 0
        %5081 = vmatprep.subr.bf16.mxu0 0
        %5082 = vmatpush1.bf16.msra.mxu0 0
        %5083 = vmatprep.subr.bf16.mxu0 0
        %5084 = vmatpush1.bf16.msra.mxu0 0
        %5085 = vmatprep.subr.bf16.mxu0 0
        %5086 = vmatpush1.bf16.msra.mxu0 0
        %5087 = vmatprep.subr.bf16.mxu0 0
        %5088 = vmatpush1.bf16.msra.mxu0 0
        %5089 = vmatprep.subr.bf16.mxu0 0
        %5090 = vmatpush1.bf16.msra.mxu0 0
        %5091 = vmatprep.subr.bf16.mxu0 0
        %5092 = vmatpush1.bf16.msra.mxu0 0
        %5093 = vmatprep.subr.bf16.mxu0 0
        %5094 = vmatpush1.bf16.msra.mxu0 0
        %5095 = vmatprep.subr.bf16.mxu0 0
        %5096 = vmatpush1.bf16.msra.mxu0 0
        %5097 = vmatprep.subr.bf16.mxu0 0
        %5098 = vmatpush1.bf16.msra.mxu0 0
        %5099 = vmatprep.subr.bf16.mxu0 0
        %5100 = vmatpush1.bf16.msra.mxu0 0
        %5101 = vmatprep.subr.bf16.mxu0 0
        %5102 = vmatpush1.bf16.msra.mxu0 0
        %5103 = vmatprep.subr.bf16.mxu0 0
        %5104 = vmatpush1.bf16.msra.mxu0 0
        %5105 = vmatprep.subr.bf16.mxu0 0
        %5106 = vmatpush1.bf16.msra.mxu0 0
        %5107 = vmatprep.mubr.bf16.mxu0 0
        %5108 = vmatmul.mubr.bf16.gmra.mrb[0].mxu0 %v5055
        %v5109 = vpop.f32.mrb[0].mxu0
        %v5110 = vadd.f32 0.0, %v5109
        %v5111 = vpop.f32.mrb[0].mxu0
        %v5112 = vadd.f32 0.0, %v5111
        %v5113 = vpop.f32.mrb[0].mxu0
        %v5114 = vadd.f32 0.0, %v5113
        %v5115 = vpop.f32.mrb[0].mxu0
        %v5116 = vadd.f32 0.0, %v5115
        %5117 = vmatprep.mubr.bf16.mxu0 0
        %5118 = vmatmul.mubr.bf16.gmra.mrb[0].mxu0 %v5058
        %v5119 = vpop.f32.mrb[0].mxu0
        %v5120 = vadd.f32 0.0, %v5119
        %v5121 = vpop.f32.mrb[0].mxu0
        %v5122 = vadd.f32 0.0, %v5121
        %v5123 = vpop.f32.mrb[0].mxu0
        %v5124 = vadd.f32 0.0, %v5123
        %v5125 = vpop.f32.mrb[0].mxu0
        %v5126 = vadd.f32 0.0, %v5125
        %5127 = vdwg.mxu0
        %5128 = vmatprep.subr.bf16.mxu0 %v5044
        %5129 = vmatpush1.bf16.msra.mxu0 %v5043
        %5130 = vmatprep.subr.bf16.mxu0 %v5070
        %5131 = vmatpush1.bf16.msra.mxu0 %v5067
        %5132 = vmatprep.subr.bf16.mxu0 0
        %5133 = vmatpush1.bf16.msra.mxu0 0
        %5134 = vmatprep.subr.bf16.mxu0 0
        %5135 = vmatpush1.bf16.msra.mxu0 0
        %5136 = vmatprep.subr.bf16.mxu0 0
        %5137 = vmatpush1.bf16.msra.mxu0 0
        %5138 = vmatprep.subr.bf16.mxu0 0
        %5139 = vmatpush1.bf16.msra.mxu0 0
        %5140 = vmatprep.subr.bf16.mxu0 0
        %5141 = vmatpush1.bf16.msra.mxu0 0
        %5142 = vmatprep.subr.bf16.mxu0 0
        %5143 = vmatpush1.bf16.msra.mxu0 0
        %5144 = vmatprep.subr.bf16.mxu0 0
        %5145 = vmatpush1.bf16.msra.mxu0 0
        %5146 = vmatprep.subr.bf16.mxu0 0
        %5147 = vmatpush1.bf16.msra.mxu0 0
        %5148 = vmatprep.subr.bf16.mxu0 0
        %5149 = vmatpush1.bf16.msra.mxu0 0
        %5150 = vmatprep.subr.bf16.mxu0 0
        %5151 = vmatpush1.bf16.msra.mxu0 0
        %5152 = vmatprep.subr.bf16.mxu0 0
        %5153 = vmatpush1.bf16.msra.mxu0 0
        %5154 = vmatprep.subr.bf16.mxu0 0
        %5155 = vmatpush1.bf16.msra.mxu0 0
        %5156 = vmatprep.subr.bf16.mxu0 0
        %5157 = vmatpush1.bf16.msra.mxu0 0
        %5158 = vmatprep.subr.bf16.mxu0 0
        %5159 = vmatpush1.bf16.msra.mxu0 0
        %5160 = vmatprep.mubr.bf16.mxu0 0
        %5161 = vmatmul.mubr.bf16.gmra.mrb[0].mxu0 %v5055
        %v5162 = vpop.f32.mrb[0].mxu0
        %v5163 = vadd.f32 0.0, %v5162
        %v5164 = vpop.f32.mrb[0].mxu0
        %v5165 = vadd.f32 0.0, %v5164
        %v5166 = vpop.f32.mrb[0].mxu0
        %v5167 = vadd.f32 0.0, %v5166
        %v5168 = vpop.f32.mrb[0].mxu0
        %v5169 = vadd.f32 0.0, %v5168
        %5170 = vmatprep.mubr.bf16.mxu0 0
        %5171 = vmatmul.mubr.bf16.gmra.mrb[0].mxu0 %v5058
        %v5172 = vpop.f32.mrb[0].mxu0
        %v5173 = vadd.f32 0.0, %v5172
        %v5174 = vpop.f32.mrb[0].mxu0
        %v5175 = vadd.f32 0.0, %v5174
        %v5176 = vpop.f32.mrb[0].mxu0
        %v5177 = vadd.f32 0.0, %v5176
        %v5178 = vpop.f32.mrb[0].mxu0
        %v5179 = vadd.f32 0.0, %v5178
        %5180 = vdwg.mxu0
        %5181 = vmatprep.subr.bf16.mxu0 0
        %5182 = vmatpush1.bf16.msra.mxu0 %v5029
        %5183 = vmatprep.subr.bf16.mxu0 0
        %5184 = vmatpush1.bf16.msra.mxu0 %v5073
        %5185 = vmatprep.subr.bf16.mxu0 0
        %5186 = vmatpush1.bf16.msra.mxu0 0
        %5187 = vmatprep.subr.bf16.mxu0 0
        %5188 = vmatpush1.bf16.msra.mxu0 0
        %5189 = vmatprep.subr.bf16.mxu0 0
        %5190 = vmatpush1.bf16.msra.mxu0 0
        %5191 = vmatprep.subr.bf16.mxu0 0
        %5192 = vmatpush1.bf16.msra.mxu0 0
        %5193 = vmatprep.subr.bf16.mxu0 0
        %5194 = vmatpush1.bf16.msra.mxu0 0
        %5195 = vmatprep.subr.bf16.mxu0 0
        %5196 = vmatpush1.bf16.msra.mxu0 0
        %5197 = vmatprep.subr.bf16.mxu0 0
        %5198 = vmatpush1.bf16.msra.mxu0 0
        %5199 = vmatprep.subr.bf16.mxu0 0
        %5200 = vmatpush1.bf16.msra.mxu0 0
        %5201 = vmatprep.subr.bf16.mxu0 0
        %5202 = vmatpush1.bf16.msra.mxu0 0
        %5203 = vmatprep.subr.bf16.mxu0 0
        %5204 = vmatpush1.bf16.msra.mxu0 0
        %5205 = vmatprep.subr.bf16.mxu0 0
        %5206 = vmatpush1.bf16.msra.mxu0 0
        %5207 = vmatprep.subr.bf16.mxu0 0
        %5208 = vmatpush1.bf16.msra.mxu0 0
        %5209 = vmatprep.subr.bf16.mxu0 0
        %5210 = vmatpush1.bf16.msra.mxu0 0
        %5211 = vmatprep.subr.bf16.mxu0 0
        %5212 = vmatpush1.bf16.msra.mxu0 0
        %5213 = vmatprep.mubr.bf16.mxu0 0
        %5214 = vmatmul.mubr.bf16.gmra.mrb[0].mxu0 %v5055
        %v5215 = vpop.f32.mrb[0].mxu0
        %v5216 = vadd.f32 0.0, %v5215
        %v5217 = vpop.f32.mrb[0].mxu0
        %v5218 = vpop.f32.mrb[0].mxu0
        %v5219 = vadd.f32 0.0, %v5218
        %v5220 = vpop.f32.mrb[0].mxu0
        %5221 = vmatprep.mubr.bf16.mxu0 0
        %5222 = vmatmul.mubr.bf16.gmra.mrb[0].mxu0 %v5058
        %v5223 = vpop.f32.mrb[0].mxu0
        %v5224 = vadd.f32 0.0, %v5223
        %v5225 = vpop.f32.mrb[0].mxu0
        %v5226 = vpop.f32.mrb[0].mxu0
        %v5227 = vadd.f32 0.0, %v5226
        %v5228 = vpop.f32.mrb[0].mxu0
        %5229 = vdwg.mxu0
        %v5230 = vadd.f32 %v4885, %v5110
        %v5231 = vadd.f32 %v4887, %v5112
        %v5232 = vadd.f32 %v4938, %v5163
        %v5233 = vadd.f32 %v4940, %v5165
        %v5234 = vadd.f32 %v4991, %v5216
        %v5235 = vadd.f32 %v4889, %v5114
        %v5236 = vadd.f32 %v4891, %v5116
        %v5237 = vadd.f32 %v4942, %v5167
        %v5238 = vadd.f32 %v4944, %v5169
        %v5239 = vadd.f32 %v4994, %v5219
        %v5240 = vadd.f32 %v4895, %v5120
        %v5241 = vadd.f32 %v4897, %v5122
        %v5242 = vadd.f32 %v4948, %v5173
        %v5243 = vadd.f32 %v4950, %v5175
        %v5244 = vadd.f32 %v4999, %v5224
        %v5245 = vadd.f32 %v4899, %v5124
        %v5246 = vadd.f32 %v4901, %v5126
        %v5247 = vadd.f32 %v4952, %v5177
        %v5248 = vadd.f32 %v4954, %v5179
        %v5249 = vadd.f32 %v5002, %v5227
        %v5250 = vtanh.pop %v5230
        %v5251 = vtanh.pop %v5231
        %v5252 = vtanh.pop %v5232
        %v5253 = vtanh.pop %v5233
        %v5254 = vtanh.pop %v5234
        %v5255 = vtanh.pop %v5235
        %v5256 = vtanh.pop %v5236
        %v5257 = vtanh.pop %v5237
        %v5258 = vtanh.pop %v5238
        %v5259 = vtanh.pop %v5239
        %v5260 = vxor.u32 %v5240, 2147483648
        %v5261 = vxor.u32 %v5241, 2147483648
        %v5262 = vxor.u32 %v5242, 2147483648
        %v5263 = vxor.u32 %v5243, 2147483648
        %v5264 = vxor.u32 %v5244, 2147483648
        %v5265 = vxor.u32 %v5245, 2147483648
        %v5266 = vxor.u32 %v5246, 2147483648
        %v5267 = vxor.u32 %v5247, 2147483648
        %v5268 = vxor.u32 %v5248, 2147483648
        %v5269 = vxor.u32 %v5249, 2147483648
        %v5270 = vmul.f32 %v5260, 1.442695
        %v5271 = vpow.pop %v5270
        %v5272 = vmul.f32 %v5261, 1.442695
        %v5273 = vpow.pop %v5272
        %v5274 = vmul.f32 %v5262, 1.442695
        %v5275 = vpow.pop %v5274
        %v5276 = vmul.f32 %v5263, 1.442695
        %v5277 = vpow.pop %v5276
        %v5278 = vmul.f32 %v5264, 1.442695
        %v5279 = vpow.pop %v5278
        %v5280 = vmul.f32 %v5265, 1.442695
        %v5281 = vpow.pop %v5280
        %v5282 = vmul.f32 %v5266, 1.442695
        %v5283 = vpow.pop %v5282
        %v5284 = vmul.f32 %v5267, 1.442695
        %v5285 = vpow.pop %v5284
        %v5286 = vmul.f32 %v5268, 1.442695
        %v5287 = vpow.pop %v5286
        %v5288 = vmul.f32 %v5269, 1.442695
        %v5289 = vpow.pop %v5288
        %v5290 = vadd.f32 %v5271, 1.0
        %v5291 = vadd.f32 %v5273, 1.0
        %v5292 = vadd.f32 %v5275, 1.0
        %v5293 = vadd.f32 %v5277, 1.0
        %v5294 = vadd.f32 %v5279, 1.0
        %v5295 = vadd.f32 %v5281, 1.0
        %v5296 = vadd.f32 %v5283, 1.0
        %v5297 = vadd.f32 %v5285, 1.0
        %v5298 = vadd.f32 %v5287, 1.0
        %v5299 = vadd.f32 %v5289, 1.0
        %v5300 = vrcp.pop %v5290
        %v5301 = vmul.f32 1.0, %v5300
        %v5302 = vrcp.pop %v5291
        %v5303 = vmul.f32 1.0, %v5302
        %v5304 = vrcp.pop %v5292
        %v5305 = vmul.f32 1.0, %v5304
        %v5306 = vrcp.pop %v5293
        %v5307 = vmul.f32 1.0, %v5306
        %v5308 = vrcp.pop %v5294
        %v5309 = vmul.f32 1.0, %v5308
        %v5310 = vrcp.pop %v5295
        %v5311 = vmul.f32 1.0, %v5310
        %v5312 = vrcp.pop %v5296
        %v5313 = vmul.f32 1.0, %v5312
        %v5314 = vrcp.pop %v5297
        %v5315 = vmul.f32 1.0, %v5314
        %v5316 = vrcp.pop %v5298
        %v5317 = vmul.f32 1.0, %v5316
        %v5318 = vrcp.pop %v5299
        %v5319 = vmul.f32 1.0, %v5318
        %v5320 = vmul.f32 %v5250, %v5301
        %v5321 = vmul.f32 %v5251, %v5303
        %v5322 = vmul.f32 %v5252, %v5305
        %v5323 = vmul.f32 %v5253, %v5307
        %v5324 = vmul.f32 %v5254, %v5309
        %v5325 = vmul.f32 %v5255, %v5311
        %v5326 = vmul.f32 %v5256, %v5313
        %v5327 = vmul.f32 %v5257, %v5315
        %v5328 = vmul.f32 %v5258, %v5317
        %v5329 = vmul.f32 %v5259, %v5319
        %v5330 = vpack.c.bf16 %v5325, %v5320
        %v5331 = vpack.c.bf16 %v5326, %v5321
        %v5332 = vpack.c.bf16 %v5327, %v5322
        %v5333 = vpack.c.bf16 %v5328, %v5323
        %v5334 = vpack.c.bf16 %v5329, %v5324
        %s5335 = scalar_lea.vmem %s7, 24
        %v5336 = vld [vmem:[%s5335] sm:$0xf]
        %v5337 = vld [vmem:[%s5335 + $0x4] sm:$0xf]
        %v5340 = vunpack.c.l.b16 %v5336
        %v5341 = vunpack.c.l.b16 %v5337
        %v5342 = vpack.c.b16 %v5341, %v5340
        %v5344 = vsel %vm1682, %v5342, 0
        %5346 = vmatprep.subr.bf16.mxu0 %v5331
        %5347 = vmatpush1.bf16.msra.mxu0 %v5330
        %5348 = vmatprep.subr.bf16.mxu0 0
        %5349 = vmatpush1.bf16.msra.mxu0 0
        %5350 = vmatprep.subr.bf16.mxu0 0
        %5351 = vmatpush1.bf16.msra.mxu0 0
        %5352 = vmatprep.subr.bf16.mxu0 0
        %5353 = vmatpush1.bf16.msra.mxu0 0
        %5354 = vmatprep.subr.bf16.mxu0 0
        %5355 = vmatpush1.bf16.msra.mxu0 0
        %5356 = vmatprep.subr.bf16.mxu0 0
        %5357 = vmatpush1.bf16.msra.mxu0 0
        %5358 = vmatprep.subr.bf16.mxu0 0
        %5359 = vmatpush1.bf16.msra.mxu0 0
        %5360 = vmatprep.subr.bf16.mxu0 0
        %5361 = vmatpush1.bf16.msra.mxu0 0
        %5362 = vmatprep.subr.bf16.mxu0 0
        %5363 = vmatpush1.bf16.msra.mxu0 0
        %5364 = vmatprep.subr.bf16.mxu0 0
        %5365 = vmatpush1.bf16.msra.mxu0 0
        %5366 = vmatprep.subr.bf16.mxu0 0
        %5367 = vmatpush1.bf16.msra.mxu0 0
        %5368 = vmatprep.subr.bf16.mxu0 0
        %5369 = vmatpush1.bf16.msra.mxu0 0
        %5370 = vmatprep.subr.bf16.mxu0 0
        %5371 = vmatpush1.bf16.msra.mxu0 0
        %5372 = vmatprep.subr.bf16.mxu0 0
        %5373 = vmatpush1.bf16.msra.mxu0 0
        %5374 = vmatprep.subr.bf16.mxu0 0
        %5375 = vmatpush1.bf16.msra.mxu0 0
        %5376 = vmatprep.subr.bf16.mxu0 0
        %5377 = vmatpush1.bf16.msra.mxu0 0
        %5378 = vmatprep.mubr.bf16.mxu0 0
        %5379 = vmatmul.mubr.bf16.gmra.mrb[0].mxu0 %v5344
        %v5380 = vpop.f32.mrb[0].mxu0
        %v5381 = vadd.f32 0.0, %v5380
        %v5382 = vpop.f32.mrb[0].mxu0
        %v5383 = vadd.f32 0.0, %v5382
        %v5384 = vpop.f32.mrb[0].mxu0
        %v5385 = vadd.f32 0.0, %v5384
        %v5386 = vpop.f32.mrb[0].mxu0
        %v5387 = vadd.f32 0.0, %v5386
        %5388 = vdwg.mxu0
        %5389 = vmatprep.subr.bf16.mxu0 %v5333
        %5390 = vmatpush1.bf16.msra.mxu0 %v5332
        %5391 = vmatprep.subr.bf16.mxu0 0
        %5392 = vmatpush1.bf16.msra.mxu0 0
        %5393 = vmatprep.subr.bf16.mxu0 0
        %5394 = vmatpush1.bf16.msra.mxu0 0
        %5395 = vmatprep.subr.bf16.mxu0 0
        %5396 = vmatpush1.bf16.msra.mxu0 0
        %5397 = vmatprep.subr.bf16.mxu0 0
        %5398 = vmatpush1.bf16.msra.mxu0 0
        %5399 = vmatprep.subr.bf16.mxu0 0
        %5400 = vmatpush1.bf16.msra.mxu0 0
        %5401 = vmatprep.subr.bf16.mxu0 0
        %5402 = vmatpush1.bf16.msra.mxu0 0
        %5403 = vmatprep.subr.bf16.mxu0 0
        %5404 = vmatpush1.bf16.msra.mxu0 0
        %5405 = vmatprep.subr.bf16.mxu0 0
        %5406 = vmatpush1.bf16.msra.mxu0 0
        %5407 = vmatprep.subr.bf16.mxu0 0
        %5408 = vmatpush1.bf16.msra.mxu0 0
        %5409 = vmatprep.subr.bf16.mxu0 0
        %5410 = vmatpush1.bf16.msra.mxu0 0
        %5411 = vmatprep.subr.bf16.mxu0 0
        %5412 = vmatpush1.bf16.msra.mxu0 0
        %5413 = vmatprep.subr.bf16.mxu0 0
        %5414 = vmatpush1.bf16.msra.mxu0 0
        %5415 = vmatprep.subr.bf16.mxu0 0
        %5416 = vmatpush1.bf16.msra.mxu0 0
        %5417 = vmatprep.subr.bf16.mxu0 0
        %5418 = vmatpush1.bf16.msra.mxu0 0
        %5419 = vmatprep.subr.bf16.mxu0 0
        %5420 = vmatpush1.bf16.msra.mxu0 0
        %5421 = vmatprep.mubr.bf16.mxu0 0
        %5422 = vmatmul.mubr.bf16.gmra.mrb[0].mxu0 %v5344
        %v5423 = vpop.f32.mrb[0].mxu0
        %v5424 = vadd.f32 0.0, %v5423
        %v5425 = vpop.f32.mrb[0].mxu0
        %v5426 = vadd.f32 0.0, %v5425
        %v5427 = vpop.f32.mrb[0].mxu0
        %v5428 = vadd.f32 0.0, %v5427
        %v5429 = vpop.f32.mrb[0].mxu0
        %v5430 = vadd.f32 0.0, %v5429
        %5431 = vdwg.mxu0
        %5432 = vmatprep.subr.bf16.mxu0 0
        %5433 = vmatpush1.bf16.msra.mxu0 %v5334
        %5434 = vmatprep.subr.bf16.mxu0 0
        %5435 = vmatpush1.bf16.msra.mxu0 0
        %5436 = vmatprep.subr.bf16.mxu0 0
        %5437 = vmatpush1.bf16.msra.mxu0 0
        %5438 = vmatprep.subr.bf16.mxu0 0
        %5439 = vmatpush1.bf16.msra.mxu0 0
        %5440 = vmatprep.subr.bf16.mxu0 0
        %5441 = vmatpush1.bf16.msra.mxu0 0
        %5442 = vmatprep.subr.bf16.mxu0 0
        %5443 = vmatpush1.bf16.msra.mxu0 0
        %5444 = vmatprep.subr.bf16.mxu0 0
        %5445 = vmatpush1.bf16.msra.mxu0 0
        %5446 = vmatprep.subr.bf16.mxu0 0
        %5447 = vmatpush1.bf16.msra.mxu0 0
        %5448 = vmatprep.subr.bf16.mxu0 0
        %5449 = vmatpush1.bf16.msra.mxu0 0
        %5450 = vmatprep.subr.bf16.mxu0 0
        %5451 = vmatpush1.bf16.msra.mxu0 0
        %5452 = vmatprep.subr.bf16.mxu0 0
        %5453 = vmatpush1.bf16.msra.mxu0 0
        %5454 = vmatprep.subr.bf16.mxu0 0
        %5455 = vmatpush1.bf16.msra.mxu0 0
        %5456 = vmatprep.subr.bf16.mxu0 0
        %5457 = vmatpush1.bf16.msra.mxu0 0
        %5458 = vmatprep.subr.bf16.mxu0 0
        %5459 = vmatpush1.bf16.msra.mxu0 0
        %5460 = vmatprep.subr.bf16.mxu0 0
        %5461 = vmatpush1.bf16.msra.mxu0 0
        %5462 = vmatprep.subr.bf16.mxu0 0
        %5463 = vmatpush1.bf16.msra.mxu0 0
        %5464 = vmatprep.mubr.bf16.mxu0 0
        %5465 = vmatmul.mubr.bf16.gmra.mrb[0].mxu0 %v5344
        %v5466 = vpop.f32.mrb[0].mxu0
        %v5467 = vadd.f32 0.0, %v5466
        %v5468 = vpop.f32.mrb[0].mxu0
        %v5469 = vpop.f32.mrb[0].mxu0
        %v5470 = vadd.f32 0.0, %v5469
        %v5471 = vpop.f32.mrb[0].mxu0
        %5472 = vdwg.mxu0
        %v5473 = vld [vmem:[#allocation4] sm:$0xff]
        %v5474 = vld [vmem:[#allocation4 + $0x8] sm:$0xff]
        %v5475 = vld [vmem:[#allocation4 + $0x10] sm:$0xff]
        %v5476 = vld [vmem:[#allocation4 + $0x18] sm:$0xff]
        %v5477 = vld [vmem:[#allocation4 + $0x20] sm:$0xff]
        %v5478 = vld [vmem:[#allocation4 + $0x28] sm:$0xff]
        %v5479 = vld [vmem:[#allocation4 + $0x30] sm:$0xff]
        %v5480 = vld [vmem:[#allocation4 + $0x38] sm:$0xff]
        %v5481 = vld [vmem:[#allocation4 + $0x40] sm:$0xff]
        %v5482 = vld [vmem:[#allocation4 + $0x48] sm:$0xff]
        %v5483 = vadd.f32 %v5473, %v5381
        %v5484 = vadd.f32 %v5474, %v5383
        %v5485 = vadd.f32 %v5475, %v5424
        %v5486 = vadd.f32 %v5476, %v5426
        %v5487 = vadd.f32 %v5477, %v5467
        %v5488 = vadd.f32 %v5478, %v5385
        %v5489 = vadd.f32 %v5479, %v5387
        %v5490 = vadd.f32 %v5480, %v5428
        %v5491 = vadd.f32 %v5481, %v5430
        %v5492 = vadd.f32 %v5482, %v5470
        %5493 = vst [vmem:[#allocation4] sm:$0xff] %v5483
        %5494 = vst [vmem:[#allocation4 + $0x8] sm:$0xff] %v5484
        %5495 = vst [vmem:[#allocation4 + $0x10] sm:$0xff] %v5485
        %5496 = vst [vmem:[#allocation4 + $0x18] sm:$0xff] %v5486
        %5497 = vst.msk [vmem:[#allocation4 + $0x20] sm:$0xff] %vm677, %v5487
        %5498 = vst [vmem:[#allocation4 + $0x28] sm:$0xff] %v5488
        %5499 = vst [vmem:[#allocation4 + $0x30] sm:$0xff] %v5489
        %5500 = vst [vmem:[#allocation4 + $0x38] sm:$0xff] %v5490
        %5501 = vst [vmem:[#allocation4 + $0x40] sm:$0xff] %v5491
        %5502 = vst.msk [vmem:[#allocation4 + $0x48] sm:$0xff] %vm677, %v5492
        %v5503 = vld [vmem:[%s8] sm:$0xf]
        %v5504 = vld [vmem:[#allocation4] sm:$0xff]
        %v5505 = vld [vmem:[#allocation4 + $0x8] sm:$0xff]
        %v5506 = vld [vmem:[#allocation4 + $0x10] sm:$0xff]
        %v5507 = vld [vmem:[#allocation4 + $0x18] sm:$0xff]
        %v5508 = vld [vmem:[#allocation4 + $0x20] sm:$0xff]
        %v5509 = vld [vmem:[#allocation4 + $0x28] sm:$0xff]
        %v5510 = vld [vmem:[#allocation4 + $0x30] sm:$0xff]
        %v5511 = vld [vmem:[#allocation4 + $0x38] sm:$0xff]
        %v5512 = vld [vmem:[#allocation4 + $0x40] sm:$0xff]
        %v5513 = vld [vmem:[#allocation4 + $0x48] sm:$0xff]
        %v5514 = vpack.c.bf16 %v5509, %v5504
        %v5515 = vpack.c.bf16 %v5510, %v5505
        %v5516 = vpack.c.bf16 %v5511, %v5506
        %v5517 = vpack.c.bf16 %v5512, %v5507
        %v5518 = vpack.c.bf16 %v5513, %v5508
        %5524 = vrot.lane.b32.xlu0 %v5514, 113
        %v5525 = vpop.permute.xlu0 %5524
        %5526 = vrot.lane.b32.xlu0 %v5515, 113
        %v5527 = vpop.permute.xlu0 %5526
        %5528 = vrot.lane.b32.xlu0 %v5516, 113
        %v5529 = vpop.permute.xlu0 %5528
        %5530 = vrot.lane.b32.xlu0 %v5517, 113
        %v5531 = vpop.permute.xlu0 %5530
        %5532 = vrot.lane.b32.xlu0 %v5518, 113
        %v5533 = vpop.permute.xlu0 %5532
        %vm5534 = vcmask 924672
        %v5535 = vsel %vm5534, %v5525, %v5527
        %v5536 = vsel %vm5534, %v5527, %v5529
        %v5537 = vsel %vm5534, %v5529, %v5531
        %v5538 = vsel %vm5534, %v5531, %v5533
        %v5544 = vsel %vm1682, %v5503, 0
        %5546 = vmatprep.subr.bf16.mxu0 %v5536
        %5547 = vmatpush1.bf16.msra.mxu0 %v5535
        %5548 = vmatprep.subr.bf16.mxu0 0
        %5549 = vmatpush1.bf16.msra.mxu0 0
        %5550 = vmatprep.subr.bf16.mxu0 0
        %5551 = vmatpush1.bf16.msra.mxu0 0
        %5552 = vmatprep.subr.bf16.mxu0 0
        %5553 = vmatpush1.bf16.msra.mxu0 0
        %5554 = vmatprep.subr.bf16.mxu0 0
        %5555 = vmatpush1.bf16.msra.mxu0 0
        %5556 = vmatprep.subr.bf16.mxu0 0
        %5557 = vmatpush1.bf16.msra.mxu0 0
        %5558 = vmatprep.subr.bf16.mxu0 0
        %5559 = vmatpush1.bf16.msra.mxu0 0
        %5560 = vmatprep.subr.bf16.mxu0 0
        %5561 = vmatpush1.bf16.msra.mxu0 0
        %5562 = vmatprep.subr.bf16.mxu0 0
        %5563 = vmatpush1.bf16.msra.mxu0 0
        %5564 = vmatprep.subr.bf16.mxu0 0
        %5565 = vmatpush1.bf16.msra.mxu0 0
        %5566 = vmatprep.subr.bf16.mxu0 0
        %5567 = vmatpush1.bf16.msra.mxu0 0
        %5568 = vmatprep.subr.bf16.mxu0 0
        %5569 = vmatpush1.bf16.msra.mxu0 0
        %5570 = vmatprep.subr.bf16.mxu0 0
        %5571 = vmatpush1.bf16.msra.mxu0 0
        %5572 = vmatprep.subr.bf16.mxu0 0
        %5573 = vmatpush1.bf16.msra.mxu0 0
        %5574 = vmatprep.subr.bf16.mxu0 0
        %5575 = vmatpush1.bf16.msra.mxu0 0
        %5576 = vmatprep.subr.bf16.mxu0 0
        %5577 = vmatpush1.bf16.msra.mxu0 0
        %5578 = vmatprep.mubr.bf16.mxu0 0
        %5579 = vmatmul.mubr.bf16.gmra.mrb[0].mxu0 %v5544
        %v5580 = vpop.f32.mrb[0].mxu0
        %v5581 = vadd.f32 0.0, %v5580
        %v5582 = vpop.f32.mrb[0].mxu0
        %v5583 = vadd.f32 0.0, %v5582
        %v5584 = vpop.f32.mrb[0].mxu0
        %v5585 = vpop.f32.mrb[0].mxu0
        %5586 = vdwg.mxu0
        %5587 = vmatprep.subr.bf16.mxu0 %v5538
        %5588 = vmatpush1.bf16.msra.mxu0 %v5537
        %5589 = vmatprep.subr.bf16.mxu0 0
        %5590 = vmatpush1.bf16.msra.mxu0 0
        %5591 = vmatprep.subr.bf16.mxu0 0
        %5592 = vmatpush1.bf16.msra.mxu0 0
        %5593 = vmatprep.subr.bf16.mxu0 0
        %5594 = vmatpush1.bf16.msra.mxu0 0
        %5595 = vmatprep.subr.bf16.mxu0 0
        %5596 = vmatpush1.bf16.msra.mxu0 0
        %5597 = vmatprep.subr.bf16.mxu0 0
        %5598 = vmatpush1.bf16.msra.mxu0 0
        %5599 = vmatprep.subr.bf16.mxu0 0
        %5600 = vmatpush1.bf16.msra.mxu0 0
        %5601 = vmatprep.subr.bf16.mxu0 0
        %5602 = vmatpush1.bf16.msra.mxu0 0
        %5603 = vmatprep.subr.bf16.mxu0 0
        %5604 = vmatpush1.bf16.msra.mxu0 0
        %5605 = vmatprep.subr.bf16.mxu0 0
        %5606 = vmatpush1.bf16.msra.mxu0 0
        %5607 = vmatprep.subr.bf16.mxu0 0
        %5608 = vmatpush1.bf16.msra.mxu0 0
        %5609 = vmatprep.subr.bf16.mxu0 0
        %5610 = vmatpush1.bf16.msra.mxu0 0
        %5611 = vmatprep.subr.bf16.mxu0 0
        %5612 = vmatpush1.bf16.msra.mxu0 0
        %5613 = vmatprep.subr.bf16.mxu0 0
        %5614 = vmatpush1.bf16.msra.mxu0 0
        %5615 = vmatprep.subr.bf16.mxu0 0
        %5616 = vmatpush1.bf16.msra.mxu0 0
        %5617 = vmatprep.subr.bf16.mxu0 0
        %5618 = vmatpush1.bf16.msra.mxu0 0
        %5619 = vmatprep.mubr.bf16.mxu0 0
        %5620 = vmatmul.mubr.bf16.gmra.mrb[0].mxu0 %v5544
        %v5621 = vpop.f32.mrb[0].mxu0
        %v5622 = vadd.f32 0.0, %v5621
        %v5623 = vpop.f32.mrb[0].mxu0
        %v5624 = vadd.f32 0.0, %v5623
        %v5625 = vpop.f32.mrb[0].mxu0
        %v5626 = vpop.f32.mrb[0].mxu0
        %5627 = vdwg.mxu0
        %5628 = vst [vmem:[%s438] sm:$0xff] %v5581
        %5629 = vst [vmem:[%s438 + $0x8] sm:$0xff] %v5583
        %5630 = vst [vmem:[%s438 + $0x10] sm:$0xff] %v5622
        %5631 = vst [vmem:[%s438 + $0x18] sm:$0xff] %v5624
        %s5632 = sand.u32 %s266, 1
        %s5633 = scalar_lea.sflag [#allocation6], %s5632
        %s5634 = sand.u32 %s266, 1
        %s5635 = smul.addr %s5634, 32
        %s5636 = scalar_lea.vmem [#allocation5], %s5635
        // Predicated region
        $region57: #{tpu_custom_call.1} parent=55 // pred_check
          %p5637 = pneg %p276
        $region58: #{tpu_custom_call.1} parent=55 // pred_check_branch
          %5639 = sbr.rel (%p5637) target = $region60
        $region59: #{tpu_custom_call.1} parent=55 // pred_region
          %s5640 = smul.u32 4, %s28
          %s5642 = ssub.s32 512, 512
          %5643 = vsyncadd %s5633, %s5642
          %s5644 = smul.addr %s27, 8
          %s5645 = sadd.s32 %s5640, %s5644
          %s5646 = smul.addr %s5645, 128
          %s5647 = scalar_lea.hbm %s9, %s5646
          %s5649 = sshll.u32 %s5636, 4
          %s5650 = int_to_ptr.vmem [resolvable:$true] %s5649
          %5652 = dma.vmem_to_hbm [thread:$0]  %s5650, 512, %s5647, %s5633
        $region60: #{tpu_custom_call.1} parent=55 // pred_fallthru
          _
      $region56: #{tpu_custom_call.1} parent=5 // pred_fallthru
        _
      %p5653 = scmp.le.s32.totalorder 2, %s18
      // Predicated region
      $region61: #{tpu_custom_call.1} parent=5 // pred_check
        %p5654 = pneg %p5653
      $region62: #{tpu_custom_call.1} parent=5 // pred_check_branch
        %5656 = sbr.rel (%p5654) target = $region64
      $region63: #{tpu_custom_call.1} parent=5 // pred_region
        %s5657 = ssub.s32 %s18, 2
        // Predicated region
        $region65: #{tpu_custom_call.1} parent=63 // pred_check
          %p5658 = pneg %p282
        $region66: #{tpu_custom_call.1} parent=63 // pred_check_branch
          %5660 = sbr.rel (%p5658) target = $region68
        $region67: #{tpu_custom_call.1} parent=63 // pred_region
          %s5661 = sand.u32 %s267, 1
          %s5662 = scalar_lea.sflag [#allocation6], %s5661
          %s5663 = sand.u32 %s267, 1
          %s5664 = smul.addr %s5663, 32
          %s5665 = scalar_lea.vmem [#allocation5], %s5664
          %5666 = dma.done %s5662, 512
        $region68: #{tpu_custom_call.1} parent=63 // pred_fallthru
          _
      $region64: #{tpu_custom_call.1} parent=5 // pred_fallthru
        _
    $region6: #{tpu_custom_call.1} parent=1 // loop_footer
      %s22 = sadd.s32 1, %s18
    $region7: #{tpu_custom_call.1} parent=1 // loop_footer_branch
      %17 = sbr.rel target = $region3
    $region8: #{tpu_custom_call.1} parent=1 // loop_exit
      _
    %5667 = vsyncpa [#allocation6], 1
    %s5668 = scalar_lea.sflag [#allocation6], 1
    %5669 = vsyncpa %s5668, 1

</llo_original>
